<compile_context>
chip_gen: v7x
topology: tpu7x:2x2x1
jax: 0.10.0
libtpu: 0.0.40
codegen_flags: <defaults>
</compile_context>

<pallas_src>
import functools

import jax
import jax.numpy as jnp
from jax.experimental import pallas as pl
from jax.experimental.pallas import tpu as pltpu

EPS = 1e-5
NEG_SLOPE = 0.01                      # F.leaky_relu default
_VMEM_LIMIT = 48 * 1024 * 1024        # explicit scoped-VMEM limit; safe on v5e/v6e/v7x (64 MiB phys)


def _conv_stats_kernel(x_ref, w_ref, y_ref, sum_ref, ssq_ref, *, H, W, KH, KW, Ho, Wo):
    """Pass 1: valid conv for one image + per-image partial BN moments.

    x_ref : (1, H*W, Cin)      image, spatial-flattened NHWC (compute dtype)
    w_ref : (KH, KW, Cin, Cout)
    y_ref : (1, Ho, Wo, Cout)  conv output (f32; conv bias dropped -- cancelled by BN)
    sum_ref, ssq_ref : (1, 1, Cout)  partial sum / sum-of-squares over this image's rows
    """
    Cout = w_ref.shape[-1]
    L = (Ho - 1) * W + Wo                       # shifted-accumulation window length

    x_img = x_ref[0]                            # (H*W, Cin)

    # Valid conv as KH*KW shifted matmuls:
    #   out[ho, wo, :] = sum_{kh,kw} (x_flat @ w[kh,kw])[(ho+kh)*W + (wo+kw), :]
    # so with acc[p] = sum_taps prod_tap[p + kh*W + kw], output row t is acc[t*W : t*W+Wo].
    acc = jnp.zeros((L, Cout), jnp.float32)
    for kh in range(KH):
        for kw in range(KW):
            prod = jnp.dot(x_img, w_ref[kh, kw],
                           preferred_element_type=jnp.float32)   # (H*W, Cout) on the MXU
            off = kh * W + kw
            acc = acc + prod[off:off + L]

    # Emit rows + single-pass moments (sum, sum_sq) over the valid (ho, wo) positions only.
    ssum = jnp.zeros((1, Cout), jnp.float32)
    ssq = jnp.zeros((1, Cout), jnp.float32)
    for t in range(Ho):
        row = acc[t * W:t * W + Wo]             # (Wo, Cout); drops the wo >= Wo garbage tail
        y_ref[0, t] = row
        ssum = ssum + jnp.sum(row, axis=0, keepdims=True)
        ssq = ssq + jnp.sum(row * row, axis=0, keepdims=True)
    sum_ref[0] = ssum
    ssq_ref[0] = ssq


def _scale_shift_relu_kernel(y_ref, scale_ref, shift_ref, out_ref, *, relu):
    """Pass 2: fused folded-BN scale/shift + leaky-relu on a lane-dense (rows, Wo*Cout) view."""
    y = y_ref[...] * scale_ref[...] + shift_ref[...]
    if relu:
        y = jnp.where(y >= 0.0, y, NEG_SLOPE * y)
    out_ref[...] = y


def block_forward(x_nchw, conv_w_oihw, conv_b, bn_gamma, bn_beta, relu=True,
                  compute_dtype=jnp.float32):
    """Forward pass of _Block. x is NCHW (PyTorch convention); output is NCHW.

    conv_b is accepted for API parity but intentionally unused: a per-channel conv bias is
    exactly cancelled by train-mode BatchNorm mean subtraction and does not change the
    variance, so adding it inside the kernel is pure wasted VPU work.
    """
    del conv_b
    N, Cin, H, W = x_nchw.shape
    Cout, Cin_w, KH, KW = conv_w_oihw.shape
    assert Cin == Cin_w
    Ho, Wo = H - KH + 1, W - KW + 1
    M = N * Ho * Wo

    # Free row-major views only (no HBM im2col): NHWC with spatial flattened.
    x2 = jnp.transpose(x_nchw, (0, 2, 3, 1)).reshape(N, H * W, Cin).astype(compute_dtype)
    # OIHW -> (KH, KW, Cin, Cout), cast to the (optionally bf16) MXU operand dtype.
    w = jnp.transpose(conv_w_oihw, (2, 3, 1, 0)).astype(compute_dtype)

    # ---------------- Pass 1: conv + per-image partial moments ----------------
    p1_kernel = functools.partial(_conv_stats_kernel, H=H, W=W, KH=KH, KW=KW, Ho=Ho, Wo=Wo)
    conv_out, psum, psq = pl.pallas_call(
        p1_kernel,
        out_shape=(
            jax.ShapeDtypeStruct((N, Ho, Wo, Cout), jnp.float32),
            jax.ShapeDtypeStruct((N, 1, Cout), jnp.float32),
            jax.ShapeDtypeStruct((N, 1, Cout), jnp.float32),
        ),
        grid=(N,),
        in_specs=[
            pl.BlockSpec((1, H * W, Cin), lambda i: (i, 0, 0)),
            pl.BlockSpec((KH, KW, Cin, Cout), lambda i: (0, 0, 0, 0)),
        ],
        out_specs=(
            pl.BlockSpec((1, Ho, Wo, Cout), lambda i: (i, 0, 0, 0)),
            pl.BlockSpec((1, 1, Cout), lambda i: (i, 0, 0)),
            pl.BlockSpec((1, 1, Cout), lambda i: (i, 0, 0)),
        ),
        compiler_params=pltpu.CompilerParams(
            dimension_semantics=("parallel",),          # images split across TensorCores
            vmem_limit_bytes=_VMEM_LIMIT),
    )(x2, w)

    # ---------------- Tiny stats combine + folded BN affine (plain JAX) ----------------
    mean = jnp.sum(psum, axis=(0, 1)) / M
    var = jnp.sum(psq, axis=(0, 1)) / M - mean * mean   # biased, matches BN training mode
    scale = bn_gamma.astype(jnp.float32) * jax.lax.rsqrt(var + EPS)
    shift = bn_beta.astype(jnp.float32) - mean * scale

    # ---------------- Pass 2: lane-dense scale/shift + leaky-relu ----------------
    R, Lns = N * Ho, Wo * Cout
    y2 = conv_out.reshape(R, Lns)                       # free row-major view (lane-dense)
    scale_row = jnp.tile(scale, Wo).reshape(1, Lns)     # channel pattern repeats every Cout lanes
    shift_row = jnp.tile(shift, Wo).reshape(1, Lns)

    tile_r = R if R <= 512 else 512
    p2_kernel = functools.partial(_scale_shift_relu_kernel, relu=relu)
    out2 = pl.pallas_call(
        p2_kernel,
        out_shape=jax.ShapeDtypeStruct((R, Lns), jnp.float32),
        grid=(pl.cdiv(R, tile_r),),
        in_specs=[
            pl.BlockSpec((tile_r, Lns), lambda i: (i, 0)),
            pl.BlockSpec((1, Lns), lambda i: (0, 0)),
            pl.BlockSpec((1, Lns), lambda i: (0, 0)),
        ],
        out_specs=pl.BlockSpec((tile_r, Lns), lambda i: (i, 0)),
        compiler_params=pltpu.CompilerParams(
            dimension_semantics=("parallel",),
            vmem_limit_bytes=_VMEM_LIMIT),
    )(y2, scale_row, shift_row)

    # Back to PyTorch NCHW.
    return jnp.transpose(out2.reshape(N, Ho, Wo, Cout), (0, 3, 1, 2))


def _reference_forward(x_nchw, conv_w_oihw, conv_b, bn_gamma, bn_beta, relu=True):
    """Pure-JAX reference matching PyTorch semantics (conv -> train-mode BN -> leaky relu)."""
    y = jax.lax.conv_general_dilated(
        x_nchw, conv_w_oihw, window_strides=(1, 1), padding="VALID",
        dimension_numbers=("NCHW", "OIHW", "NCHW"))
    y = y + conv_b[None, :, None, None]
    mean = jnp.mean(y, axis=(0, 2, 3), keepdims=True)
    var = jnp.mean((y - mean) ** 2, axis=(0, 2, 3), keepdims=True)
    y = (y - mean) * jax.lax.rsqrt(var + EPS)
    y = y * bn_gamma[None, :, None, None] + bn_beta[None, :, None, None]
    if relu:
        y = jnp.where(y >= 0.0, y, NEG_SLOPE * y)
    return y


def init_block_params(key, n, in_channels, out_channels, kernel_size):
    """Deterministic init mirroring _Block.__init__ (xavier_normal_ conv weight)."""
    if isinstance(kernel_size, int):
        kernel_size = (kernel_size, kernel_size)
    cin, cout = in_channels * n, out_channels * n
    kh, kw = kernel_size
    k_w, k_b = jax.random.split(key)
    fan_in = cin * kh * kw
    fan_out = cout * kh * kw
    xavier_std = (2.0 / (fan_in + fan_out)) ** 0.5
    conv_w = xavier_std * jax.random.normal(k_w, (cout, cin, kh, kw), jnp.float32)
    bound = 1.0 / (fan_in ** 0.5)  # PyTorch default conv bias init
    conv_b = jax.random.uniform(k_b, (cout,), jnp.float32, -bound, bound)
    bn_gamma = jnp.ones((cout,), jnp.float32)   # BatchNorm2d default affine init
    bn_beta = jnp.zeros((cout,), jnp.float32)
    return conv_w, conv_b, bn_gamma, bn_beta


if __name__ == "__main__":
    # _Block(n=1, in_channels=4, out_channels=8, kernel_size=3, relu=True)
    n, in_channels, out_channels, ksize = 1, 4, 8, 3
    key = jax.random.PRNGKey(0)
    k_param, k_x = jax.random.split(key)

    conv_w, conv_b, bn_gamma, bn_beta = init_block_params(
        k_param, n, in_channels, out_channels, ksize)

    # NCHW input, matching PyTorch conv convention
    x = jax.random.normal(k_x, (2, in_channels * n, 16, 16), jnp.float32)

    ref = _reference_forward(x, conv_w, conv_b, bn_gamma, bn_beta, relu=True)

    fwd = jax.jit(block_forward, static_argnames=("relu", "compute_dtype"))

    # f32 MXU operands: must hold the tight 1e-4 tolerance against the f32 reference.
    out = fwd(x, conv_w, conv_b, bn_gamma, bn_beta, relu=True)
    out = jax.block_until_ready(out)
    assert out.shape == (2, out_channels * n, 14, 14), out.shape
    assert jnp.allclose(out, ref, atol=1e-4, rtol=1e-4), float(jnp.max(jnp.abs(out - ref)))

    # bf16 MXU operands (2-4x MXU throughput, half the x/w HBM+VMEM bytes), f32 accumulation.
    out_bf16 = fwd(x, conv_w, conv_b, bn_gamma, bn_beta, relu=True,
                   compute_dtype=jnp.bfloat16)
    out_bf16 = jax.block_until_ready(out_bf16)
    assert jnp.allclose(out_bf16, ref, atol=5e-2, rtol=5e-2), \
        float(jnp.max(jnp.abs(out_bf16 - ref)))

    print("KERNEL_OK")
</pallas_src>

<mosaic_0001>
module attributes {stable_mosaic.version = 11 : i64} {
  func.func @_conv_stats_kernel(%arg0: i32, %arg1: memref<1x256x4xf32, #tpu.memory_space<vmem>>, %arg2: memref<3x3x4x8xf32, #tpu.memory_space<vmem>>, %arg3: memref<1x14x14x8xf32, #tpu.memory_space<vmem>>, %arg4: memref<1x1x8xf32, #tpu.memory_space<vmem>>, %arg5: memref<1x1x8xf32, #tpu.memory_space<vmem>>) attributes {dimension_semantics = [#tpu.dimension_semantics<parallel>], iteration_bounds = array<i64: 2>, scalar_prefetch = 0 : i64, scratch_operands = 0 : i64, tpu.core_type = #tpu.core_type<tc>, window_params = [{transform_indices = @transform_0, window_bounds = array<i64: 1, 256, 4>}, {pipeline_mode = #tpu.pipeline_mode<synchronous>, transform_indices = @transform_1, window_bounds = array<i64: 3, 3, 4, 8>}, {transform_indices = @transform_2, window_bounds = array<i64: 1, 14, 14, 8>}, {transform_indices = @transform_3, window_bounds = array<i64: 1, 1, 8>}, {transform_indices = @transform_4, window_bounds = array<i64: 1, 1, 8>}]} {
    %c0 = arith.constant 0 : index
    %c0_0 = arith.constant 0 : index
    %c0_1 = arith.constant 0 : index
    %0 = vector.load %arg1[%c0, %c0_0, %c0_1] : memref<1x256x4xf32, #tpu.memory_space<vmem>>, vector<1x256x4xf32>
    %1 = vector.shape_cast %0 : vector<1x256x4xf32> to vector<256x4xf32>
    %cst = arith.constant 0.000000e+00 : f32
    %2 = vector.broadcast %cst : f32 to vector<222x8xf32>
    %c0_2 = arith.constant 0 : index
    %c0_3 = arith.constant 0 : index
    %c0_4 = arith.constant 0 : index
    %c0_5 = arith.constant 0 : index
    %3 = vector.load %arg2[%c0_2, %c0_3, %c0_4, %c0_5] : memref<3x3x4x8xf32, #tpu.memory_space<vmem>>, vector<1x1x4x8xf32>
    %4 = vector.shape_cast %3 : vector<1x1x4x8xf32> to vector<4x8xf32>
    %cst_6 = arith.constant dense<0.000000e+00> : vector<256x8xf32>
    %5 = tpu.matmul %1, %4, %cst_6 {dimension_numbers = #tpu.dot_dimension_numbers<[1], [0], [0], [1], [0, 0, 1, 1], [], []>} : vector<256x4xf32>, vector<4x8xf32>, vector<256x8xf32> -> vector<256x8xf32>
    %6 = vector.extract_strided_slice %5 {offsets = [0, 0], sizes = [222, 8], strides = [1, 1]} : vector<256x8xf32> to vector<222x8xf32>
    %7 = arith.addf %2, %6 : vector<222x8xf32>
    %c0_7 = arith.constant 0 : index
    %c1 = arith.constant 1 : index
    %c0_8 = arith.constant 0 : index
    %c0_9 = arith.constant 0 : index
    %8 = vector.load %arg2[%c0_7, %c1, %c0_8, %c0_9] : memref<3x3x4x8xf32, #tpu.memory_space<vmem>>, vector<1x1x4x8xf32>
    %9 = vector.shape_cast %8 : vector<1x1x4x8xf32> to vector<4x8xf32>
    %cst_10 = arith.constant dense<0.000000e+00> : vector<256x8xf32>
    %10 = tpu.matmul %1, %9, %cst_10 {dimension_numbers = #tpu.dot_dimension_numbers<[1], [0], [0], [1], [0, 0, 1, 1], [], []>} : vector<256x4xf32>, vector<4x8xf32>, vector<256x8xf32> -> vector<256x8xf32>
    %11 = vector.extract_strided_slice %10 {offsets = [1, 0], sizes = [222, 8], strides = [1, 1]} : vector<256x8xf32> to vector<222x8xf32>
    %12 = arith.addf %7, %11 : vector<222x8xf32>
    %c0_11 = arith.constant 0 : index
    %c2 = arith.constant 2 : index
    %c0_12 = arith.constant 0 : index
    %c0_13 = arith.constant 0 : index
    %13 = vector.load %arg2[%c0_11, %c2, %c0_12, %c0_13] : memref<3x3x4x8xf32, #tpu.memory_space<vmem>>, vector<1x1x4x8xf32>
    %14 = vector.shape_cast %13 : vector<1x1x4x8xf32> to vector<4x8xf32>
    %cst_14 = arith.constant dense<0.000000e+00> : vector<256x8xf32>
    %15 = tpu.matmul %1, %14, %cst_14 {dimension_numbers = #tpu.dot_dimension_numbers<[1], [0], [0], [1], [0, 0, 1, 1], [], []>} : vector<256x4xf32>, vector<4x8xf32>, vector<256x8xf32> -> vector<256x8xf32>
    %16 = vector.extract_strided_slice %15 {offsets = [2, 0], sizes = [222, 8], strides = [1, 1]} : vector<256x8xf32> to vector<222x8xf32>
    %17 = arith.addf %12, %16 : vector<222x8xf32>
    %c1_15 = arith.constant 1 : index
    %c0_16 = arith.constant 0 : index
    %c0_17 = arith.constant 0 : index
    %c0_18 = arith.constant 0 : index
    %18 = vector.load %arg2[%c1_15, %c0_16, %c0_17, %c0_18] : memref<3x3x4x8xf32, #tpu.memory_space<vmem>>, vector<1x1x4x8xf32>
    %19 = vector.shape_cast %18 : vector<1x1x4x8xf32> to vector<4x8xf32>
    %cst_19 = arith.constant dense<0.000000e+00> : vector<256x8xf32>
    %20 = tpu.matmul %1, %19, %cst_19 {dimension_numbers = #tpu.dot_dimension_numbers<[1], [0], [0], [1], [0, 0, 1, 1], [], []>} : vector<256x4xf32>, vector<4x8xf32>, vector<256x8xf32> -> vector<256x8xf32>
    %21 = vector.extract_strided_slice %20 {offsets = [16, 0], sizes = [222, 8], strides = [1, 1]} : vector<256x8xf32> to vector<222x8xf32>
    %22 = arith.addf %17, %21 : vector<222x8xf32>
    %c1_20 = arith.constant 1 : index
    %c1_21 = arith.constant 1 : index
    %c0_22 = arith.constant 0 : index
    %c0_23 = arith.constant 0 : index
    %23 = vector.load %arg2[%c1_20, %c1_21, %c0_22, %c0_23] : memref<3x3x4x8xf32, #tpu.memory_space<vmem>>, vector<1x1x4x8xf32>
    %24 = vector.shape_cast %23 : vector<1x1x4x8xf32> to vector<4x8xf32>
    %cst_24 = arith.constant dense<0.000000e+00> : vector<256x8xf32>
    %25 = tpu.matmul %1, %24, %cst_24 {dimension_numbers = #tpu.dot_dimension_numbers<[1], [0], [0], [1], [0, 0, 1, 1], [], []>} : vector<256x4xf32>, vector<4x8xf32>, vector<256x8xf32> -> vector<256x8xf32>
    %26 = vector.extract_strided_slice %25 {offsets = [17, 0], sizes = [222, 8], strides = [1, 1]} : vector<256x8xf32> to vector<222x8xf32>
    %27 = arith.addf %22, %26 : vector<222x8xf32>
    %c1_25 = arith.constant 1 : index
    %c2_26 = arith.constant 2 : index
    %c0_27 = arith.constant 0 : index
    %c0_28 = arith.constant 0 : index
    %28 = vector.load %arg2[%c1_25, %c2_26, %c0_27, %c0_28] : memref<3x3x4x8xf32, #tpu.memory_space<vmem>>, vector<1x1x4x8xf32>
    %29 = vector.shape_cast %28 : vector<1x1x4x8xf32> to vector<4x8xf32>
    %cst_29 = arith.constant dense<0.000000e+00> : vector<256x8xf32>
    %30 = tpu.matmul %1, %29, %cst_29 {dimension_numbers = #tpu.dot_dimension_numbers<[1], [0], [0], [1], [0, 0, 1, 1], [], []>} : vector<256x4xf32>, vector<4x8xf32>, vector<256x8xf32> -> vector<256x8xf32>
    %31 = vector.extract_strided_slice %30 {offsets = [18, 0], sizes = [222, 8], strides = [1, 1]} : vector<256x8xf32> to vector<222x8xf32>
    %32 = arith.addf %27, %31 : vector<222x8xf32>
    %c2_30 = arith.constant 2 : index
    %c0_31 = arith.constant 0 : index
    %c0_32 = arith.constant 0 : index
    %c0_33 = arith.constant 0 : index
    %33 = vector.load %arg2[%c2_30, %c0_31, %c0_32, %c0_33] : memref<3x3x4x8xf32, #tpu.memory_space<vmem>>, vector<1x1x4x8xf32>
    %34 = vector.shape_cast %33 : vector<1x1x4x8xf32> to vector<4x8xf32>
    %cst_34 = arith.constant dense<0.000000e+00> : vector<256x8xf32>
    %35 = tpu.matmul %1, %34, %cst_34 {dimension_numbers = #tpu.dot_dimension_numbers<[1], [0], [0], [1], [0, 0, 1, 1], [], []>} : vector<256x4xf32>, vector<4x8xf32>, vector<256x8xf32> -> vector<256x8xf32>
    %36 = vector.extract_strided_slice %35 {offsets = [32, 0], sizes = [222, 8], strides = [1, 1]} : vector<256x8xf32> to vector<222x8xf32>
    %37 = arith.addf %32, %36 : vector<222x8xf32>
    %c2_35 = arith.constant 2 : index
    %c1_36 = arith.constant 1 : index
    %c0_37 = arith.constant 0 : index
    %c0_38 = arith.constant 0 : index
    %38 = vector.load %arg2[%c2_35, %c1_36, %c0_37, %c0_38] : memref<3x3x4x8xf32, #tpu.memory_space<vmem>>, vector<1x1x4x8xf32>
    %39 = vector.shape_cast %38 : vector<1x1x4x8xf32> to vector<4x8xf32>
    %cst_39 = arith.constant dense<0.000000e+00> : vector<256x8xf32>
    %40 = tpu.matmul %1, %39, %cst_39 {dimension_numbers = #tpu.dot_dimension_numbers<[1], [0], [0], [1], [0, 0, 1, 1], [], []>} : vector<256x4xf32>, vector<4x8xf32>, vector<256x8xf32> -> vector<256x8xf32>
    %41 = vector.extract_strided_slice %40 {offsets = [33, 0], sizes = [222, 8], strides = [1, 1]} : vector<256x8xf32> to vector<222x8xf32>
    %42 = arith.addf %37, %41 : vector<222x8xf32>
    %c2_40 = arith.constant 2 : index
    %c2_41 = arith.constant 2 : index
    %c0_42 = arith.constant 0 : index
    %c0_43 = arith.constant 0 : index
    %43 = vector.load %arg2[%c2_40, %c2_41, %c0_42, %c0_43] : memref<3x3x4x8xf32, #tpu.memory_space<vmem>>, vector<1x1x4x8xf32>
    %44 = vector.shape_cast %43 : vector<1x1x4x8xf32> to vector<4x8xf32>
    %cst_44 = arith.constant dense<0.000000e+00> : vector<256x8xf32>
    %45 = tpu.matmul %1, %44, %cst_44 {dimension_numbers = #tpu.dot_dimension_numbers<[1], [0], [0], [1], [0, 0, 1, 1], [], []>} : vector<256x4xf32>, vector<4x8xf32>, vector<256x8xf32> -> vector<256x8xf32>
    %46 = vector.extract_strided_slice %45 {offsets = [34, 0], sizes = [222, 8], strides = [1, 1]} : vector<256x8xf32> to vector<222x8xf32>
    %47 = arith.addf %42, %46 : vector<222x8xf32>
    %cst_45 = arith.constant 0.000000e+00 : f32
    %48 = vector.broadcast %cst_45 : f32 to vector<1x8xf32>
    %cst_46 = arith.constant 0.000000e+00 : f32
    %49 = vector.broadcast %cst_46 : f32 to vector<1x8xf32>
    %50 = vector.extract_strided_slice %47 {offsets = [0, 0], sizes = [14, 8], strides = [1, 1]} : vector<222x8xf32> to vector<14x8xf32>
    %c0_47 = arith.constant 0 : index
    %c0_48 = arith.constant 0 : index
    %c0_49 = arith.constant 0 : index
    %c0_50 = arith.constant 0 : index
    %51 = vector.load %arg3[%c0_47, %c0_48, %c0_49, %c0_50] : memref<1x14x14x8xf32, #tpu.memory_space<vmem>>, vector<1x1x14x8xf32>
    %52 = vector.shape_cast %51 : vector<1x1x14x8xf32> to vector<14x8xf32>
    %53 = vector.shape_cast %50 : vector<14x8xf32> to vector<1x1x14x8xf32>
    tpu.vector_store %arg3[%c0_47, %c0_48, %c0_49, %c0_50], %53 {strides = array<i32>} : memref<1x14x14x8xf32, #tpu.memory_space<vmem>>, vector<1x1x14x8xf32>,
    %cst_51 = arith.constant dense<0.000000e+00> : vector<8xf32>
    %54 = vector.multi_reduction <add>, %50, %cst_51 [0] : vector<14x8xf32> to vector<8xf32>
    %55 = vector.shape_cast %54 : vector<8xf32> to vector<1x8xf32>
    %56 = arith.addf %48, %55 : vector<1x8xf32>
    %57 = arith.mulf %50, %50 : vector<14x8xf32>
    %cst_52 = arith.constant dense<0.000000e+00> : vector<8xf32>
    %58 = vector.multi_reduction <add>, %57, %cst_52 [0] : vector<14x8xf32> to vector<8xf32>
    %59 = vector.shape_cast %58 : vector<8xf32> to vector<1x8xf32>
    %60 = arith.addf %49, %59 : vector<1x8xf32>
    %61 = vector.extract_strided_slice %47 {offsets = [16, 0], sizes = [14, 8], strides = [1, 1]} : vector<222x8xf32> to vector<14x8xf32>
    %c0_53 = arith.constant 0 : index
    %c1_54 = arith.constant 1 : index
    %c0_55 = arith.constant 0 : index
    %c0_56 = arith.constant 0 : index
    %62 = vector.load %arg3[%c0_53, %c1_54, %c0_55, %c0_56] : memref<1x14x14x8xf32, #tpu.memory_space<vmem>>, vector<1x1x14x8xf32>
    %63 = vector.shape_cast %62 : vector<1x1x14x8xf32> to vector<14x8xf32>
    %64 = vector.shape_cast %61 : vector<14x8xf32> to vector<1x1x14x8xf32>
    tpu.vector_store %arg3[%c0_53, %c1_54, %c0_55, %c0_56], %64 {strides = array<i32>} : memref<1x14x14x8xf32, #tpu.memory_space<vmem>>, vector<1x1x14x8xf32>,
    %cst_57 = arith.constant dense<0.000000e+00> : vector<8xf32>
    %65 = vector.multi_reduction <add>, %61, %cst_57 [0] : vector<14x8xf32> to vector<8xf32>
    %66 = vector.shape_cast %65 : vector<8xf32> to vector<1x8xf32>
    %67 = arith.addf %56, %66 : vector<1x8xf32>
    %68 = arith.mulf %61, %61 : vector<14x8xf32>
    %cst_58 = arith.constant dense<0.000000e+00> : vector<8xf32>
    %69 = vector.multi_reduction <add>, %68, %cst_58 [0] : vector<14x8xf32> to vector<8xf32>
    %70 = vector.shape_cast %69 : vector<8xf32> to vector<1x8xf32>
    %71 = arith.addf %60, %70 : vector<1x8xf32>
    %72 = vector.extract_strided_slice %47 {offsets = [32, 0], sizes = [14, 8], strides = [1, 1]} : vector<222x8xf32> to vector<14x8xf32>
    %c0_59 = arith.constant 0 : index
    %c2_60 = arith.constant 2 : index
    %c0_61 = arith.constant 0 : index
    %c0_62 = arith.constant 0 : index
    %73 = vector.load %arg3[%c0_59, %c2_60, %c0_61, %c0_62] : memref<1x14x14x8xf32, #tpu.memory_space<vmem>>, vector<1x1x14x8xf32>
    %74 = vector.shape_cast %73 : vector<1x1x14x8xf32> to vector<14x8xf32>
    %75 = vector.shape_cast %72 : vector<14x8xf32> to vector<1x1x14x8xf32>
    tpu.vector_store %arg3[%c0_59, %c2_60, %c0_61, %c0_62], %75 {strides = array<i32>} : memref<1x14x14x8xf32, #tpu.memory_space<vmem>>, vector<1x1x14x8xf32>,
    %cst_63 = arith.constant dense<0.000000e+00> : vector<8xf32>
    %76 = vector.multi_reduction <add>, %72, %cst_63 [0] : vector<14x8xf32> to vector<8xf32>
    %77 = vector.shape_cast %76 : vector<8xf32> to vector<1x8xf32>
    %78 = arith.addf %67, %77 : vector<1x8xf32>
    %79 = arith.mulf %72, %72 : vector<14x8xf32>
    %cst_64 = arith.constant dense<0.000000e+00> : vector<8xf32>
    %80 = vector.multi_reduction <add>, %79, %cst_64 [0] : vector<14x8xf32> to vector<8xf32>
    %81 = vector.shape_cast %80 : vector<8xf32> to vector<1x8xf32>
    %82 = arith.addf %71, %81 : vector<1x8xf32>
    %83 = vector.extract_strided_slice %47 {offsets = [48, 0], sizes = [14, 8], strides = [1, 1]} : vector<222x8xf32> to vector<14x8xf32>
    %c0_65 = arith.constant 0 : index
    %c3 = arith.constant 3 : index
    %c0_66 = arith.constant 0 : index
    %c0_67 = arith.constant 0 : index
    %84 = vector.load %arg3[%c0_65, %c3, %c0_66, %c0_67] : memref<1x14x14x8xf32, #tpu.memory_space<vmem>>, vector<1x1x14x8xf32>
    %85 = vector.shape_cast %84 : vector<1x1x14x8xf32> to vector<14x8xf32>
    %86 = vector.shape_cast %83 : vector<14x8xf32> to vector<1x1x14x8xf32>
    tpu.vector_store %arg3[%c0_65, %c3, %c0_66, %c0_67], %86 {strides = array<i32>} : memref<1x14x14x8xf32, #tpu.memory_space<vmem>>, vector<1x1x14x8xf32>,
    %cst_68 = arith.constant dense<0.000000e+00> : vector<8xf32>
    %87 = vector.multi_reduction <add>, %83, %cst_68 [0] : vector<14x8xf32> to vector<8xf32>
    %88 = vector.shape_cast %87 : vector<8xf32> to vector<1x8xf32>
    %89 = arith.addf %78, %88 : vector<1x8xf32>
    %90 = arith.mulf %83, %83 : vector<14x8xf32>
    %cst_69 = arith.constant dense<0.000000e+00> : vector<8xf32>
    %91 = vector.multi_reduction <add>, %90, %cst_69 [0] : vector<14x8xf32> to vector<8xf32>
    %92 = vector.shape_cast %91 : vector<8xf32> to vector<1x8xf32>
    %93 = arith.addf %82, %92 : vector<1x8xf32>
    %94 = vector.extract_strided_slice %47 {offsets = [64, 0], sizes = [14, 8], strides = [1, 1]} : vector<222x8xf32> to vector<14x8xf32>
    %c0_70 = arith.constant 0 : index
    %c4 = arith.constant 4 : index
    %c0_71 = arith.constant 0 : index
    %c0_72 = arith.constant 0 : index
    %95 = vector.load %arg3[%c0_70, %c4, %c0_71, %c0_72] : memref<1x14x14x8xf32, #tpu.memory_space<vmem>>, vector<1x1x14x8xf32>
    %96 = vector.shape_cast %95 : vector<1x1x14x8xf32> to vector<14x8xf32>
    %97 = vector.shape_cast %94 : vector<14x8xf32> to vector<1x1x14x8xf32>
    tpu.vector_store %arg3[%c0_70, %c4, %c0_71, %c0_72], %97 {strides = array<i32>} : memref<1x14x14x8xf32, #tpu.memory_space<vmem>>, vector<1x1x14x8xf32>,
    %cst_73 = arith.constant dense<0.000000e+00> : vector<8xf32>
    %98 = vector.multi_reduction <add>, %94, %cst_73 [0] : vector<14x8xf32> to vector<8xf32>
    %99 = vector.shape_cast %98 : vector<8xf32> to vector<1x8xf32>
    %100 = arith.addf %89, %99 : vector<1x8xf32>
    %101 = arith.mulf %94, %94 : vector<14x8xf32>
    %cst_74 = arith.constant dense<0.000000e+00> : vector<8xf32>
    %102 = vector.multi_reduction <add>, %101, %cst_74 [0] : vector<14x8xf32> to vector<8xf32>
    %103 = vector.shape_cast %102 : vector<8xf32> to vector<1x8xf32>
    %104 = arith.addf %93, %103 : vector<1x8xf32>
    %105 = vector.extract_strided_slice %47 {offsets = [80, 0], sizes = [14, 8], strides = [1, 1]} : vector<222x8xf32> to vector<14x8xf32>
    %c0_75 = arith.constant 0 : index
    %c5 = arith.constant 5 : index
    %c0_76 = arith.constant 0 : index
    %c0_77 = arith.constant 0 : index
    %106 = vector.load %arg3[%c0_75, %c5, %c0_76, %c0_77] : memref<1x14x14x8xf32, #tpu.memory_space<vmem>>, vector<1x1x14x8xf32>
    %107 = vector.shape_cast %106 : vector<1x1x14x8xf32> to vector<14x8xf32>
    %108 = vector.shape_cast %105 : vector<14x8xf32> to vector<1x1x14x8xf32>
    tpu.vector_store %arg3[%c0_75, %c5, %c0_76, %c0_77], %108 {strides = array<i32>} : memref<1x14x14x8xf32, #tpu.memory_space<vmem>>, vector<1x1x14x8xf32>,
    %cst_78 = arith.constant dense<0.000000e+00> : vector<8xf32>
    %109 = vector.multi_reduction <add>, %105, %cst_78 [0] : vector<14x8xf32> to vector<8xf32>
    %110 = vector.shape_cast %109 : vector<8xf32> to vector<1x8xf32>
    %111 = arith.addf %100, %110 : vector<1x8xf32>
    %112 = arith.mulf %105, %105 : vector<14x8xf32>
    %cst_79 = arith.constant dense<0.000000e+00> : vector<8xf32>
    %113 = vector.multi_reduction <add>, %112, %cst_79 [0] : vector<14x8xf32> to vector<8xf32>
    %114 = vector.shape_cast %113 : vector<8xf32> to vector<1x8xf32>
    %115 = arith.addf %104, %114 : vector<1x8xf32>
    %116 = vector.extract_strided_slice %47 {offsets = [96, 0], sizes = [14, 8], strides = [1, 1]} : vector<222x8xf32> to vector<14x8xf32>
    %c0_80 = arith.constant 0 : index
    %c6 = arith.constant 6 : index
    %c0_81 = arith.constant 0 : index
    %c0_82 = arith.constant 0 : index
    %117 = vector.load %arg3[%c0_80, %c6, %c0_81, %c0_82] : memref<1x14x14x8xf32, #tpu.memory_space<vmem>>, vector<1x1x14x8xf32>
    %118 = vector.shape_cast %117 : vector<1x1x14x8xf32> to vector<14x8xf32>
    %119 = vector.shape_cast %116 : vector<14x8xf32> to vector<1x1x14x8xf32>
    tpu.vector_store %arg3[%c0_80, %c6, %c0_81, %c0_82], %119 {strides = array<i32>} : memref<1x14x14x8xf32, #tpu.memory_space<vmem>>, vector<1x1x14x8xf32>,
    %cst_83 = arith.constant dense<0.000000e+00> : vector<8xf32>
    %120 = vector.multi_reduction <add>, %116, %cst_83 [0] : vector<14x8xf32> to vector<8xf32>
    %121 = vector.shape_cast %120 : vector<8xf32> to vector<1x8xf32>
    %122 = arith.addf %111, %121 : vector<1x8xf32>
    %123 = arith.mulf %116, %116 : vector<14x8xf32>
    %cst_84 = arith.constant dense<0.000000e+00> : vector<8xf32>
    %124 = vector.multi_reduction <add>, %123, %cst_84 [0] : vector<14x8xf32> to vector<8xf32>
    %125 = vector.shape_cast %124 : vector<8xf32> to vector<1x8xf32>
    %126 = arith.addf %115, %125 : vector<1x8xf32>
    %127 = vector.extract_strided_slice %47 {offsets = [112, 0], sizes = [14, 8], strides = [1, 1]} : vector<222x8xf32> to vector<14x8xf32>
    %c0_85 = arith.constant 0 : index
    %c7 = arith.constant 7 : index
    %c0_86 = arith.constant 0 : index
    %c0_87 = arith.constant 0 : index
    %128 = vector.load %arg3[%c0_85, %c7, %c0_86, %c0_87] : memref<1x14x14x8xf32, #tpu.memory_space<vmem>>, vector<1x1x14x8xf32>
    %129 = vector.shape_cast %128 : vector<1x1x14x8xf32> to vector<14x8xf32>
    %130 = vector.shape_cast %127 : vector<14x8xf32> to vector<1x1x14x8xf32>
    tpu.vector_store %arg3[%c0_85, %c7, %c0_86, %c0_87], %130 {strides = array<i32>} : memref<1x14x14x8xf32, #tpu.memory_space<vmem>>, vector<1x1x14x8xf32>,
    %cst_88 = arith.constant dense<0.000000e+00> : vector<8xf32>
    %131 = vector.multi_reduction <add>, %127, %cst_88 [0] : vector<14x8xf32> to vector<8xf32>
    %132 = vector.shape_cast %131 : vector<8xf32> to vector<1x8xf32>
    %133 = arith.addf %122, %132 : vector<1x8xf32>
    %134 = arith.mulf %127, %127 : vector<14x8xf32>
    %cst_89 = arith.constant dense<0.000000e+00> : vector<8xf32>
    %135 = vector.multi_reduction <add>, %134, %cst_89 [0] : vector<14x8xf32> to vector<8xf32>
    %136 = vector.shape_cast %135 : vector<8xf32> to vector<1x8xf32>
    %137 = arith.addf %126, %136 : vector<1x8xf32>
    %138 = vector.extract_strided_slice %47 {offsets = [128, 0], sizes = [14, 8], strides = [1, 1]} : vector<222x8xf32> to vector<14x8xf32>
    %c0_90 = arith.constant 0 : index
    %c8 = arith.constant 8 : index
    %c0_91 = arith.constant 0 : index
    %c0_92 = arith.constant 0 : index
    %139 = vector.load %arg3[%c0_90, %c8, %c0_91, %c0_92] : memref<1x14x14x8xf32, #tpu.memory_space<vmem>>, vector<1x1x14x8xf32>
    %140 = vector.shape_cast %139 : vector<1x1x14x8xf32> to vector<14x8xf32>
    %141 = vector.shape_cast %138 : vector<14x8xf32> to vector<1x1x14x8xf32>
    tpu.vector_store %arg3[%c0_90, %c8, %c0_91, %c0_92], %141 {strides = array<i32>} : memref<1x14x14x8xf32, #tpu.memory_space<vmem>>, vector<1x1x14x8xf32>,
    %cst_93 = arith.constant dense<0.000000e+00> : vector<8xf32>
    %142 = vector.multi_reduction <add>, %138, %cst_93 [0] : vector<14x8xf32> to vector<8xf32>
    %143 = vector.shape_cast %142 : vector<8xf32> to vector<1x8xf32>
    %144 = arith.addf %133, %143 : vector<1x8xf32>
    %145 = arith.mulf %138, %138 : vector<14x8xf32>
    %cst_94 = arith.constant dense<0.000000e+00> : vector<8xf32>
    %146 = vector.multi_reduction <add>, %145, %cst_94 [0] : vector<14x8xf32> to vector<8xf32>
    %147 = vector.shape_cast %146 : vector<8xf32> to vector<1x8xf32>
    %148 = arith.addf %137, %147 : vector<1x8xf32>
    %149 = vector.extract_strided_slice %47 {offsets = [144, 0], sizes = [14, 8], strides = [1, 1]} : vector<222x8xf32> to vector<14x8xf32>
    %c0_95 = arith.constant 0 : index
    %c9 = arith.constant 9 : index
    %c0_96 = arith.constant 0 : index
    %c0_97 = arith.constant 0 : index
    %150 = vector.load %arg3[%c0_95, %c9, %c0_96, %c0_97] : memref<1x14x14x8xf32, #tpu.memory_space<vmem>>, vector<1x1x14x8xf32>
    %151 = vector.shape_cast %150 : vector<1x1x14x8xf32> to vector<14x8xf32>
    %152 = vector.shape_cast %149 : vector<14x8xf32> to vector<1x1x14x8xf32>
    tpu.vector_store %arg3[%c0_95, %c9, %c0_96, %c0_97], %152 {strides = array<i32>} : memref<1x14x14x8xf32, #tpu.memory_space<vmem>>, vector<1x1x14x8xf32>,
    %cst_98 = arith.constant dense<0.000000e+00> : vector<8xf32>
    %153 = vector.multi_reduction <add>, %149, %cst_98 [0] : vector<14x8xf32> to vector<8xf32>
    %154 = vector.shape_cast %153 : vector<8xf32> to vector<1x8xf32>
    %155 = arith.addf %144, %154 : vector<1x8xf32>
    %156 = arith.mulf %149, %149 : vector<14x8xf32>
    %cst_99 = arith.constant dense<0.000000e+00> : vector<8xf32>
    %157 = vector.multi_reduction <add>, %156, %cst_99 [0] : vector<14x8xf32> to vector<8xf32>
    %158 = vector.shape_cast %157 : vector<8xf32> to vector<1x8xf32>
    %159 = arith.addf %148, %158 : vector<1x8xf32>
    %160 = vector.extract_strided_slice %47 {offsets = [160, 0], sizes = [14, 8], strides = [1, 1]} : vector<222x8xf32> to vector<14x8xf32>
    %c0_100 = arith.constant 0 : index
    %c10 = arith.constant 10 : index
    %c0_101 = arith.constant 0 : index
    %c0_102 = arith.constant 0 : index
    %161 = vector.load %arg3[%c0_100, %c10, %c0_101, %c0_102] : memref<1x14x14x8xf32, #tpu.memory_space<vmem>>, vector<1x1x14x8xf32>
    %162 = vector.shape_cast %161 : vector<1x1x14x8xf32> to vector<14x8xf32>
    %163 = vector.shape_cast %160 : vector<14x8xf32> to vector<1x1x14x8xf32>
    tpu.vector_store %arg3[%c0_100, %c10, %c0_101, %c0_102], %163 {strides = array<i32>} : memref<1x14x14x8xf32, #tpu.memory_space<vmem>>, vector<1x1x14x8xf32>,
    %cst_103 = arith.constant dense<0.000000e+00> : vector<8xf32>
    %164 = vector.multi_reduction <add>, %160, %cst_103 [0] : vector<14x8xf32> to vector<8xf32>
    %165 = vector.shape_cast %164 : vector<8xf32> to vector<1x8xf32>
    %166 = arith.addf %155, %165 : vector<1x8xf32>
    %167 = arith.mulf %160, %160 : vector<14x8xf32>
    %cst_104 = arith.constant dense<0.000000e+00> : vector<8xf32>
    %168 = vector.multi_reduction <add>, %167, %cst_104 [0] : vector<14x8xf32> to vector<8xf32>
    %169 = vector.shape_cast %168 : vector<8xf32> to vector<1x8xf32>
    %170 = arith.addf %159, %169 : vector<1x8xf32>
    %171 = vector.extract_strided_slice %47 {offsets = [176, 0], sizes = [14, 8], strides = [1, 1]} : vector<222x8xf32> to vector<14x8xf32>
    %c0_105 = arith.constant 0 : index
    %c11 = arith.constant 11 : index
    %c0_106 = arith.constant 0 : index
    %c0_107 = arith.constant 0 : index
    %172 = vector.load %arg3[%c0_105, %c11, %c0_106, %c0_107] : memref<1x14x14x8xf32, #tpu.memory_space<vmem>>, vector<1x1x14x8xf32>
    %173 = vector.shape_cast %172 : vector<1x1x14x8xf32> to vector<14x8xf32>
    %174 = vector.shape_cast %171 : vector<14x8xf32> to vector<1x1x14x8xf32>
    tpu.vector_store %arg3[%c0_105, %c11, %c0_106, %c0_107], %174 {strides = array<i32>} : memref<1x14x14x8xf32, #tpu.memory_space<vmem>>, vector<1x1x14x8xf32>,
    %cst_108 = arith.constant dense<0.000000e+00> : vector<8xf32>
    %175 = vector.multi_reduction <add>, %171, %cst_108 [0] : vector<14x8xf32> to vector<8xf32>
    %176 = vector.shape_cast %175 : vector<8xf32> to vector<1x8xf32>
    %177 = arith.addf %166, %176 : vector<1x8xf32>
    %178 = arith.mulf %171, %171 : vector<14x8xf32>
    %cst_109 = arith.constant dense<0.000000e+00> : vector<8xf32>
    %179 = vector.multi_reduction <add>, %178, %cst_109 [0] : vector<14x8xf32> to vector<8xf32>
    %180 = vector.shape_cast %179 : vector<8xf32> to vector<1x8xf32>
    %181 = arith.addf %170, %180 : vector<1x8xf32>
    %182 = vector.extract_strided_slice %47 {offsets = [192, 0], sizes = [14, 8], strides = [1, 1]} : vector<222x8xf32> to vector<14x8xf32>
    %c0_110 = arith.constant 0 : index
    %c12 = arith.constant 12 : index
    %c0_111 = arith.constant 0 : index
    %c0_112 = arith.constant 0 : index
    %183 = vector.load %arg3[%c0_110, %c12, %c0_111, %c0_112] : memref<1x14x14x8xf32, #tpu.memory_space<vmem>>, vector<1x1x14x8xf32>
    %184 = vector.shape_cast %183 : vector<1x1x14x8xf32> to vector<14x8xf32>
    %185 = vector.shape_cast %182 : vector<14x8xf32> to vector<1x1x14x8xf32>
    tpu.vector_store %arg3[%c0_110, %c12, %c0_111, %c0_112], %185 {strides = array<i32>} : memref<1x14x14x8xf32, #tpu.memory_space<vmem>>, vector<1x1x14x8xf32>,
    %cst_113 = arith.constant dense<0.000000e+00> : vector<8xf32>
    %186 = vector.multi_reduction <add>, %182, %cst_113 [0] : vector<14x8xf32> to vector<8xf32>
    %187 = vector.shape_cast %186 : vector<8xf32> to vector<1x8xf32>
    %188 = arith.addf %177, %187 : vector<1x8xf32>
    %189 = arith.mulf %182, %182 : vector<14x8xf32>
    %cst_114 = arith.constant dense<0.000000e+00> : vector<8xf32>
    %190 = vector.multi_reduction <add>, %189, %cst_114 [0] : vector<14x8xf32> to vector<8xf32>
    %191 = vector.shape_cast %190 : vector<8xf32> to vector<1x8xf32>
    %192 = arith.addf %181, %191 : vector<1x8xf32>
    %193 = vector.extract_strided_slice %47 {offsets = [208, 0], sizes = [14, 8], strides = [1, 1]} : vector<222x8xf32> to vector<14x8xf32>
    %c0_115 = arith.constant 0 : index
    %c13 = arith.constant 13 : index
    %c0_116 = arith.constant 0 : index
    %c0_117 = arith.constant 0 : index
    %194 = vector.load %arg3[%c0_115, %c13, %c0_116, %c0_117] : memref<1x14x14x8xf32, #tpu.memory_space<vmem>>, vector<1x1x14x8xf32>
    %195 = vector.shape_cast %194 : vector<1x1x14x8xf32> to vector<14x8xf32>
    %196 = vector.shape_cast %193 : vector<14x8xf32> to vector<1x1x14x8xf32>
    tpu.vector_store %arg3[%c0_115, %c13, %c0_116, %c0_117], %196 {strides = array<i32>} : memref<1x14x14x8xf32, #tpu.memory_space<vmem>>, vector<1x1x14x8xf32>,
    %cst_118 = arith.constant dense<0.000000e+00> : vector<8xf32>
    %197 = vector.multi_reduction <add>, %193, %cst_118 [0] : vector<14x8xf32> to vector<8xf32>
    %198 = vector.shape_cast %197 : vector<8xf32> to vector<1x8xf32>
    %199 = arith.addf %188, %198 : vector<1x8xf32>
    %200 = arith.mulf %193, %193 : vector<14x8xf32>
    %cst_119 = arith.constant dense<0.000000e+00> : vector<8xf32>
    %201 = vector.multi_reduction <add>, %200, %cst_119 [0] : vector<14x8xf32> to vector<8xf32>
    %202 = vector.shape_cast %201 : vector<8xf32> to vector<1x8xf32>
    %203 = arith.addf %192, %202 : vector<1x8xf32>
    %c0_120 = arith.constant 0 : index
    %c0_121 = arith.constant 0 : index
    %c0_122 = arith.constant 0 : index
    %204 = vector.load %arg4[%c0_120, %c0_121, %c0_122] : memref<1x1x8xf32, #tpu.memory_space<vmem>>, vector<1x1x8xf32>
    %205 = vector.shape_cast %204 : vector<1x1x8xf32> to vector<1x8xf32>
    %206 = vector.shape_cast %199 : vector<1x8xf32> to vector<1x1x8xf32>
    tpu.vector_store %arg4[%c0_120, %c0_121, %c0_122], %206 {strides = array<i32>} : memref<1x1x8xf32, #tpu.memory_space<vmem>>, vector<1x1x8xf32>,
    %c0_123 = arith.constant 0 : index
    %c0_124 = arith.constant 0 : index
    %c0_125 = arith.constant 0 : index
    %207 = vector.load %arg5[%c0_123, %c0_124, %c0_125] : memref<1x1x8xf32, #tpu.memory_space<vmem>>, vector<1x1x8xf32>
    %208 = vector.shape_cast %207 : vector<1x1x8xf32> to vector<1x8xf32>
    %209 = vector.shape_cast %203 : vector<1x8xf32> to vector<1x1x8xf32>
    tpu.vector_store %arg5[%c0_123, %c0_124, %c0_125], %209 {strides = array<i32>} : memref<1x1x8xf32, #tpu.memory_space<vmem>>, vector<1x1x8xf32>,
    return
  }
  func.func @transform_0(%arg0: i32) -> (i32, i32, i32) {
    %c0_i32 = arith.constant 0 : i32
    %c0_i32_0 = arith.constant 0 : i32
    %c0_i32_1 = arith.constant 0 : i32
    return %arg0, %c0_i32, %c0_i32_0 : i32, i32, i32
  }
  func.func @transform_1(%arg0: i32) -> (i32, i32, i32, i32) {
    %c0_i32 = arith.constant 0 : i32
    %c0_i32_0 = arith.constant 0 : i32
    %c0_i32_1 = arith.constant 0 : i32
    %c0_i32_2 = arith.constant 0 : i32
    %c0_i32_3 = arith.constant 0 : i32
    return %c0_i32, %c0_i32_0, %c0_i32_1, %c0_i32_2 : i32, i32, i32, i32
  }
  func.func @transform_2(%arg0: i32) -> (i32, i32, i32, i32) {
    %c0_i32 = arith.constant 0 : i32
    %c0_i32_0 = arith.constant 0 : i32
    %c0_i32_1 = arith.constant 0 : i32
    %c0_i32_2 = arith.constant 0 : i32
    return %arg0, %c0_i32, %c0_i32_0, %c0_i32_1 : i32, i32, i32, i32
  }
  func.func @transform_3(%arg0: i32) -> (i32, i32, i32) {
    %c0_i32 = arith.constant 0 : i32
    %c0_i32_0 = arith.constant 0 : i32
    %c0_i32_1 = arith.constant 0 : i32
    return %arg0, %c0_i32, %c0_i32_0 : i32, i32, i32
  }
  func.func @transform_4(%arg0: i32) -> (i32, i32, i32) {
    %c0_i32 = arith.constant 0 : i32
    %c0_i32_0 = arith.constant 0 : i32
    %c0_i32_1 = arith.constant 0 : i32
    return %arg0, %c0_i32, %c0_i32_0 : i32, i32, i32
  }
}

module attributes {stable_mosaic.version = 11 : i64} {
  func.func @_scale_shift_relu_kernel(%arg0: i32, %arg1: memref<28x112xf32, #tpu.memory_space<vmem>>, %arg2: memref<1x112xf32, #tpu.memory_space<vmem>>, %arg3: memref<1x112xf32, #tpu.memory_space<vmem>>, %arg4: memref<28x112xf32, #tpu.memory_space<vmem>>) attributes {dimension_semantics = [#tpu.dimension_semantics<parallel>], iteration_bounds = array<i64: 1>, scalar_prefetch = 0 : i64, scratch_operands = 0 : i64, tpu.core_type = #tpu.core_type<tc>, window_params = [{transform_indices = @transform_0, window_bounds = array<i64: 28, 112>}, {pipeline_mode = #tpu.pipeline_mode<synchronous>, transform_indices = @transform_1, window_bounds = array<i64: 1, 112>}, {pipeline_mode = #tpu.pipeline_mode<synchronous>, transform_indices = @transform_2, window_bounds = array<i64: 1, 112>}, {transform_indices = @transform_3, window_bounds = array<i64: 28, 112>}]} {
    %c0 = arith.constant 0 : index
    %c0_0 = arith.constant 0 : index
    %0 = vector.load %arg1[%c0, %c0_0] : memref<28x112xf32, #tpu.memory_space<vmem>>, vector<28x112xf32>
    %c0_1 = arith.constant 0 : index
    %c0_2 = arith.constant 0 : index
    %1 = vector.load %arg2[%c0_1, %c0_2] : memref<1x112xf32, #tpu.memory_space<vmem>>, vector<1x112xf32>
    %2 = vector.broadcast %1 : vector<1x112xf32> to vector<28x112xf32>
    %3 = arith.mulf %0, %2 : vector<28x112xf32>
    %c0_3 = arith.constant 0 : index
    %c0_4 = arith.constant 0 : index
    %4 = vector.load %arg3[%c0_3, %c0_4] : memref<1x112xf32, #tpu.memory_space<vmem>>, vector<1x112xf32>
    %5 = vector.broadcast %4 : vector<1x112xf32> to vector<28x112xf32>
    %6 = arith.addf %3, %5 : vector<28x112xf32>
    %cst = arith.constant 0.000000e+00 : f32
    %7 = vector.broadcast %cst : f32 to vector<28x112xf32>
    %8 = arith.cmpf oge, %6, %7 : vector<28x112xf32>
    %cst_5 = arith.constant 0.00999999977 : f32
    %9 = vector.broadcast %cst_5 : f32 to vector<28x112xf32>
    %10 = arith.mulf %9, %6 : vector<28x112xf32>
    %11 = arith.select %8, %6, %10 : vector<28x112xi1>, vector<28x112xf32>
    %c0_6 = arith.constant 0 : index
    %c0_7 = arith.constant 0 : index
    %12 = vector.load %arg4[%c0_6, %c0_7] : memref<28x112xf32, #tpu.memory_space<vmem>>, vector<28x112xf32>
    tpu.vector_store %arg4[%c0_6, %c0_7], %11 {strides = array<i32>} : memref<28x112xf32, #tpu.memory_space<vmem>>, vector<28x112xf32>,
    return
  }
  func.func @transform_0(%arg0: i32) -> (i32, i32) {
    %c0_i32 = arith.constant 0 : i32
    %c0_i32_0 = arith.constant 0 : i32
    return %arg0, %c0_i32 : i32, i32
  }
  func.func @transform_1(%arg0: i32) -> (i32, i32) {
    %c0_i32 = arith.constant 0 : i32
    %c0_i32_0 = arith.constant 0 : i32
    %c0_i32_1 = arith.constant 0 : i32
    return %c0_i32, %c0_i32_0 : i32, i32
  }
  func.func @transform_2(%arg0: i32) -> (i32, i32) {
    %c0_i32 = arith.constant 0 : i32
    %c0_i32_0 = arith.constant 0 : i32
    %c0_i32_1 = arith.constant 0 : i32
    return %c0_i32, %c0_i32_0 : i32, i32
  }
  func.func @transform_3(%arg0: i32) -> (i32, i32) {
    %c0_i32 = arith.constant 0 : i32
    %c0_i32_0 = arith.constant 0 : i32
    return %arg0, %c0_i32 : i32, i32
  }
}

</mosaic_0001>

<llo_original>
// kernel: tile.18
$region0: #{tile.18}
  #allocation0 [shape = 's32[1]{0}', space=sflag, size = 0x4, scoped, tag = 'scoped memory for tile.18']
  %s0 = inlined_call_operand.vmem [shape: f32[8], index: 0, kind: input, shape index: {}]
  %s1 = inlined_call_operand.vmem [shape: f32[14,8], index: 1, kind: output, shape index: {}]
  // Predicated region
  $region2: #{tile.18} parent=0 // pred_check
    _
  $region3: #{tile.18} parent=0 // pred_check_branch
    %3 = sbr.rel (0) target = $region5
  $region4: #{tile.18} parent=0 // pred_region
    _
  $region5: #{tile.18} parent=0 // pred_fallthru
    _
  %v4 = vld [vmem:[%s0] ss:$0 sm:$0xff]
  %5 = vst [vmem:[%s1] sm:$0xff] %v4
  %s6 = scalar_lea.vmem %s1, 8
  %7 = vst [vmem:[%s6] sm:$0xff] %v4

// kernel: tile.19
$region0: #{tile.19}
  %s0 = inlined_call_operand.vmem [shape: f32[14,8], index: 0, kind: input, shape index: {}]
  %s1 = inlined_call_operand.vmem [shape: f32[1,112], index: 1, kind: output, shape index: {}]
  $region1: #{tile.19} parent=0
    #allocation0 [shape = 'u8[4096]{0}', space=vmem, size = 0x1000, scoped, tag = 'scoped mem for output reshape']
    %v2 = vld [vmem:[%s0] sm:$0x1]
    %vm3 = vcmask 64512
    %4 = vst.msk [vmem:[#allocation0] sm:$0x1] %vm3, %v2
    %s5 = scalar_lea.vmem %s0, 13
    %v6 = vld [vmem:[%s5] sm:$0x1]
    %7 = vrot.lane.b32.xlu0 %v6, 104
    %v8 = vpop.permute.xlu0 %7
    %vm9 = vcmask 917312
    %10 = vst.msk [vmem:[#allocation0] sm:$0x1] %vm9, %v8
    %s11 = scalar_lea.vmem %s0, 12
    %v12 = vld [vmem:[%s11] sm:$0x1]
    %13 = vrot.lane.b32.xlu0 %v12, 96
    %v14 = vpop.permute.xlu0 %13
    %vm15 = vcmask 851712
    %16 = vst.msk [vmem:[#allocation0] sm:$0x1] %vm15, %v14
    %s17 = scalar_lea.vmem %s0, 11
    %v18 = vld [vmem:[%s17] sm:$0x1]
    %19 = vrot.lane.b32.xlu0 %v18, 88
    %v20 = vpop.permute.xlu0 %19
    %vm21 = vcmask 786112
    %22 = vst.msk [vmem:[#allocation0] sm:$0x1] %vm21, %v20
    %s23 = scalar_lea.vmem %s0, 10
    %v24 = vld [vmem:[%s23] sm:$0x1]
    %25 = vrot.lane.b32.xlu0 %v24, 80
    %v26 = vpop.permute.xlu0 %25
    %vm27 = vcmask 720512
    %28 = vst.msk [vmem:[#allocation0] sm:$0x1] %vm27, %v26
    %s29 = scalar_lea.vmem %s0, 9
    %v30 = vld [vmem:[%s29] sm:$0x1]
    %31 = vrot.lane.b32.xlu0 %v30, 72
    %v32 = vpop.permute.xlu0 %31
    %vm33 = vcmask 654912
    %34 = vst.msk [vmem:[#allocation0] sm:$0x1] %vm33, %v32
    %s35 = scalar_lea.vmem %s0, 8
    %v36 = vld [vmem:[%s35] sm:$0x1]
    %37 = vrot.lane.b32.xlu0 %v36, 64
    %v38 = vpop.permute.xlu0 %37
    %vm39 = vcmask 589312
    %40 = vst.msk [vmem:[#allocation0] sm:$0x1] %vm39, %v38
    %s41 = scalar_lea.vmem %s0, 7
    %v42 = vld [vmem:[%s41] sm:$0x1]
    %43 = vrot.lane.b32.xlu0 %v42, 56
    %v44 = vpop.permute.xlu0 %43
    %vm45 = vcmask 523712
    %46 = vst.msk [vmem:[#allocation0] sm:$0x1] %vm45, %v44
    %s47 = scalar_lea.vmem %s0, 6
    %v48 = vld [vmem:[%s47] sm:$0x1]
    %49 = vrot.lane.b32.xlu0 %v48, 48
    %v50 = vpop.permute.xlu0 %49
    %vm51 = vcmask 458112
    %52 = vst.msk [vmem:[#allocation0] sm:$0x1] %vm51, %v50
    %s53 = scalar_lea.vmem %s0, 5
    %v54 = vld [vmem:[%s53] sm:$0x1]
    %55 = vrot.lane.b32.xlu0 %v54, 40
    %v56 = vpop.permute.xlu0 %55
    %vm57 = vcmask 392512
    %58 = vst.msk [vmem:[#allocation0] sm:$0x1] %vm57, %v56
    %s59 = scalar_lea.vmem %s0, 4
    %v60 = vld [vmem:[%s59] sm:$0x1]
    %61 = vrot.lane.b32.xlu0 %v60, 32
    %v62 = vpop.permute.xlu0 %61
    %vm63 = vcmask 326912
    %64 = vst.msk [vmem:[#allocation0] sm:$0x1] %vm63, %v62
    %s65 = scalar_lea.vmem %s0, 3
    %v66 = vld [vmem:[%s65] sm:$0x1]
    %67 = vrot.lane.b32.xlu0 %v66, 24
    %v68 = vpop.permute.xlu0 %67
    %vm69 = vcmask 261312
    %70 = vst.msk [vmem:[#allocation0] sm:$0x1] %vm69, %v68
    %s71 = scalar_lea.vmem %s0, 2
    %v72 = vld [vmem:[%s71] sm:$0x1]
    %73 = vrot.lane.b32.xlu0 %v72, 16
    %v74 = vpop.permute.xlu0 %73
    %vm75 = vcmask 195712
    %76 = vst.msk [vmem:[#allocation0] sm:$0x1] %vm75, %v74
    %s77 = scalar_lea.vmem %s0, 1
    %v78 = vld [vmem:[%s77] sm:$0x1]
    %79 = vrot.lane.b32.xlu0 %v78, 8
    %v80 = vpop.permute.xlu0 %79
    %vm81 = vcmask 130112
    %82 = vst.msk [vmem:[#allocation0] sm:$0x1] %vm81, %v80
    %s84 = sshllo.u32 0, 1
    %v86 = vld [vmem:[#allocation0] sm:%s84]
    %s87 = sshllo.u32 0, 1
    %88 = vst [vmem:[%s1] sm:%s87] %v86

// kernel: block_forward.3
$region0: #{block_forward.3}
  #allocation0 [shape = 'u32[]', space=smem, size = 0x4, offset = 0x4, fixed_abs, tag = 'smem constant byte address 0x4 - core index']
  #allocation1 [shape = 'u32[144,128]{1,0:T(1,128)}', space=vmem, size = 0x12000, scoped, tag = 'internal scratch']
  %s0 = inlined_call_operand.vmem [shape: f32[28,112], index: 0, kind: input, shape index: {}]
  %s1 = inlined_call_operand.vmem [shape: f32[1,112], index: 1, kind: input, shape index: {}]
  %s2 = inlined_call_operand.vmem [shape: f32[1,112], index: 2, kind: input, shape index: {}]
  %s3 = inlined_call_operand.vmem [shape: f32[28,112], index: 3, kind: output, shape index: {}]
  %s4 = sld [smem:[#allocation0]]
  $region22: #{block_forward.3} parent=0
    _
  %s6 = ssub.s32 1, %s4
  %s7 = scalar_select 0, %s6, %s4
  // Predicated region
  $region2: #{block_forward.3} parent=0 // pred_check
    _
  $region3: #{block_forward.3} parent=0 // pred_check_branch
    %9 = sbr.rel (0) target = $region5
  $region4: #{block_forward.3} parent=0 // pred_region
    _
  $region5: #{block_forward.3} parent=0 // pred_fallthru
    _
  // Predicated region
  $region6: #{block_forward.3} parent=0 // pred_check
    _
  $region7: #{block_forward.3} parent=0 // pred_check_branch
    %11 = sbr.rel (0) target = $region9
  $region8: #{block_forward.3} parent=0 // pred_region
    _
  $region9: #{block_forward.3} parent=0 // pred_fallthru
    _
  // Predicated region
  $region10: #{block_forward.3} parent=0 // pred_check
    _
  $region11: #{block_forward.3} parent=0 // pred_check_branch
    %13 = sbr.rel (0) target = $region13
  $region12: #{block_forward.3} parent=0 // pred_region
    _
  $region13: #{block_forward.3} parent=0 // pred_fallthru
    _
  %v14 = vld [vmem:[%s0] sm:$0xff]
  %v15 = vld [vmem:[%s0 + $0x8] sm:$0xff]
  %v16 = vld [vmem:[%s0 + $0x10] sm:$0xff]
  %v17 = vld [vmem:[%s0 + $0x18] sm:$0xf]
  %v18 = vld [vmem:[%s1] sm:$0x1]
  %v20 = vlaneseq
  %v21 = vshrl.u32 %v20, 7
  %v22 = vsub.s32 0, %v21
  %v23 = vrot.slane %v18, %v22
  %v25 = vmul.f32 %v14, %v23
  %v26 = vmul.f32 %v15, %v23
  %v27 = vmul.f32 %v16, %v23
  %v28 = vmul.f32 %v17, %v23
  %v29 = vld [vmem:[%s2] sm:$0x1]
  %v31 = vlaneseq
  %v32 = vshrl.u32 %v31, 7
  %v33 = vsub.s32 0, %v32
  %v34 = vrot.slane %v29, %v33
  %v36 = vadd.f32 %v25, %v34
  %v37 = vadd.f32 %v26, %v34
  %v38 = vadd.f32 %v27, %v34
  %v39 = vadd.f32 %v28, %v34
  %vm40 = vcmp.ge.f32.partialorder %v36, 0.0
  %vm41 = vcmp.ge.f32.partialorder %v37, 0.0
  %vm42 = vcmp.ge.f32.partialorder %v38, 0.0
  %vm43 = vcmp.ge.f32.partialorder %v39, 0.0
  %v44 = vmul.f32 %v36, 0.01
  %v45 = vmul.f32 %v37, 0.01
  %v46 = vmul.f32 %v38, 0.01
  %v47 = vmul.f32 %v39, 0.01
  %v48 = vsel %vm40, %v36, %v44
  %v49 = vsel %vm41, %v37, %v45
  %v50 = vsel %vm42, %v38, %v46
  %v51 = vsel %vm43, %v39, %v47
  %vm52 = vcmask 916480
  %53 = vst.msk [vmem:[%s3] sm:$0xff] %vm52, %v48
  %54 = vst.msk [vmem:[%s3 + $0x8] sm:$0xff] %vm52, %v49
  %55 = vst.msk [vmem:[%s3 + $0x10] sm:$0xff] %vm52, %v50
  %vm56 = vcmask 912384
  %57 = vst.msk [vmem:[%s3 + $0x18] sm:$0xf] %vm56, %v51
  // Predicated region
  $region14: #{block_forward.3} parent=0 // pred_check
    _
  $region15: #{block_forward.3} parent=0 // pred_check_branch
    %59 = sbr.rel (0) target = $region17
  $region16: #{block_forward.3} parent=0 // pred_region
    _
  $region17: #{block_forward.3} parent=0 // pred_fallthru
    _
  // Predicated region
  $region18: #{block_forward.3} parent=0 // pred_check
    _
  $region19: #{block_forward.3} parent=0 // pred_check_branch
    %61 = sbr.rel (0) target = $region21
  $region20: #{block_forward.3} parent=0 // pred_region
    _
  $region21: #{block_forward.3} parent=0 // pred_fallthru
    _

// kernel: block_forward.2
$region0: #{block_forward.2}
  #allocation0 [shape = 'u32[]', space=smem, size = 0x4, offset = 0x4, fixed_abs, tag = 'smem constant byte address 0x4 - core index']
  #allocation1 [shape = 'u32[144,128]{1,0:T(1,128)}', space=vmem, size = 0x12000, scoped, tag = 'internal scratch']
  %s0 = inlined_call_operand.vmem [shape: f32[2,256,4], index: 0, kind: input, shape index: {}]
  %s1 = inlined_call_operand.vmem [shape: f32[3,3,4,8], index: 1, kind: input, shape index: {}]
  %s2 = inlined_call_operand.vmem [shape: f32[2,14,14,8], index: 2, kind: output, shape index: {0}]
  %s3 = inlined_call_operand.vmem [shape: f32[2,1,8], index: 3, kind: output, shape index: {1}]
  %s4 = inlined_call_operand.vmem [shape: f32[2,1,8], index: 4, kind: output, shape index: {2}]
  %5 = xla_tuple %s2, %s3, %s4
  %s6 = sld [smem:[#allocation0]]
  $region57: #{block_forward.2} parent=0
    _
  %s8 = ssub.s32 1, %s6
  %s9 = scalar_select 0, %s8, %s6
  loop: start=0, step=1, limit=4
  $region2: #{block_forward.2} parent=0 // loop_pre_header
    _
  $region3: #{block_forward.2} parent=0 // loop_header
    %s11 = sphi 0, %s15
    %p12 = scmp.ge.s32.totalorder %s11, 4
    %s21 = sphi 0, %s23
    %s24 = sphi 0, %s21
    %s25 = sphi 0, %s24
    %s41 = sphi 0, %s25
    %s45 = sphi 0, %s45
    %s47 = sphi 0, %s45
    %s48 = sphi 0, %s47
    %s62 = sphi 0, %s48
    %s68 = sphi 0, %s70
    %s71 = sphi 0, %s68
    %s72 = sphi 0, %s71
    %s88 = sphi 0, %s72
    %s94 = sphi 0, %s96
    %s97 = sphi 0, %s94
    %s98 = sphi 0, %s97
    %s114 = sphi 0, %s98
    %s120 = sphi 0, %s122
    %s123 = sphi 0, %s120
    %s124 = sphi 0, %s123
    %s140 = sphi 0, %s124
  $region4: #{block_forward.2} parent=0 // loop_header_branch
    %14 = sbr.rel (%p12) target = $region8
  $region5: #{block_forward.2} parent=0 // loop_body
    %s16 = ssub.s32 %s11, 1
    %s17 = ssub.s32 %s11, 2
    %s18 = sadd.s32 %s11, 1
    %s19 = ssub.s32 %s11, %s18
    %p20 = scmp.eq.s32.totalorder %s19, 0
    %s22 = sadd.s32 %s21, 1
    %s23 = scalar_select %p20, %s21, %s22
    %p26 = pneg %p20
    %p27 = scmp.eq.s32.totalorder %s11, 1
    %p28 = por %p26, %p27
    %p29 = scmp.ne.s32.totalorder %s21, %s24
    %p30 = scmp.eq.s32.totalorder %s11, 0
    %p31 = por %p29, %p30
    %p32 = scmp.ne.s32.totalorder %s21, %s24
    %p33 = scmp.eq.s32.totalorder %s16, 1
    %p34 = por %p32, %p33
    %p35 = scmp.ne.s32.totalorder %s24, %s25
    %p36 = scmp.eq.s32.totalorder %s16, 0
    %p37 = por %p35, %p36
    %p38 = scmp.ne.s32.totalorder %s24, %s25
    %p39 = scmp.eq.s32.totalorder %s17, 1
    %p40 = por %p38, %p39
    %p42 = scmp.ne.s32.totalorder %s25, %s41
    %p43 = scmp.eq.s32.totalorder %s17, 0
    %p44 = por %p42, %p43
    %s46 = sadd.s32 %s45, 1
    %p49 = scmp.eq.s32.totalorder %s11, 1
    %p50 = scmp.ne.s32.totalorder %s45, %s47
    %p51 = scmp.eq.s32.totalorder %s11, 0
    %p52 = por %p50, %p51
    %p53 = scmp.ne.s32.totalorder %s45, %s47
    %p54 = scmp.eq.s32.totalorder %s16, 1
    %p55 = por %p53, %p54
    %p56 = scmp.ne.s32.totalorder %s47, %s48
    %p57 = scmp.eq.s32.totalorder %s16, 0
    %p58 = por %p56, %p57
    %p59 = scmp.ne.s32.totalorder %s47, %s48
    %p60 = scmp.eq.s32.totalorder %s17, 1
    %p61 = por %p59, %p60
    %p63 = scmp.ne.s32.totalorder %s48, %s62
    %p64 = scmp.eq.s32.totalorder %s17, 0
    %p65 = por %p63, %p64
    %s66 = ssub.s32 %s11, %s18
    %p67 = scmp.eq.s32.totalorder %s66, 0
    %s69 = sadd.s32 %s68, 1
    %s70 = scalar_select %p67, %s68, %s69
    %p73 = pneg %p67
    %p74 = scmp.eq.s32.totalorder %s11, 1
    %p75 = por %p73, %p74
    %p76 = scmp.ne.s32.totalorder %s68, %s71
    %p77 = scmp.eq.s32.totalorder %s11, 0
    %p78 = por %p76, %p77
    %p79 = scmp.ne.s32.totalorder %s68, %s71
    %p80 = scmp.eq.s32.totalorder %s16, 1
    %p81 = por %p79, %p80
    %p82 = scmp.ne.s32.totalorder %s71, %s72
    %p83 = scmp.eq.s32.totalorder %s16, 0
    %p84 = por %p82, %p83
    %p85 = scmp.ne.s32.totalorder %s71, %s72
    %p86 = scmp.eq.s32.totalorder %s17, 1
    %p87 = por %p85, %p86
    %p89 = scmp.ne.s32.totalorder %s72, %s88
    %p90 = scmp.eq.s32.totalorder %s17, 0
    %p91 = por %p89, %p90
    %s92 = ssub.s32 %s11, %s18
    %p93 = scmp.eq.s32.totalorder %s92, 0
    %s95 = sadd.s32 %s94, 1
    %s96 = scalar_select %p93, %s94, %s95
    %p99 = pneg %p93
    %p100 = scmp.eq.s32.totalorder %s11, 1
    %p101 = por %p99, %p100
    %p102 = scmp.ne.s32.totalorder %s94, %s97
    %p103 = scmp.eq.s32.totalorder %s11, 0
    %p104 = por %p102, %p103
    %p105 = scmp.ne.s32.totalorder %s94, %s97
    %p106 = scmp.eq.s32.totalorder %s16, 1
    %p107 = por %p105, %p106
    %p108 = scmp.ne.s32.totalorder %s97, %s98
    %p109 = scmp.eq.s32.totalorder %s16, 0
    %p110 = por %p108, %p109
    %p111 = scmp.ne.s32.totalorder %s97, %s98
    %p112 = scmp.eq.s32.totalorder %s17, 1
    %p113 = por %p111, %p112
    %p115 = scmp.ne.s32.totalorder %s98, %s114
    %p116 = scmp.eq.s32.totalorder %s17, 0
    %p117 = por %p115, %p116
    %s118 = ssub.s32 %s11, %s18
    %p119 = scmp.eq.s32.totalorder %s118, 0
    %s121 = sadd.s32 %s120, 1
    %s122 = scalar_select %p119, %s120, %s121
    %p125 = pneg %p119
    %p126 = scmp.eq.s32.totalorder %s11, 1
    %p127 = por %p125, %p126
    %p128 = scmp.ne.s32.totalorder %s120, %s123
    %p129 = scmp.eq.s32.totalorder %s11, 0
    %p130 = por %p128, %p129
    %p131 = scmp.ne.s32.totalorder %s120, %s123
    %p132 = scmp.eq.s32.totalorder %s16, 1
    %p133 = por %p131, %p132
    %p134 = scmp.ne.s32.totalorder %s123, %s124
    %p135 = scmp.eq.s32.totalorder %s16, 0
    %p136 = por %p134, %p135
    %p137 = scmp.ne.s32.totalorder %s123, %s124
    %p138 = scmp.eq.s32.totalorder %s17, 1
    %p139 = por %p137, %p138
    %p141 = scmp.ne.s32.totalorder %s124, %s140
    %p142 = scmp.eq.s32.totalorder %s17, 0
    %p143 = por %p141, %p142
    %p144 = scmp.le.s32.totalorder 1, %s11
    %p145 = scmp.lt.s32.totalorder %s11, 3
    %p146 = pnand %p144, %p145
    %p147 = pneg %p146
    // Predicated region
    $region9: #{block_forward.2} parent=5 // pred_check
      _
    $region10: #{block_forward.2} parent=5 // pred_check_branch
      %149 = sbr.rel (%p146) target = $region12
    $region11: #{block_forward.2} parent=5 // pred_region
      %s150 = ssub.s32 %s11, 1
      // Predicated region
      $region13: #{block_forward.2} parent=11 // pred_check
        %p151 = pneg %p58
      $region14: #{block_forward.2} parent=11 // pred_check_branch
        %153 = sbr.rel (%p151) target = $region16
      $region15: #{block_forward.2} parent=11 // pred_region
        _
      $region16: #{block_forward.2} parent=11 // pred_fallthru
        _
    $region12: #{block_forward.2} parent=5 // pred_fallthru
      _
    %p154 = scmp.lt.s32.totalorder %s11, 2
    // Predicated region
    $region17: #{block_forward.2} parent=5 // pred_check
      %p155 = pneg %p154
    $region18: #{block_forward.2} parent=5 // pred_check_branch
      %157 = sbr.rel (%p155) target = $region20
    $region19: #{block_forward.2} parent=5 // pred_region
      // Predicated region
      $region21: #{block_forward.2} parent=19 // pred_check
        %p158 = pneg %p31
      $region22: #{block_forward.2} parent=19 // pred_check_branch
        %160 = sbr.rel (%p158) target = $region24
      $region23: #{block_forward.2} parent=19 // pred_region
        %p161 = scmp.lt.s32.totalorder %s11, 1
        %s162 = scalar_select %p161, %s11, 1
        %s163 = smul.addr %s162, 32
        %s164 = smul.addr %s163, 8
        %s165 = scalar_lea.vmem %s0, %s164
      $region24: #{block_forward.2} parent=19 // pred_fallthru
        _
    $region20: #{block_forward.2} parent=5 // pred_fallthru
      _
    %p166 = scmp.le.s32.totalorder 1, %s11
    %p167 = scmp.lt.s32.totalorder %s11, 3
    %p168 = pnand %p166, %p167
    %p169 = pneg %p168
    // Predicated region
    $region25: #{block_forward.2} parent=5 // pred_check
      _
    $region26: #{block_forward.2} parent=5 // pred_check_branch
      %171 = sbr.rel (%p168) target = $region28
    $region27: #{block_forward.2} parent=5 // pred_region
      %s172 = ssub.s32 %s11, 1
      %p173 = scmp.lt.s32.totalorder %s16, 1
      %s174 = scalar_select %p173, %s16, 1
      %s175 = smul.addr %s174, 32
      %s176 = smul.addr %s175, 8
      %s177 = scalar_lea.vmem %s0, %s176
      %p178 = pneg %p37
      %p179 = pneg %p34
      %p180 = pneg %p58
      %p181 = pneg %p55
      %p182 = pneg %p84
      %p183 = pneg %p81
      %p184 = scmp.lt.s32.totalorder %s16, 1
      %s185 = scalar_select %p184, %s16, 1
      %s186 = smul.addr %s185, 28
      %s187 = smul.addr %s186, 8
      %s188 = scalar_lea.vmem %s2, %s187
      %p189 = pneg %p110
      %p190 = pneg %p107
      %p191 = scmp.lt.s32.totalorder %s16, 1
      %s192 = scalar_select %p191, %s16, 1
      %s193 = scalar_lea.vmem %s3, %s192
      %p194 = pneg %p136
      %p195 = pneg %p133
      %p196 = scmp.lt.s32.totalorder %s16, 1
      %s197 = scalar_select %p196, %s16, 1
      %s198 = scalar_lea.vmem %s4, %s197
      %p199 = scmp.lt.s32.totalorder %s16, 1
      %s200 = scalar_select %p199, %s16, 1
      %s201 = smul.addr %s200, 32
      %s202 = smul.addr %s201, 8
      %s203 = scalar_lea.vmem %s0, %s202
      %p204 = scmp.lt.s32.totalorder %s16, 1
      %s205 = scalar_select %p204, %s16, 1
      %s206 = smul.addr %s205, 28
      %s207 = smul.addr %s206, 8
      %s208 = scalar_lea.vmem %s2, %s207
      %p209 = scmp.lt.s32.totalorder %s16, 1
      %s210 = scalar_select %p209, %s16, 1
      %s211 = scalar_lea.vmem %s3, %s210
      %p212 = scmp.lt.s32.totalorder %s16, 1
      %s213 = scalar_select %p212, %s16, 1
      %s214 = scalar_lea.vmem %s4, %s213
      %v215 = vld [vmem:[%s203] sm:$0xff]
      %v216 = vld [vmem:[%s203 + $0x8] sm:$0xff]
      %v217 = vld [vmem:[%s203 + $0x10] sm:$0xff]
      %v218 = vld [vmem:[%s203 + $0x18] sm:$0xff]
      %v219 = vld [vmem:[%s203 + $0x20] sm:$0xff]
      %v220 = vld [vmem:[%s203 + $0x28] sm:$0xff]
      %v221 = vld [vmem:[%s203 + $0x30] sm:$0xff]
      %v222 = vld [vmem:[%s203 + $0x38] sm:$0xff]
      %v223 = vld [vmem:[%s203 + $0x40] sm:$0xff]
      %v224 = vld [vmem:[%s203 + $0x48] sm:$0xff]
      %v225 = vld [vmem:[%s203 + $0x50] sm:$0xff]
      %v226 = vld [vmem:[%s203 + $0x58] sm:$0xff]
      %v227 = vld [vmem:[%s203 + $0x60] sm:$0xff]
      %v228 = vld [vmem:[%s203 + $0x68] sm:$0xff]
      %v229 = vld [vmem:[%s203 + $0x70] sm:$0xff]
      %v230 = vld [vmem:[%s203 + $0x78] sm:$0xff]
      %v231 = vld [vmem:[%s203 + $0x80] sm:$0xff]
      %v232 = vld [vmem:[%s203 + $0x88] sm:$0xff]
      %v233 = vld [vmem:[%s203 + $0x90] sm:$0xff]
      %v234 = vld [vmem:[%s203 + $0x98] sm:$0xff]
      %v235 = vld [vmem:[%s203 + $0xa0] sm:$0xff]
      %v236 = vld [vmem:[%s203 + $0xa8] sm:$0xff]
      %v237 = vld [vmem:[%s203 + $0xb0] sm:$0xff]
      %v238 = vld [vmem:[%s203 + $0xb8] sm:$0xff]
      %v239 = vld [vmem:[%s203 + $0xc0] sm:$0xff]
      %v240 = vld [vmem:[%s203 + $0xc8] sm:$0xff]
      %v241 = vld [vmem:[%s203 + $0xd0] sm:$0xff]
      %v242 = vld [vmem:[%s203 + $0xd8] sm:$0xff]
      %v243 = vld [vmem:[%s203 + $0xe0] sm:$0xff]
      %v244 = vld [vmem:[%s203 + $0xe8] sm:$0xff]
      %v245 = vld [vmem:[%s203 + $0xf0] sm:$0xff]
      %v246 = vld [vmem:[%s203 + $0xf8] sm:$0xff]
      %v247 = vld [vmem:[%s1] sm:$0xf]
      %vm248 = vcmask 31744
      %v250 = vsel %vm248, %v215, 0
      %v253 = vsel %vm248, %v216, 0
      %v256 = vsel %vm248, %v217, 0
      %v259 = vsel %vm248, %v218, 0
      %v262 = vsel %vm248, %v219, 0
      %v265 = vsel %vm248, %v220, 0
      %v268 = vsel %vm248, %v221, 0
      %v271 = vsel %vm248, %v222, 0
      %v274 = vsel %vm248, %v223, 0
      %v277 = vsel %vm248, %v224, 0
      %v280 = vsel %vm248, %v225, 0
      %v283 = vsel %vm248, %v226, 0
      %v286 = vsel %vm248, %v227, 0
      %v289 = vsel %vm248, %v228, 0
      %v292 = vsel %vm248, %v229, 0
      %v295 = vsel %vm248, %v230, 0
      %v298 = vsel %vm248, %v231, 0
      %v301 = vsel %vm248, %v232, 0
      %v304 = vsel %vm248, %v233, 0
      %v307 = vsel %vm248, %v234, 0
      %v310 = vsel %vm248, %v235, 0
      %v313 = vsel %vm248, %v236, 0
      %v316 = vsel %vm248, %v237, 0
      %v319 = vsel %vm248, %v238, 0
      %v322 = vsel %vm248, %v239, 0
      %v325 = vsel %vm248, %v240, 0
      %v328 = vsel %vm248, %v241, 0
      %v331 = vsel %vm248, %v242, 0
      %v334 = vsel %vm248, %v243, 0
      %v337 = vsel %vm248, %v244, 0
      %v340 = vsel %vm248, %v245, 0
      %v343 = vsel %vm248, %v246, 0
      %vm345 = vcmask 1043456
      %v347 = vsel %vm345, %v247, 0
      %349 = vmatprep.subr.mxu0 0.0
      %350 = vmatpush1.msra.mxu0 %v347
      %351 = vmatprep.subr.mxu0 0.0
      %352 = vmatpush1.msra.mxu0 0.0
      %353 = vmatprep.subr.mxu0 0.0
      %354 = vmatpush1.msra.mxu0 0.0
      %355 = vmatprep.subr.mxu0 0.0
      %356 = vmatpush1.msra.mxu0 0.0
      %357 = vmatprep.subr.mxu0 0.0
      %358 = vmatpush1.msra.mxu0 0.0
      %359 = vmatprep.subr.mxu0 0.0
      %360 = vmatpush1.msra.mxu0 0.0
      %361 = vmatprep.subr.mxu0 0.0
      %362 = vmatpush1.msra.mxu0 0.0
      %363 = vmatprep.subr.mxu0 0.0
      %364 = vmatpush1.msra.mxu0 0.0
      %365 = vmatprep.subr.mxu0 0.0
      %366 = vmatpush1.msra.mxu0 0.0
      %367 = vmatprep.subr.mxu0 0.0
      %368 = vmatpush1.msra.mxu0 0.0
      %369 = vmatprep.subr.mxu0 0.0
      %370 = vmatpush1.msra.mxu0 0.0
      %371 = vmatprep.subr.mxu0 0.0
      %372 = vmatpush1.msra.mxu0 0.0
      %373 = vmatprep.subr.mxu0 0.0
      %374 = vmatpush1.msra.mxu0 0.0
      %375 = vmatprep.subr.mxu0 0.0
      %376 = vmatpush1.msra.mxu0 0.0
      %377 = vmatprep.subr.mxu0 0.0
      %378 = vmatpush1.msra.mxu0 0.0
      %379 = vmatprep.subr.mxu0 0.0
      %380 = vmatpush1.msra.mxu0 0.0
      %381 = vmatprep.subr.mxu0 0.0
      %382 = vmatpush1.msra.mxu0 0.0
      %383 = vmatprep.subr.mxu0 0.0
      %384 = vmatpush1.msra.mxu0 0.0
      %385 = vmatprep.subr.mxu0 0.0
      %386 = vmatpush1.msra.mxu0 0.0
      %387 = vmatprep.subr.mxu0 0.0
      %388 = vmatpush1.msra.mxu0 0.0
      %389 = vmatprep.subr.mxu0 0.0
      %390 = vmatpush1.msra.mxu0 0.0
      %391 = vmatprep.subr.mxu0 0.0
      %392 = vmatpush1.msra.mxu0 0.0
      %393 = vmatprep.subr.mxu0 0.0
      %394 = vmatpush1.msra.mxu0 0.0
      %395 = vmatprep.subr.mxu0 0.0
      %396 = vmatpush1.msra.mxu0 0.0
      %397 = vmatprep.subr.mxu0 0.0
      %398 = vmatpush1.msra.mxu0 0.0
      %399 = vmatprep.subr.mxu0 0.0
      %400 = vmatpush1.msra.mxu0 0.0
      %401 = vmatprep.subr.mxu0 0.0
      %402 = vmatpush1.msra.mxu0 0.0
      %403 = vmatprep.subr.mxu0 0.0
      %404 = vmatpush1.msra.mxu0 0.0
      %405 = vmatprep.subr.mxu0 0.0
      %406 = vmatpush1.msra.mxu0 0.0
      %407 = vmatprep.subr.mxu0 0.0
      %408 = vmatpush1.msra.mxu0 0.0
      %409 = vmatprep.subr.mxu0 0.0
      %410 = vmatpush1.msra.mxu0 0.0
      %411 = vmatprep.subr.mxu0 0.0
      %412 = vmatpush1.msra.mxu0 0.0
      %413 = vmatprep.mubr.f32.mxu0 0.0
      %414 = vmatmul.mubr.f32.gmra.mrb[0].mxu0 %v250
      %v415 = vpop.f32.mrb[0].mxu0
      %v416 = vadd.f32 0.0, %v415
      %v417 = vpop.f32.mrb[0].mxu0
      %418 = vmatprep.mubr.f32.mxu0 0.0
      %419 = vmatmul.mubr.f32.gmra.mrb[0].mxu0 %v253
      %v420 = vpop.f32.mrb[0].mxu0
      %v421 = vadd.f32 0.0, %v420
      %v422 = vpop.f32.mrb[0].mxu0
      %423 = vmatprep.mubr.f32.mxu0 0.0
      %424 = vmatmul.mubr.f32.gmra.mrb[0].mxu0 %v256
      %v425 = vpop.f32.mrb[0].mxu0
      %v426 = vadd.f32 0.0, %v425
      %v427 = vpop.f32.mrb[0].mxu0
      %428 = vmatprep.mubr.f32.mxu0 0.0
      %429 = vmatmul.mubr.f32.gmra.mrb[0].mxu0 %v259
      %v430 = vpop.f32.mrb[0].mxu0
      %v431 = vadd.f32 0.0, %v430
      %v432 = vpop.f32.mrb[0].mxu0
      %433 = vmatprep.mubr.f32.mxu0 0.0
      %434 = vmatmul.mubr.f32.gmra.mrb[0].mxu0 %v262
      %v435 = vpop.f32.mrb[0].mxu0
      %v436 = vadd.f32 0.0, %v435
      %v437 = vpop.f32.mrb[0].mxu0
      %438 = vmatprep.mubr.f32.mxu0 0.0
      %439 = vmatmul.mubr.f32.gmra.mrb[0].mxu0 %v265
      %v440 = vpop.f32.mrb[0].mxu0
      %v441 = vadd.f32 0.0, %v440
      %v442 = vpop.f32.mrb[0].mxu0
      %443 = vmatprep.mubr.f32.mxu0 0.0
      %444 = vmatmul.mubr.f32.gmra.mrb[0].mxu0 %v268
      %v445 = vpop.f32.mrb[0].mxu0
      %v446 = vadd.f32 0.0, %v445
      %v447 = vpop.f32.mrb[0].mxu0
      %448 = vmatprep.mubr.f32.mxu0 0.0
      %449 = vmatmul.mubr.f32.gmra.mrb[0].mxu0 %v271
      %v450 = vpop.f32.mrb[0].mxu0
      %v451 = vadd.f32 0.0, %v450
      %v452 = vpop.f32.mrb[0].mxu0
      %453 = vmatprep.mubr.f32.mxu0 0.0
      %454 = vmatmul.mubr.f32.gmra.mrb[0].mxu0 %v274
      %v455 = vpop.f32.mrb[0].mxu0
      %v456 = vadd.f32 0.0, %v455
      %v457 = vpop.f32.mrb[0].mxu0
      %458 = vmatprep.mubr.f32.mxu0 0.0
      %459 = vmatmul.mubr.f32.gmra.mrb[0].mxu0 %v277
      %v460 = vpop.f32.mrb[0].mxu0
      %v461 = vadd.f32 0.0, %v460
      %v462 = vpop.f32.mrb[0].mxu0
      %463 = vmatprep.mubr.f32.mxu0 0.0
      %464 = vmatmul.mubr.f32.gmra.mrb[0].mxu0 %v280
      %v465 = vpop.f32.mrb[0].mxu0
      %v466 = vadd.f32 0.0, %v465
      %v467 = vpop.f32.mrb[0].mxu0
      %468 = vmatprep.mubr.f32.mxu0 0.0
      %469 = vmatmul.mubr.f32.gmra.mrb[0].mxu0 %v283
      %v470 = vpop.f32.mrb[0].mxu0
      %v471 = vadd.f32 0.0, %v470
      %v472 = vpop.f32.mrb[0].mxu0
      %473 = vmatprep.mubr.f32.mxu0 0.0
      %474 = vmatmul.mubr.f32.gmra.mrb[0].mxu0 %v286
      %v475 = vpop.f32.mrb[0].mxu0
      %v476 = vadd.f32 0.0, %v475
      %v477 = vpop.f32.mrb[0].mxu0
      %478 = vmatprep.mubr.f32.mxu0 0.0
      %479 = vmatmul.mubr.f32.gmra.mrb[0].mxu0 %v289
      %v480 = vpop.f32.mrb[0].mxu0
      %v481 = vadd.f32 0.0, %v480
      %v482 = vpop.f32.mrb[0].mxu0
      %483 = vmatprep.mubr.f32.mxu0 0.0
      %484 = vmatmul.mubr.f32.gmra.mrb[0].mxu0 %v292
      %v485 = vpop.f32.mrb[0].mxu0
      %v486 = vadd.f32 0.0, %v485
      %v487 = vpop.f32.mrb[0].mxu0
      %488 = vmatprep.mubr.f32.mxu0 0.0
      %489 = vmatmul.mubr.f32.gmra.mrb[0].mxu0 %v295
      %v490 = vpop.f32.mrb[0].mxu0
      %v491 = vadd.f32 0.0, %v490
      %v492 = vpop.f32.mrb[0].mxu0
      %493 = vmatprep.mubr.f32.mxu0 0.0
      %494 = vmatmul.mubr.f32.gmra.mrb[0].mxu0 %v298
      %v495 = vpop.f32.mrb[0].mxu0
      %v496 = vadd.f32 0.0, %v495
      %v497 = vpop.f32.mrb[0].mxu0
      %498 = vmatprep.mubr.f32.mxu0 0.0
      %499 = vmatmul.mubr.f32.gmra.mrb[0].mxu0 %v301
      %v500 = vpop.f32.mrb[0].mxu0
      %v501 = vadd.f32 0.0, %v500
      %v502 = vpop.f32.mrb[0].mxu0
      %503 = vmatprep.mubr.f32.mxu0 0.0
      %504 = vmatmul.mubr.f32.gmra.mrb[0].mxu0 %v304
      %v505 = vpop.f32.mrb[0].mxu0
      %v506 = vadd.f32 0.0, %v505
      %v507 = vpop.f32.mrb[0].mxu0
      %508 = vmatprep.mubr.f32.mxu0 0.0
      %509 = vmatmul.mubr.f32.gmra.mrb[0].mxu0 %v307
      %v510 = vpop.f32.mrb[0].mxu0
      %v511 = vadd.f32 0.0, %v510
      %v512 = vpop.f32.mrb[0].mxu0
      %513 = vmatprep.mubr.f32.mxu0 0.0
      %514 = vmatmul.mubr.f32.gmra.mrb[0].mxu0 %v310
      %v515 = vpop.f32.mrb[0].mxu0
      %v516 = vadd.f32 0.0, %v515
      %v517 = vpop.f32.mrb[0].mxu0
      %518 = vmatprep.mubr.f32.mxu0 0.0
      %519 = vmatmul.mubr.f32.gmra.mrb[0].mxu0 %v313
      %v520 = vpop.f32.mrb[0].mxu0
      %v521 = vadd.f32 0.0, %v520
      %v522 = vpop.f32.mrb[0].mxu0
      %523 = vmatprep.mubr.f32.mxu0 0.0
      %524 = vmatmul.mubr.f32.gmra.mrb[0].mxu0 %v316
      %v525 = vpop.f32.mrb[0].mxu0
      %v526 = vadd.f32 0.0, %v525
      %v527 = vpop.f32.mrb[0].mxu0
      %528 = vmatprep.mubr.f32.mxu0 0.0
      %529 = vmatmul.mubr.f32.gmra.mrb[0].mxu0 %v319
      %v530 = vpop.f32.mrb[0].mxu0
      %v531 = vadd.f32 0.0, %v530
      %v532 = vpop.f32.mrb[0].mxu0
      %533 = vmatprep.mubr.f32.mxu0 0.0
      %534 = vmatmul.mubr.f32.gmra.mrb[0].mxu0 %v322
      %v535 = vpop.f32.mrb[0].mxu0
      %v536 = vadd.f32 0.0, %v535
      %v537 = vpop.f32.mrb[0].mxu0
      %538 = vmatprep.mubr.f32.mxu0 0.0
      %539 = vmatmul.mubr.f32.gmra.mrb[0].mxu0 %v325
      %v540 = vpop.f32.mrb[0].mxu0
      %v541 = vadd.f32 0.0, %v540
      %v542 = vpop.f32.mrb[0].mxu0
      %543 = vmatprep.mubr.f32.mxu0 0.0
      %544 = vmatmul.mubr.f32.gmra.mrb[0].mxu0 %v328
      %v545 = vpop.f32.mrb[0].mxu0
      %v546 = vadd.f32 0.0, %v545
      %v547 = vpop.f32.mrb[0].mxu0
      %548 = vmatprep.mubr.f32.mxu0 0.0
      %549 = vmatmul.mubr.f32.gmra.mrb[0].mxu0 %v331
      %v550 = vpop.f32.mrb[0].mxu0
      %v551 = vadd.f32 0.0, %v550
      %v552 = vpop.f32.mrb[0].mxu0
      %553 = vmatprep.mubr.f32.mxu0 0.0
      %554 = vmatmul.mubr.f32.gmra.mrb[0].mxu0 %v334
      %v555 = vpop.f32.mrb[0].mxu0
      %v556 = vpop.f32.mrb[0].mxu0
      %557 = vmatprep.mubr.f32.mxu0 0.0
      %558 = vmatmul.mubr.f32.gmra.mrb[0].mxu0 %v337
      %v559 = vpop.f32.mrb[0].mxu0
      %v560 = vpop.f32.mrb[0].mxu0
      %561 = vmatprep.mubr.f32.mxu0 0.0
      %562 = vmatmul.mubr.f32.gmra.mrb[0].mxu0 %v340
      %v563 = vpop.f32.mrb[0].mxu0
      %v564 = vpop.f32.mrb[0].mxu0
      %565 = vmatprep.mubr.f32.mxu0 0.0
      %566 = vmatmul.mubr.f32.gmra.mrb[0].mxu0 %v343
      %v567 = vpop.f32.mrb[0].mxu0
      %v568 = vpop.f32.mrb[0].mxu0
      %569 = vdwg.mxu0
      %v570 = vadd.f32 %v416, 0.0
      %v571 = vadd.f32 %v421, 0.0
      %v572 = vadd.f32 %v426, 0.0
      %v573 = vadd.f32 %v431, 0.0
      %v574 = vadd.f32 %v436, 0.0
      %v575 = vadd.f32 %v441, 0.0
      %v576 = vadd.f32 %v446, 0.0
      %v577 = vadd.f32 %v451, 0.0
      %v578 = vadd.f32 %v456, 0.0
      %v579 = vadd.f32 %v461, 0.0
      %v580 = vadd.f32 %v466, 0.0
      %v581 = vadd.f32 %v471, 0.0
      %v582 = vadd.f32 %v476, 0.0
      %v583 = vadd.f32 %v481, 0.0
      %v584 = vadd.f32 %v486, 0.0
      %v585 = vadd.f32 %v491, 0.0
      %v586 = vadd.f32 %v496, 0.0
      %v587 = vadd.f32 %v501, 0.0
      %v588 = vadd.f32 %v506, 0.0
      %v589 = vadd.f32 %v511, 0.0
      %v590 = vadd.f32 %v516, 0.0
      %v591 = vadd.f32 %v521, 0.0
      %v592 = vadd.f32 %v526, 0.0
      %v593 = vadd.f32 %v531, 0.0
      %v594 = vadd.f32 %v536, 0.0
      %v595 = vadd.f32 %v541, 0.0
      %v596 = vadd.f32 %v546, 0.0
      %v597 = vadd.f32 %v551, 0.0
      %s598 = scalar_lea.vmem %s1, 4
      %v599 = vld [vmem:[%s598] sm:$0xf]
      %v601 = vsel %vm345, %v599, 0
      %603 = vmatprep.subr.mxu0 0.0
      %604 = vmatpush1.msra.mxu0 %v601
      %605 = vmatprep.subr.mxu0 0.0
      %606 = vmatpush1.msra.mxu0 0.0
      %607 = vmatprep.subr.mxu0 0.0
      %608 = vmatpush1.msra.mxu0 0.0
      %609 = vmatprep.subr.mxu0 0.0
      %610 = vmatpush1.msra.mxu0 0.0
      %611 = vmatprep.subr.mxu0 0.0
      %612 = vmatpush1.msra.mxu0 0.0
      %613 = vmatprep.subr.mxu0 0.0
      %614 = vmatpush1.msra.mxu0 0.0
      %615 = vmatprep.subr.mxu0 0.0
      %616 = vmatpush1.msra.mxu0 0.0
      %617 = vmatprep.subr.mxu0 0.0
      %618 = vmatpush1.msra.mxu0 0.0
      %619 = vmatprep.subr.mxu0 0.0
      %620 = vmatpush1.msra.mxu0 0.0
      %621 = vmatprep.subr.mxu0 0.0
      %622 = vmatpush1.msra.mxu0 0.0
      %623 = vmatprep.subr.mxu0 0.0
      %624 = vmatpush1.msra.mxu0 0.0
      %625 = vmatprep.subr.mxu0 0.0
      %626 = vmatpush1.msra.mxu0 0.0
      %627 = vmatprep.subr.mxu0 0.0
      %628 = vmatpush1.msra.mxu0 0.0
      %629 = vmatprep.subr.mxu0 0.0
      %630 = vmatpush1.msra.mxu0 0.0
      %631 = vmatprep.subr.mxu0 0.0
      %632 = vmatpush1.msra.mxu0 0.0
      %633 = vmatprep.subr.mxu0 0.0
      %634 = vmatpush1.msra.mxu0 0.0
      %635 = vmatprep.subr.mxu0 0.0
      %636 = vmatpush1.msra.mxu0 0.0
      %637 = vmatprep.subr.mxu0 0.0
      %638 = vmatpush1.msra.mxu0 0.0
      %639 = vmatprep.subr.mxu0 0.0
      %640 = vmatpush1.msra.mxu0 0.0
      %641 = vmatprep.subr.mxu0 0.0
      %642 = vmatpush1.msra.mxu0 0.0
      %643 = vmatprep.subr.mxu0 0.0
      %644 = vmatpush1.msra.mxu0 0.0
      %645 = vmatprep.subr.mxu0 0.0
      %646 = vmatpush1.msra.mxu0 0.0
      %647 = vmatprep.subr.mxu0 0.0
      %648 = vmatpush1.msra.mxu0 0.0
      %649 = vmatprep.subr.mxu0 0.0
      %650 = vmatpush1.msra.mxu0 0.0
      %651 = vmatprep.subr.mxu0 0.0
      %652 = vmatpush1.msra.mxu0 0.0
      %653 = vmatprep.subr.mxu0 0.0
      %654 = vmatpush1.msra.mxu0 0.0
      %655 = vmatprep.subr.mxu0 0.0
      %656 = vmatpush1.msra.mxu0 0.0
      %657 = vmatprep.subr.mxu0 0.0
      %658 = vmatpush1.msra.mxu0 0.0
      %659 = vmatprep.subr.mxu0 0.0
      %660 = vmatpush1.msra.mxu0 0.0
      %661 = vmatprep.subr.mxu0 0.0
      %662 = vmatpush1.msra.mxu0 0.0
      %663 = vmatprep.subr.mxu0 0.0
      %664 = vmatpush1.msra.mxu0 0.0
      %665 = vmatprep.subr.mxu0 0.0
      %666 = vmatpush1.msra.mxu0 0.0
      %667 = vmatprep.mubr.f32.mxu0 0.0
      %668 = vmatmul.mubr.f32.gmra.mrb[0].mxu0 %v250
      %v669 = vpop.f32.mrb[0].mxu0
      %v670 = vadd.f32 0.0, %v669
      %v671 = vpop.f32.mrb[0].mxu0
      %672 = vmatprep.mubr.f32.mxu0 0.0
      %673 = vmatmul.mubr.f32.gmra.mrb[0].mxu0 %v253
      %v674 = vpop.f32.mrb[0].mxu0
      %v675 = vadd.f32 0.0, %v674
      %v676 = vpop.f32.mrb[0].mxu0
      %677 = vmatprep.mubr.f32.mxu0 0.0
      %678 = vmatmul.mubr.f32.gmra.mrb[0].mxu0 %v256
      %v679 = vpop.f32.mrb[0].mxu0
      %v680 = vadd.f32 0.0, %v679
      %v681 = vpop.f32.mrb[0].mxu0
      %682 = vmatprep.mubr.f32.mxu0 0.0
      %683 = vmatmul.mubr.f32.gmra.mrb[0].mxu0 %v259
      %v684 = vpop.f32.mrb[0].mxu0
      %v685 = vadd.f32 0.0, %v684
      %v686 = vpop.f32.mrb[0].mxu0
      %687 = vmatprep.mubr.f32.mxu0 0.0
      %688 = vmatmul.mubr.f32.gmra.mrb[0].mxu0 %v262
      %v689 = vpop.f32.mrb[0].mxu0
      %v690 = vadd.f32 0.0, %v689
      %v691 = vpop.f32.mrb[0].mxu0
      %692 = vmatprep.mubr.f32.mxu0 0.0
      %693 = vmatmul.mubr.f32.gmra.mrb[0].mxu0 %v265
      %v694 = vpop.f32.mrb[0].mxu0
      %v695 = vadd.f32 0.0, %v694
      %v696 = vpop.f32.mrb[0].mxu0
      %697 = vmatprep.mubr.f32.mxu0 0.0
      %698 = vmatmul.mubr.f32.gmra.mrb[0].mxu0 %v268
      %v699 = vpop.f32.mrb[0].mxu0
      %v700 = vadd.f32 0.0, %v699
      %v701 = vpop.f32.mrb[0].mxu0
      %702 = vmatprep.mubr.f32.mxu0 0.0
      %703 = vmatmul.mubr.f32.gmra.mrb[0].mxu0 %v271
      %v704 = vpop.f32.mrb[0].mxu0
      %v705 = vadd.f32 0.0, %v704
      %v706 = vpop.f32.mrb[0].mxu0
      %707 = vmatprep.mubr.f32.mxu0 0.0
      %708 = vmatmul.mubr.f32.gmra.mrb[0].mxu0 %v274
      %v709 = vpop.f32.mrb[0].mxu0
      %v710 = vadd.f32 0.0, %v709
      %v711 = vpop.f32.mrb[0].mxu0
      %712 = vmatprep.mubr.f32.mxu0 0.0
      %713 = vmatmul.mubr.f32.gmra.mrb[0].mxu0 %v277
      %v714 = vpop.f32.mrb[0].mxu0
      %v715 = vadd.f32 0.0, %v714
      %v716 = vpop.f32.mrb[0].mxu0
      %717 = vmatprep.mubr.f32.mxu0 0.0
      %718 = vmatmul.mubr.f32.gmra.mrb[0].mxu0 %v280
      %v719 = vpop.f32.mrb[0].mxu0
      %v720 = vadd.f32 0.0, %v719
      %v721 = vpop.f32.mrb[0].mxu0
      %722 = vmatprep.mubr.f32.mxu0 0.0
      %723 = vmatmul.mubr.f32.gmra.mrb[0].mxu0 %v283
      %v724 = vpop.f32.mrb[0].mxu0
      %v725 = vadd.f32 0.0, %v724
      %v726 = vpop.f32.mrb[0].mxu0
      %727 = vmatprep.mubr.f32.mxu0 0.0
      %728 = vmatmul.mubr.f32.gmra.mrb[0].mxu0 %v286
      %v729 = vpop.f32.mrb[0].mxu0
      %v730 = vadd.f32 0.0, %v729
      %v731 = vpop.f32.mrb[0].mxu0
      %732 = vmatprep.mubr.f32.mxu0 0.0
      %733 = vmatmul.mubr.f32.gmra.mrb[0].mxu0 %v289
      %v734 = vpop.f32.mrb[0].mxu0
      %v735 = vadd.f32 0.0, %v734
      %v736 = vpop.f32.mrb[0].mxu0
      %737 = vmatprep.mubr.f32.mxu0 0.0
      %738 = vmatmul.mubr.f32.gmra.mrb[0].mxu0 %v292
      %v739 = vpop.f32.mrb[0].mxu0
      %v740 = vadd.f32 0.0, %v739
      %v741 = vpop.f32.mrb[0].mxu0
      %742 = vmatprep.mubr.f32.mxu0 0.0
      %743 = vmatmul.mubr.f32.gmra.mrb[0].mxu0 %v295
      %v744 = vpop.f32.mrb[0].mxu0
      %v745 = vadd.f32 0.0, %v744
      %v746 = vpop.f32.mrb[0].mxu0
      %747 = vmatprep.mubr.f32.mxu0 0.0
      %748 = vmatmul.mubr.f32.gmra.mrb[0].mxu0 %v298
      %v749 = vpop.f32.mrb[0].mxu0
      %v750 = vadd.f32 0.0, %v749
      %v751 = vpop.f32.mrb[0].mxu0
      %752 = vmatprep.mubr.f32.mxu0 0.0
      %753 = vmatmul.mubr.f32.gmra.mrb[0].mxu0 %v301
      %v754 = vpop.f32.mrb[0].mxu0
      %v755 = vadd.f32 0.0, %v754
      %v756 = vpop.f32.mrb[0].mxu0
      %757 = vmatprep.mubr.f32.mxu0 0.0
      %758 = vmatmul.mubr.f32.gmra.mrb[0].mxu0 %v304
      %v759 = vpop.f32.mrb[0].mxu0
      %v760 = vadd.f32 0.0, %v759
      %v761 = vpop.f32.mrb[0].mxu0
      %762 = vmatprep.mubr.f32.mxu0 0.0
      %763 = vmatmul.mubr.f32.gmra.mrb[0].mxu0 %v307
      %v764 = vpop.f32.mrb[0].mxu0
      %v765 = vadd.f32 0.0, %v764
      %v766 = vpop.f32.mrb[0].mxu0
      %767 = vmatprep.mubr.f32.mxu0 0.0
      %768 = vmatmul.mubr.f32.gmra.mrb[0].mxu0 %v310
      %v769 = vpop.f32.mrb[0].mxu0
      %v770 = vadd.f32 0.0, %v769
      %v771 = vpop.f32.mrb[0].mxu0
      %772 = vmatprep.mubr.f32.mxu0 0.0
      %773 = vmatmul.mubr.f32.gmra.mrb[0].mxu0 %v313
      %v774 = vpop.f32.mrb[0].mxu0
      %v775 = vadd.f32 0.0, %v774
      %v776 = vpop.f32.mrb[0].mxu0
      %777 = vmatprep.mubr.f32.mxu0 0.0
      %778 = vmatmul.mubr.f32.gmra.mrb[0].mxu0 %v316
      %v779 = vpop.f32.mrb[0].mxu0
      %v780 = vadd.f32 0.0, %v779
      %v781 = vpop.f32.mrb[0].mxu0
      %782 = vmatprep.mubr.f32.mxu0 0.0
      %783 = vmatmul.mubr.f32.gmra.mrb[0].mxu0 %v319
      %v784 = vpop.f32.mrb[0].mxu0
      %v785 = vadd.f32 0.0, %v784
      %v786 = vpop.f32.mrb[0].mxu0
      %787 = vmatprep.mubr.f32.mxu0 0.0
      %788 = vmatmul.mubr.f32.gmra.mrb[0].mxu0 %v322
      %v789 = vpop.f32.mrb[0].mxu0
      %v790 = vadd.f32 0.0, %v789
      %v791 = vpop.f32.mrb[0].mxu0
      %792 = vmatprep.mubr.f32.mxu0 0.0
      %793 = vmatmul.mubr.f32.gmra.mrb[0].mxu0 %v325
      %v794 = vpop.f32.mrb[0].mxu0
      %v795 = vadd.f32 0.0, %v794
      %v796 = vpop.f32.mrb[0].mxu0
      %797 = vmatprep.mubr.f32.mxu0 0.0
      %798 = vmatmul.mubr.f32.gmra.mrb[0].mxu0 %v328
      %v799 = vpop.f32.mrb[0].mxu0
      %v800 = vadd.f32 0.0, %v799
      %v801 = vpop.f32.mrb[0].mxu0
      %802 = vmatprep.mubr.f32.mxu0 0.0
      %803 = vmatmul.mubr.f32.gmra.mrb[0].mxu0 %v331
      %v804 = vpop.f32.mrb[0].mxu0
      %v805 = vadd.f32 0.0, %v804
      %v806 = vpop.f32.mrb[0].mxu0
      %807 = vmatprep.mubr.f32.mxu0 0.0
      %808 = vmatmul.mubr.f32.gmra.mrb[0].mxu0 %v334
      %v809 = vpop.f32.mrb[0].mxu0
      %v810 = vpop.f32.mrb[0].mxu0
      %811 = vmatprep.mubr.f32.mxu0 0.0
      %812 = vmatmul.mubr.f32.gmra.mrb[0].mxu0 %v337
      %v813 = vpop.f32.mrb[0].mxu0
      %v814 = vpop.f32.mrb[0].mxu0
      %815 = vmatprep.mubr.f32.mxu0 0.0
      %816 = vmatmul.mubr.f32.gmra.mrb[0].mxu0 %v340
      %v817 = vpop.f32.mrb[0].mxu0
      %v818 = vpop.f32.mrb[0].mxu0
      %819 = vmatprep.mubr.f32.mxu0 0.0
      %820 = vmatmul.mubr.f32.gmra.mrb[0].mxu0 %v343
      %v821 = vpop.f32.mrb[0].mxu0
      %v822 = vpop.f32.mrb[0].mxu0
      %823 = vdwg.mxu0
      %vm852 = vcmask 1046528
      %v853 = vrot.slane %v670, 1
      %v854 = vrot.slane %v675, 1
      %v855 = vsel %vm852, %v853, %v854
      %v856 = vrot.slane %v680, 1
      %v857 = vsel %vm852, %v854, %v856
      %v858 = vrot.slane %v685, 1
      %v859 = vsel %vm852, %v856, %v858
      %v860 = vrot.slane %v690, 1
      %v861 = vsel %vm852, %v858, %v860
      %v862 = vrot.slane %v695, 1
      %v863 = vsel %vm852, %v860, %v862
      %v864 = vrot.slane %v700, 1
      %v865 = vsel %vm852, %v862, %v864
      %v866 = vrot.slane %v705, 1
      %v867 = vsel %vm852, %v864, %v866
      %v868 = vrot.slane %v710, 1
      %v869 = vsel %vm852, %v866, %v868
      %v870 = vrot.slane %v715, 1
      %v871 = vsel %vm852, %v868, %v870
      %v872 = vrot.slane %v720, 1
      %v873 = vsel %vm852, %v870, %v872
      %v874 = vrot.slane %v725, 1
      %v875 = vsel %vm852, %v872, %v874
      %v876 = vrot.slane %v730, 1
      %v877 = vsel %vm852, %v874, %v876
      %v878 = vrot.slane %v735, 1
      %v879 = vsel %vm852, %v876, %v878
      %v880 = vrot.slane %v740, 1
      %v881 = vsel %vm852, %v878, %v880
      %v882 = vrot.slane %v745, 1
      %v883 = vsel %vm852, %v880, %v882
      %v884 = vrot.slane %v750, 1
      %v885 = vsel %vm852, %v882, %v884
      %v886 = vrot.slane %v755, 1
      %v887 = vsel %vm852, %v884, %v886
      %v888 = vrot.slane %v760, 1
      %v889 = vsel %vm852, %v886, %v888
      %v890 = vrot.slane %v765, 1
      %v891 = vsel %vm852, %v888, %v890
      %v892 = vrot.slane %v770, 1
      %v893 = vsel %vm852, %v890, %v892
      %v894 = vrot.slane %v775, 1
      %v895 = vsel %vm852, %v892, %v894
      %v896 = vrot.slane %v780, 1
      %v897 = vsel %vm852, %v894, %v896
      %v898 = vrot.slane %v785, 1
      %v899 = vsel %vm852, %v896, %v898
      %v900 = vrot.slane %v790, 1
      %v901 = vsel %vm852, %v898, %v900
      %v902 = vrot.slane %v795, 1
      %v903 = vsel %vm852, %v900, %v902
      %v904 = vrot.slane %v800, 1
      %v905 = vsel %vm852, %v902, %v904
      %v906 = vrot.slane %v805, 1
      %v907 = vsel %vm852, %v904, %v906
      %v936 = vadd.f32 %v570, %v855
      %v937 = vadd.f32 %v571, %v857
      %v938 = vadd.f32 %v572, %v859
      %v939 = vadd.f32 %v573, %v861
      %v940 = vadd.f32 %v574, %v863
      %v941 = vadd.f32 %v575, %v865
      %v942 = vadd.f32 %v576, %v867
      %v943 = vadd.f32 %v577, %v869
      %v944 = vadd.f32 %v578, %v871
      %v945 = vadd.f32 %v579, %v873
      %v946 = vadd.f32 %v580, %v875
      %v947 = vadd.f32 %v581, %v877
      %v948 = vadd.f32 %v582, %v879
      %v949 = vadd.f32 %v583, %v881
      %v950 = vadd.f32 %v584, %v883
      %v951 = vadd.f32 %v585, %v885
      %v952 = vadd.f32 %v586, %v887
      %v953 = vadd.f32 %v587, %v889
      %v954 = vadd.f32 %v588, %v891
      %v955 = vadd.f32 %v589, %v893
      %v956 = vadd.f32 %v590, %v895
      %v957 = vadd.f32 %v591, %v897
      %v958 = vadd.f32 %v592, %v899
      %v959 = vadd.f32 %v593, %v901
      %v960 = vadd.f32 %v594, %v903
      %v961 = vadd.f32 %v595, %v905
      %v962 = vadd.f32 %v596, %v907
      %v963 = vadd.f32 %v597, %v906
      %s964 = scalar_lea.vmem %s1, 8
      %v965 = vld [vmem:[%s964] sm:$0xf]
      %v967 = vsel %vm345, %v965, 0
      %969 = vmatprep.subr.mxu0 0.0
      %970 = vmatpush1.msra.mxu0 %v967
      %971 = vmatprep.subr.mxu0 0.0
      %972 = vmatpush1.msra.mxu0 0.0
      %973 = vmatprep.subr.mxu0 0.0
      %974 = vmatpush1.msra.mxu0 0.0
      %975 = vmatprep.subr.mxu0 0.0
      %976 = vmatpush1.msra.mxu0 0.0
      %977 = vmatprep.subr.mxu0 0.0
      %978 = vmatpush1.msra.mxu0 0.0
      %979 = vmatprep.subr.mxu0 0.0
      %980 = vmatpush1.msra.mxu0 0.0
      %981 = vmatprep.subr.mxu0 0.0
      %982 = vmatpush1.msra.mxu0 0.0
      %983 = vmatprep.subr.mxu0 0.0
      %984 = vmatpush1.msra.mxu0 0.0
      %985 = vmatprep.subr.mxu0 0.0
      %986 = vmatpush1.msra.mxu0 0.0
      %987 = vmatprep.subr.mxu0 0.0
      %988 = vmatpush1.msra.mxu0 0.0
      %989 = vmatprep.subr.mxu0 0.0
      %990 = vmatpush1.msra.mxu0 0.0
      %991 = vmatprep.subr.mxu0 0.0
      %992 = vmatpush1.msra.mxu0 0.0
      %993 = vmatprep.subr.mxu0 0.0
      %994 = vmatpush1.msra.mxu0 0.0
      %995 = vmatprep.subr.mxu0 0.0
      %996 = vmatpush1.msra.mxu0 0.0
      %997 = vmatprep.subr.mxu0 0.0
      %998 = vmatpush1.msra.mxu0 0.0
      %999 = vmatprep.subr.mxu0 0.0
      %1000 = vmatpush1.msra.mxu0 0.0
      %1001 = vmatprep.subr.mxu0 0.0
      %1002 = vmatpush1.msra.mxu0 0.0
      %1003 = vmatprep.subr.mxu0 0.0
      %1004 = vmatpush1.msra.mxu0 0.0
      %1005 = vmatprep.subr.mxu0 0.0
      %1006 = vmatpush1.msra.mxu0 0.0
      %1007 = vmatprep.subr.mxu0 0.0
      %1008 = vmatpush1.msra.mxu0 0.0
      %1009 = vmatprep.subr.mxu0 0.0
      %1010 = vmatpush1.msra.mxu0 0.0
      %1011 = vmatprep.subr.mxu0 0.0
      %1012 = vmatpush1.msra.mxu0 0.0
      %1013 = vmatprep.subr.mxu0 0.0
      %1014 = vmatpush1.msra.mxu0 0.0
      %1015 = vmatprep.subr.mxu0 0.0
      %1016 = vmatpush1.msra.mxu0 0.0
      %1017 = vmatprep.subr.mxu0 0.0
      %1018 = vmatpush1.msra.mxu0 0.0
      %1019 = vmatprep.subr.mxu0 0.0
      %1020 = vmatpush1.msra.mxu0 0.0
      %1021 = vmatprep.subr.mxu0 0.0
      %1022 = vmatpush1.msra.mxu0 0.0
      %1023 = vmatprep.subr.mxu0 0.0
      %1024 = vmatpush1.msra.mxu0 0.0
      %1025 = vmatprep.subr.mxu0 0.0
      %1026 = vmatpush1.msra.mxu0 0.0
      %1027 = vmatprep.subr.mxu0 0.0
      %1028 = vmatpush1.msra.mxu0 0.0
      %1029 = vmatprep.subr.mxu0 0.0
      %1030 = vmatpush1.msra.mxu0 0.0
      %1031 = vmatprep.subr.mxu0 0.0
      %1032 = vmatpush1.msra.mxu0 0.0
      %1033 = vmatprep.mubr.f32.mxu0 0.0
      %1034 = vmatmul.mubr.f32.gmra.mrb[0].mxu0 %v250
      %v1035 = vpop.f32.mrb[0].mxu0
      %v1036 = vadd.f32 0.0, %v1035
      %v1037 = vpop.f32.mrb[0].mxu0
      %1038 = vmatprep.mubr.f32.mxu0 0.0
      %1039 = vmatmul.mubr.f32.gmra.mrb[0].mxu0 %v253
      %v1040 = vpop.f32.mrb[0].mxu0
      %v1041 = vadd.f32 0.0, %v1040
      %v1042 = vpop.f32.mrb[0].mxu0
      %1043 = vmatprep.mubr.f32.mxu0 0.0
      %1044 = vmatmul.mubr.f32.gmra.mrb[0].mxu0 %v256
      %v1045 = vpop.f32.mrb[0].mxu0
      %v1046 = vadd.f32 0.0, %v1045
      %v1047 = vpop.f32.mrb[0].mxu0
      %1048 = vmatprep.mubr.f32.mxu0 0.0
      %1049 = vmatmul.mubr.f32.gmra.mrb[0].mxu0 %v259
      %v1050 = vpop.f32.mrb[0].mxu0
      %v1051 = vadd.f32 0.0, %v1050
      %v1052 = vpop.f32.mrb[0].mxu0
      %1053 = vmatprep.mubr.f32.mxu0 0.0
      %1054 = vmatmul.mubr.f32.gmra.mrb[0].mxu0 %v262
      %v1055 = vpop.f32.mrb[0].mxu0
      %v1056 = vadd.f32 0.0, %v1055
      %v1057 = vpop.f32.mrb[0].mxu0
      %1058 = vmatprep.mubr.f32.mxu0 0.0
      %1059 = vmatmul.mubr.f32.gmra.mrb[0].mxu0 %v265
      %v1060 = vpop.f32.mrb[0].mxu0
      %v1061 = vadd.f32 0.0, %v1060
      %v1062 = vpop.f32.mrb[0].mxu0
      %1063 = vmatprep.mubr.f32.mxu0 0.0
      %1064 = vmatmul.mubr.f32.gmra.mrb[0].mxu0 %v268
      %v1065 = vpop.f32.mrb[0].mxu0
      %v1066 = vadd.f32 0.0, %v1065
      %v1067 = vpop.f32.mrb[0].mxu0
      %1068 = vmatprep.mubr.f32.mxu0 0.0
      %1069 = vmatmul.mubr.f32.gmra.mrb[0].mxu0 %v271
      %v1070 = vpop.f32.mrb[0].mxu0
      %v1071 = vadd.f32 0.0, %v1070
      %v1072 = vpop.f32.mrb[0].mxu0
      %1073 = vmatprep.mubr.f32.mxu0 0.0
      %1074 = vmatmul.mubr.f32.gmra.mrb[0].mxu0 %v274
      %v1075 = vpop.f32.mrb[0].mxu0
      %v1076 = vadd.f32 0.0, %v1075
      %v1077 = vpop.f32.mrb[0].mxu0
      %1078 = vmatprep.mubr.f32.mxu0 0.0
      %1079 = vmatmul.mubr.f32.gmra.mrb[0].mxu0 %v277
      %v1080 = vpop.f32.mrb[0].mxu0
      %v1081 = vadd.f32 0.0, %v1080
      %v1082 = vpop.f32.mrb[0].mxu0
      %1083 = vmatprep.mubr.f32.mxu0 0.0
      %1084 = vmatmul.mubr.f32.gmra.mrb[0].mxu0 %v280
      %v1085 = vpop.f32.mrb[0].mxu0
      %v1086 = vadd.f32 0.0, %v1085
      %v1087 = vpop.f32.mrb[0].mxu0
      %1088 = vmatprep.mubr.f32.mxu0 0.0
      %1089 = vmatmul.mubr.f32.gmra.mrb[0].mxu0 %v283
      %v1090 = vpop.f32.mrb[0].mxu0
      %v1091 = vadd.f32 0.0, %v1090
      %v1092 = vpop.f32.mrb[0].mxu0
      %1093 = vmatprep.mubr.f32.mxu0 0.0
      %1094 = vmatmul.mubr.f32.gmra.mrb[0].mxu0 %v286
      %v1095 = vpop.f32.mrb[0].mxu0
      %v1096 = vadd.f32 0.0, %v1095
      %v1097 = vpop.f32.mrb[0].mxu0
      %1098 = vmatprep.mubr.f32.mxu0 0.0
      %1099 = vmatmul.mubr.f32.gmra.mrb[0].mxu0 %v289
      %v1100 = vpop.f32.mrb[0].mxu0
      %v1101 = vadd.f32 0.0, %v1100
      %v1102 = vpop.f32.mrb[0].mxu0
      %1103 = vmatprep.mubr.f32.mxu0 0.0
      %1104 = vmatmul.mubr.f32.gmra.mrb[0].mxu0 %v292
      %v1105 = vpop.f32.mrb[0].mxu0
      %v1106 = vadd.f32 0.0, %v1105
      %v1107 = vpop.f32.mrb[0].mxu0
      %1108 = vmatprep.mubr.f32.mxu0 0.0
      %1109 = vmatmul.mubr.f32.gmra.mrb[0].mxu0 %v295
      %v1110 = vpop.f32.mrb[0].mxu0
      %v1111 = vadd.f32 0.0, %v1110
      %v1112 = vpop.f32.mrb[0].mxu0
      %1113 = vmatprep.mubr.f32.mxu0 0.0
      %1114 = vmatmul.mubr.f32.gmra.mrb[0].mxu0 %v298
      %v1115 = vpop.f32.mrb[0].mxu0
      %v1116 = vadd.f32 0.0, %v1115
      %v1117 = vpop.f32.mrb[0].mxu0
      %1118 = vmatprep.mubr.f32.mxu0 0.0
      %1119 = vmatmul.mubr.f32.gmra.mrb[0].mxu0 %v301
      %v1120 = vpop.f32.mrb[0].mxu0
      %v1121 = vadd.f32 0.0, %v1120
      %v1122 = vpop.f32.mrb[0].mxu0
      %1123 = vmatprep.mubr.f32.mxu0 0.0
      %1124 = vmatmul.mubr.f32.gmra.mrb[0].mxu0 %v304
      %v1125 = vpop.f32.mrb[0].mxu0
      %v1126 = vadd.f32 0.0, %v1125
      %v1127 = vpop.f32.mrb[0].mxu0
      %1128 = vmatprep.mubr.f32.mxu0 0.0
      %1129 = vmatmul.mubr.f32.gmra.mrb[0].mxu0 %v307
      %v1130 = vpop.f32.mrb[0].mxu0
      %v1131 = vadd.f32 0.0, %v1130
      %v1132 = vpop.f32.mrb[0].mxu0
      %1133 = vmatprep.mubr.f32.mxu0 0.0
      %1134 = vmatmul.mubr.f32.gmra.mrb[0].mxu0 %v310
      %v1135 = vpop.f32.mrb[0].mxu0
      %v1136 = vadd.f32 0.0, %v1135
      %v1137 = vpop.f32.mrb[0].mxu0
      %1138 = vmatprep.mubr.f32.mxu0 0.0
      %1139 = vmatmul.mubr.f32.gmra.mrb[0].mxu0 %v313
      %v1140 = vpop.f32.mrb[0].mxu0
      %v1141 = vadd.f32 0.0, %v1140
      %v1142 = vpop.f32.mrb[0].mxu0
      %1143 = vmatprep.mubr.f32.mxu0 0.0
      %1144 = vmatmul.mubr.f32.gmra.mrb[0].mxu0 %v316
      %v1145 = vpop.f32.mrb[0].mxu0
      %v1146 = vadd.f32 0.0, %v1145
      %v1147 = vpop.f32.mrb[0].mxu0
      %1148 = vmatprep.mubr.f32.mxu0 0.0
      %1149 = vmatmul.mubr.f32.gmra.mrb[0].mxu0 %v319
      %v1150 = vpop.f32.mrb[0].mxu0
      %v1151 = vadd.f32 0.0, %v1150
      %v1152 = vpop.f32.mrb[0].mxu0
      %1153 = vmatprep.mubr.f32.mxu0 0.0
      %1154 = vmatmul.mubr.f32.gmra.mrb[0].mxu0 %v322
      %v1155 = vpop.f32.mrb[0].mxu0
      %v1156 = vadd.f32 0.0, %v1155
      %v1157 = vpop.f32.mrb[0].mxu0
      %1158 = vmatprep.mubr.f32.mxu0 0.0
      %1159 = vmatmul.mubr.f32.gmra.mrb[0].mxu0 %v325
      %v1160 = vpop.f32.mrb[0].mxu0
      %v1161 = vadd.f32 0.0, %v1160
      %v1162 = vpop.f32.mrb[0].mxu0
      %1163 = vmatprep.mubr.f32.mxu0 0.0
      %1164 = vmatmul.mubr.f32.gmra.mrb[0].mxu0 %v328
      %v1165 = vpop.f32.mrb[0].mxu0
      %v1166 = vadd.f32 0.0, %v1165
      %v1167 = vpop.f32.mrb[0].mxu0
      %1168 = vmatprep.mubr.f32.mxu0 0.0
      %1169 = vmatmul.mubr.f32.gmra.mrb[0].mxu0 %v331
      %v1170 = vpop.f32.mrb[0].mxu0
      %v1171 = vadd.f32 0.0, %v1170
      %v1172 = vpop.f32.mrb[0].mxu0
      %1173 = vmatprep.mubr.f32.mxu0 0.0
      %1174 = vmatmul.mubr.f32.gmra.mrb[0].mxu0 %v334
      %v1175 = vpop.f32.mrb[0].mxu0
      %v1176 = vpop.f32.mrb[0].mxu0
      %1177 = vmatprep.mubr.f32.mxu0 0.0
      %1178 = vmatmul.mubr.f32.gmra.mrb[0].mxu0 %v337
      %v1179 = vpop.f32.mrb[0].mxu0
      %v1180 = vpop.f32.mrb[0].mxu0
      %1181 = vmatprep.mubr.f32.mxu0 0.0
      %1182 = vmatmul.mubr.f32.gmra.mrb[0].mxu0 %v340
      %v1183 = vpop.f32.mrb[0].mxu0
      %v1184 = vpop.f32.mrb[0].mxu0
      %1185 = vmatprep.mubr.f32.mxu0 0.0
      %1186 = vmatmul.mubr.f32.gmra.mrb[0].mxu0 %v343
      %v1187 = vpop.f32.mrb[0].mxu0
      %v1188 = vpop.f32.mrb[0].mxu0
      %1189 = vdwg.mxu0
      %vm1218 = vcmask 1045504
      %v1219 = vrot.slane %v1036, 2
      %v1220 = vrot.slane %v1041, 2
      %v1221 = vsel %vm1218, %v1219, %v1220
      %v1222 = vrot.slane %v1046, 2
      %v1223 = vsel %vm1218, %v1220, %v1222
      %v1224 = vrot.slane %v1051, 2
      %v1225 = vsel %vm1218, %v1222, %v1224
      %v1226 = vrot.slane %v1056, 2
      %v1227 = vsel %vm1218, %v1224, %v1226
      %v1228 = vrot.slane %v1061, 2
      %v1229 = vsel %vm1218, %v1226, %v1228
      %v1230 = vrot.slane %v1066, 2
      %v1231 = vsel %vm1218, %v1228, %v1230
      %v1232 = vrot.slane %v1071, 2
      %v1233 = vsel %vm1218, %v1230, %v1232
      %v1234 = vrot.slane %v1076, 2
      %v1235 = vsel %vm1218, %v1232, %v1234
      %v1236 = vrot.slane %v1081, 2
      %v1237 = vsel %vm1218, %v1234, %v1236
      %v1238 = vrot.slane %v1086, 2
      %v1239 = vsel %vm1218, %v1236, %v1238
      %v1240 = vrot.slane %v1091, 2
      %v1241 = vsel %vm1218, %v1238, %v1240
      %v1242 = vrot.slane %v1096, 2
      %v1243 = vsel %vm1218, %v1240, %v1242
      %v1244 = vrot.slane %v1101, 2
      %v1245 = vsel %vm1218, %v1242, %v1244
      %v1246 = vrot.slane %v1106, 2
      %v1247 = vsel %vm1218, %v1244, %v1246
      %v1248 = vrot.slane %v1111, 2
      %v1249 = vsel %vm1218, %v1246, %v1248
      %v1250 = vrot.slane %v1116, 2
      %v1251 = vsel %vm1218, %v1248, %v1250
      %v1252 = vrot.slane %v1121, 2
      %v1253 = vsel %vm1218, %v1250, %v1252
      %v1254 = vrot.slane %v1126, 2
      %v1255 = vsel %vm1218, %v1252, %v1254
      %v1256 = vrot.slane %v1131, 2
      %v1257 = vsel %vm1218, %v1254, %v1256
      %v1258 = vrot.slane %v1136, 2
      %v1259 = vsel %vm1218, %v1256, %v1258
      %v1260 = vrot.slane %v1141, 2
      %v1261 = vsel %vm1218, %v1258, %v1260
      %v1262 = vrot.slane %v1146, 2
      %v1263 = vsel %vm1218, %v1260, %v1262
      %v1264 = vrot.slane %v1151, 2
      %v1265 = vsel %vm1218, %v1262, %v1264
      %v1266 = vrot.slane %v1156, 2
      %v1267 = vsel %vm1218, %v1264, %v1266
      %v1268 = vrot.slane %v1161, 2
      %v1269 = vsel %vm1218, %v1266, %v1268
      %v1270 = vrot.slane %v1166, 2
      %v1271 = vsel %vm1218, %v1268, %v1270
      %v1272 = vrot.slane %v1171, 2
      %v1273 = vsel %vm1218, %v1270, %v1272
      %v1302 = vadd.f32 %v936, %v1221
      %v1303 = vadd.f32 %v937, %v1223
      %v1304 = vadd.f32 %v938, %v1225
      %v1305 = vadd.f32 %v939, %v1227
      %v1306 = vadd.f32 %v940, %v1229
      %v1307 = vadd.f32 %v941, %v1231
      %v1308 = vadd.f32 %v942, %v1233
      %v1309 = vadd.f32 %v943, %v1235
      %v1310 = vadd.f32 %v944, %v1237
      %v1311 = vadd.f32 %v945, %v1239
      %v1312 = vadd.f32 %v946, %v1241
      %v1313 = vadd.f32 %v947, %v1243
      %v1314 = vadd.f32 %v948, %v1245
      %v1315 = vadd.f32 %v949, %v1247
      %v1316 = vadd.f32 %v950, %v1249
      %v1317 = vadd.f32 %v951, %v1251
      %v1318 = vadd.f32 %v952, %v1253
      %v1319 = vadd.f32 %v953, %v1255
      %v1320 = vadd.f32 %v954, %v1257
      %v1321 = vadd.f32 %v955, %v1259
      %v1322 = vadd.f32 %v956, %v1261
      %v1323 = vadd.f32 %v957, %v1263
      %v1324 = vadd.f32 %v958, %v1265
      %v1325 = vadd.f32 %v959, %v1267
      %v1326 = vadd.f32 %v960, %v1269
      %v1327 = vadd.f32 %v961, %v1271
      %v1328 = vadd.f32 %v962, %v1273
      %v1329 = vadd.f32 %v963, %v1272
      %s1330 = scalar_lea.vmem %s1, 12
      %v1331 = vld [vmem:[%s1330] sm:$0xf]
      %v1333 = vsel %vm345, %v1331, 0
      %1335 = vmatprep.subr.mxu0 0.0
      %1336 = vmatpush1.msra.mxu0 %v1333
      %1337 = vmatprep.subr.mxu0 0.0
      %1338 = vmatpush1.msra.mxu0 0.0
      %1339 = vmatprep.subr.mxu0 0.0
      %1340 = vmatpush1.msra.mxu0 0.0
      %1341 = vmatprep.subr.mxu0 0.0
      %1342 = vmatpush1.msra.mxu0 0.0
      %1343 = vmatprep.subr.mxu0 0.0
      %1344 = vmatpush1.msra.mxu0 0.0
      %1345 = vmatprep.subr.mxu0 0.0
      %1346 = vmatpush1.msra.mxu0 0.0
      %1347 = vmatprep.subr.mxu0 0.0
      %1348 = vmatpush1.msra.mxu0 0.0
      %1349 = vmatprep.subr.mxu0 0.0
      %1350 = vmatpush1.msra.mxu0 0.0
      %1351 = vmatprep.subr.mxu0 0.0
      %1352 = vmatpush1.msra.mxu0 0.0
      %1353 = vmatprep.subr.mxu0 0.0
      %1354 = vmatpush1.msra.mxu0 0.0
      %1355 = vmatprep.subr.mxu0 0.0
      %1356 = vmatpush1.msra.mxu0 0.0
      %1357 = vmatprep.subr.mxu0 0.0
      %1358 = vmatpush1.msra.mxu0 0.0
      %1359 = vmatprep.subr.mxu0 0.0
      %1360 = vmatpush1.msra.mxu0 0.0
      %1361 = vmatprep.subr.mxu0 0.0
      %1362 = vmatpush1.msra.mxu0 0.0
      %1363 = vmatprep.subr.mxu0 0.0
      %1364 = vmatpush1.msra.mxu0 0.0
      %1365 = vmatprep.subr.mxu0 0.0
      %1366 = vmatpush1.msra.mxu0 0.0
      %1367 = vmatprep.subr.mxu0 0.0
      %1368 = vmatpush1.msra.mxu0 0.0
      %1369 = vmatprep.subr.mxu0 0.0
      %1370 = vmatpush1.msra.mxu0 0.0
      %1371 = vmatprep.subr.mxu0 0.0
      %1372 = vmatpush1.msra.mxu0 0.0
      %1373 = vmatprep.subr.mxu0 0.0
      %1374 = vmatpush1.msra.mxu0 0.0
      %1375 = vmatprep.subr.mxu0 0.0
      %1376 = vmatpush1.msra.mxu0 0.0
      %1377 = vmatprep.subr.mxu0 0.0
      %1378 = vmatpush1.msra.mxu0 0.0
      %1379 = vmatprep.subr.mxu0 0.0
      %1380 = vmatpush1.msra.mxu0 0.0
      %1381 = vmatprep.subr.mxu0 0.0
      %1382 = vmatpush1.msra.mxu0 0.0
      %1383 = vmatprep.subr.mxu0 0.0
      %1384 = vmatpush1.msra.mxu0 0.0
      %1385 = vmatprep.subr.mxu0 0.0
      %1386 = vmatpush1.msra.mxu0 0.0
      %1387 = vmatprep.subr.mxu0 0.0
      %1388 = vmatpush1.msra.mxu0 0.0
      %1389 = vmatprep.subr.mxu0 0.0
      %1390 = vmatpush1.msra.mxu0 0.0
      %1391 = vmatprep.subr.mxu0 0.0
      %1392 = vmatpush1.msra.mxu0 0.0
      %1393 = vmatprep.subr.mxu0 0.0
      %1394 = vmatpush1.msra.mxu0 0.0
      %1395 = vmatprep.subr.mxu0 0.0
      %1396 = vmatpush1.msra.mxu0 0.0
      %1397 = vmatprep.subr.mxu0 0.0
      %1398 = vmatpush1.msra.mxu0 0.0
      %1399 = vmatprep.mubr.f32.mxu0 0.0
      %1400 = vmatmul.mubr.f32.gmra.mrb[0].mxu0 %v250
      %v1401 = vpop.f32.mrb[0].mxu0
      %v1402 = vpop.f32.mrb[0].mxu0
      %1403 = vmatprep.mubr.f32.mxu0 0.0
      %1404 = vmatmul.mubr.f32.gmra.mrb[0].mxu0 %v253
      %v1405 = vpop.f32.mrb[0].mxu0
      %v1406 = vpop.f32.mrb[0].mxu0
      %1407 = vmatprep.mubr.f32.mxu0 0.0
      %1408 = vmatmul.mubr.f32.gmra.mrb[0].mxu0 %v256
      %v1409 = vpop.f32.mrb[0].mxu0
      %v1410 = vadd.f32 0.0, %v1409
      %v1411 = vpop.f32.mrb[0].mxu0
      %1412 = vmatprep.mubr.f32.mxu0 0.0
      %1413 = vmatmul.mubr.f32.gmra.mrb[0].mxu0 %v259
      %v1414 = vpop.f32.mrb[0].mxu0
      %v1415 = vadd.f32 0.0, %v1414
      %v1416 = vpop.f32.mrb[0].mxu0
      %1417 = vmatprep.mubr.f32.mxu0 0.0
      %1418 = vmatmul.mubr.f32.gmra.mrb[0].mxu0 %v262
      %v1419 = vpop.f32.mrb[0].mxu0
      %v1420 = vadd.f32 0.0, %v1419
      %v1421 = vpop.f32.mrb[0].mxu0
      %1422 = vmatprep.mubr.f32.mxu0 0.0
      %1423 = vmatmul.mubr.f32.gmra.mrb[0].mxu0 %v265
      %v1424 = vpop.f32.mrb[0].mxu0
      %v1425 = vadd.f32 0.0, %v1424
      %v1426 = vpop.f32.mrb[0].mxu0
      %1427 = vmatprep.mubr.f32.mxu0 0.0
      %1428 = vmatmul.mubr.f32.gmra.mrb[0].mxu0 %v268
      %v1429 = vpop.f32.mrb[0].mxu0
      %v1430 = vadd.f32 0.0, %v1429
      %v1431 = vpop.f32.mrb[0].mxu0
      %1432 = vmatprep.mubr.f32.mxu0 0.0
      %1433 = vmatmul.mubr.f32.gmra.mrb[0].mxu0 %v271
      %v1434 = vpop.f32.mrb[0].mxu0
      %v1435 = vadd.f32 0.0, %v1434
      %v1436 = vpop.f32.mrb[0].mxu0
      %1437 = vmatprep.mubr.f32.mxu0 0.0
      %1438 = vmatmul.mubr.f32.gmra.mrb[0].mxu0 %v274
      %v1439 = vpop.f32.mrb[0].mxu0
      %v1440 = vadd.f32 0.0, %v1439
      %v1441 = vpop.f32.mrb[0].mxu0
      %1442 = vmatprep.mubr.f32.mxu0 0.0
      %1443 = vmatmul.mubr.f32.gmra.mrb[0].mxu0 %v277
      %v1444 = vpop.f32.mrb[0].mxu0
      %v1445 = vadd.f32 0.0, %v1444
      %v1446 = vpop.f32.mrb[0].mxu0
      %1447 = vmatprep.mubr.f32.mxu0 0.0
      %1448 = vmatmul.mubr.f32.gmra.mrb[0].mxu0 %v280
      %v1449 = vpop.f32.mrb[0].mxu0
      %v1450 = vadd.f32 0.0, %v1449
      %v1451 = vpop.f32.mrb[0].mxu0
      %1452 = vmatprep.mubr.f32.mxu0 0.0
      %1453 = vmatmul.mubr.f32.gmra.mrb[0].mxu0 %v283
      %v1454 = vpop.f32.mrb[0].mxu0
      %v1455 = vadd.f32 0.0, %v1454
      %v1456 = vpop.f32.mrb[0].mxu0
      %1457 = vmatprep.mubr.f32.mxu0 0.0
      %1458 = vmatmul.mubr.f32.gmra.mrb[0].mxu0 %v286
      %v1459 = vpop.f32.mrb[0].mxu0
      %v1460 = vadd.f32 0.0, %v1459
      %v1461 = vpop.f32.mrb[0].mxu0
      %1462 = vmatprep.mubr.f32.mxu0 0.0
      %1463 = vmatmul.mubr.f32.gmra.mrb[0].mxu0 %v289
      %v1464 = vpop.f32.mrb[0].mxu0
      %v1465 = vadd.f32 0.0, %v1464
      %v1466 = vpop.f32.mrb[0].mxu0
      %1467 = vmatprep.mubr.f32.mxu0 0.0
      %1468 = vmatmul.mubr.f32.gmra.mrb[0].mxu0 %v292
      %v1469 = vpop.f32.mrb[0].mxu0
      %v1470 = vadd.f32 0.0, %v1469
      %v1471 = vpop.f32.mrb[0].mxu0
      %1472 = vmatprep.mubr.f32.mxu0 0.0
      %1473 = vmatmul.mubr.f32.gmra.mrb[0].mxu0 %v295
      %v1474 = vpop.f32.mrb[0].mxu0
      %v1475 = vadd.f32 0.0, %v1474
      %v1476 = vpop.f32.mrb[0].mxu0
      %1477 = vmatprep.mubr.f32.mxu0 0.0
      %1478 = vmatmul.mubr.f32.gmra.mrb[0].mxu0 %v298
      %v1479 = vpop.f32.mrb[0].mxu0
      %v1480 = vadd.f32 0.0, %v1479
      %v1481 = vpop.f32.mrb[0].mxu0
      %1482 = vmatprep.mubr.f32.mxu0 0.0
      %1483 = vmatmul.mubr.f32.gmra.mrb[0].mxu0 %v301
      %v1484 = vpop.f32.mrb[0].mxu0
      %v1485 = vadd.f32 0.0, %v1484
      %v1486 = vpop.f32.mrb[0].mxu0
      %1487 = vmatprep.mubr.f32.mxu0 0.0
      %1488 = vmatmul.mubr.f32.gmra.mrb[0].mxu0 %v304
      %v1489 = vpop.f32.mrb[0].mxu0
      %v1490 = vadd.f32 0.0, %v1489
      %v1491 = vpop.f32.mrb[0].mxu0
      %1492 = vmatprep.mubr.f32.mxu0 0.0
      %1493 = vmatmul.mubr.f32.gmra.mrb[0].mxu0 %v307
      %v1494 = vpop.f32.mrb[0].mxu0
      %v1495 = vadd.f32 0.0, %v1494
      %v1496 = vpop.f32.mrb[0].mxu0
      %1497 = vmatprep.mubr.f32.mxu0 0.0
      %1498 = vmatmul.mubr.f32.gmra.mrb[0].mxu0 %v310
      %v1499 = vpop.f32.mrb[0].mxu0
      %v1500 = vadd.f32 0.0, %v1499
      %v1501 = vpop.f32.mrb[0].mxu0
      %1502 = vmatprep.mubr.f32.mxu0 0.0
      %1503 = vmatmul.mubr.f32.gmra.mrb[0].mxu0 %v313
      %v1504 = vpop.f32.mrb[0].mxu0
      %v1505 = vadd.f32 0.0, %v1504
      %v1506 = vpop.f32.mrb[0].mxu0
      %1507 = vmatprep.mubr.f32.mxu0 0.0
      %1508 = vmatmul.mubr.f32.gmra.mrb[0].mxu0 %v316
      %v1509 = vpop.f32.mrb[0].mxu0
      %v1510 = vadd.f32 0.0, %v1509
      %v1511 = vpop.f32.mrb[0].mxu0
      %1512 = vmatprep.mubr.f32.mxu0 0.0
      %1513 = vmatmul.mubr.f32.gmra.mrb[0].mxu0 %v319
      %v1514 = vpop.f32.mrb[0].mxu0
      %v1515 = vadd.f32 0.0, %v1514
      %v1516 = vpop.f32.mrb[0].mxu0
      %1517 = vmatprep.mubr.f32.mxu0 0.0
      %1518 = vmatmul.mubr.f32.gmra.mrb[0].mxu0 %v322
      %v1519 = vpop.f32.mrb[0].mxu0
      %v1520 = vadd.f32 0.0, %v1519
      %v1521 = vpop.f32.mrb[0].mxu0
      %1522 = vmatprep.mubr.f32.mxu0 0.0
      %1523 = vmatmul.mubr.f32.gmra.mrb[0].mxu0 %v325
      %v1524 = vpop.f32.mrb[0].mxu0
      %v1525 = vadd.f32 0.0, %v1524
      %v1526 = vpop.f32.mrb[0].mxu0
      %1527 = vmatprep.mubr.f32.mxu0 0.0
      %1528 = vmatmul.mubr.f32.gmra.mrb[0].mxu0 %v328
      %v1529 = vpop.f32.mrb[0].mxu0
      %v1530 = vadd.f32 0.0, %v1529
      %v1531 = vpop.f32.mrb[0].mxu0
      %1532 = vmatprep.mubr.f32.mxu0 0.0
      %1533 = vmatmul.mubr.f32.gmra.mrb[0].mxu0 %v331
      %v1534 = vpop.f32.mrb[0].mxu0
      %v1535 = vadd.f32 0.0, %v1534
      %v1536 = vpop.f32.mrb[0].mxu0
      %1537 = vmatprep.mubr.f32.mxu0 0.0
      %1538 = vmatmul.mubr.f32.gmra.mrb[0].mxu0 %v334
      %v1539 = vpop.f32.mrb[0].mxu0
      %v1540 = vadd.f32 0.0, %v1539
      %v1541 = vpop.f32.mrb[0].mxu0
      %1542 = vmatprep.mubr.f32.mxu0 0.0
      %1543 = vmatmul.mubr.f32.gmra.mrb[0].mxu0 %v337
      %v1544 = vpop.f32.mrb[0].mxu0
      %v1545 = vadd.f32 0.0, %v1544
      %v1546 = vpop.f32.mrb[0].mxu0
      %1547 = vmatprep.mubr.f32.mxu0 0.0
      %1548 = vmatmul.mubr.f32.gmra.mrb[0].mxu0 %v340
      %v1549 = vpop.f32.mrb[0].mxu0
      %v1550 = vpop.f32.mrb[0].mxu0
      %1551 = vmatprep.mubr.f32.mxu0 0.0
      %1552 = vmatmul.mubr.f32.gmra.mrb[0].mxu0 %v343
      %v1553 = vpop.f32.mrb[0].mxu0
      %v1554 = vpop.f32.mrb[0].mxu0
      %1555 = vdwg.mxu0
      %v1556 = vadd.f32 %v1302, %v1410
      %v1557 = vadd.f32 %v1303, %v1415
      %v1558 = vadd.f32 %v1304, %v1420
      %v1559 = vadd.f32 %v1305, %v1425
      %v1560 = vadd.f32 %v1306, %v1430
      %v1561 = vadd.f32 %v1307, %v1435
      %v1562 = vadd.f32 %v1308, %v1440
      %v1563 = vadd.f32 %v1309, %v1445
      %v1564 = vadd.f32 %v1310, %v1450
      %v1565 = vadd.f32 %v1311, %v1455
      %v1566 = vadd.f32 %v1312, %v1460
      %v1567 = vadd.f32 %v1313, %v1465
      %v1568 = vadd.f32 %v1314, %v1470
      %v1569 = vadd.f32 %v1315, %v1475
      %v1570 = vadd.f32 %v1316, %v1480
      %v1571 = vadd.f32 %v1317, %v1485
      %v1572 = vadd.f32 %v1318, %v1490
      %v1573 = vadd.f32 %v1319, %v1495
      %v1574 = vadd.f32 %v1320, %v1500
      %v1575 = vadd.f32 %v1321, %v1505
      %v1576 = vadd.f32 %v1322, %v1510
      %v1577 = vadd.f32 %v1323, %v1515
      %v1578 = vadd.f32 %v1324, %v1520
      %v1579 = vadd.f32 %v1325, %v1525
      %v1580 = vadd.f32 %v1326, %v1530
      %v1581 = vadd.f32 %v1327, %v1535
      %v1582 = vadd.f32 %v1328, %v1540
      %v1583 = vadd.f32 %v1329, %v1545
      %s1584 = scalar_lea.vmem %s1, 16
      %v1585 = vld [vmem:[%s1584] sm:$0xf]
      %v1587 = vsel %vm345, %v1585, 0
      %1589 = vmatprep.subr.mxu0 0.0
      %1590 = vmatpush1.msra.mxu0 %v1587
      %1591 = vmatprep.subr.mxu0 0.0
      %1592 = vmatpush1.msra.mxu0 0.0
      %1593 = vmatprep.subr.mxu0 0.0
      %1594 = vmatpush1.msra.mxu0 0.0
      %1595 = vmatprep.subr.mxu0 0.0
      %1596 = vmatpush1.msra.mxu0 0.0
      %1597 = vmatprep.subr.mxu0 0.0
      %1598 = vmatpush1.msra.mxu0 0.0
      %1599 = vmatprep.subr.mxu0 0.0
      %1600 = vmatpush1.msra.mxu0 0.0
      %1601 = vmatprep.subr.mxu0 0.0
      %1602 = vmatpush1.msra.mxu0 0.0
      %1603 = vmatprep.subr.mxu0 0.0
      %1604 = vmatpush1.msra.mxu0 0.0
      %1605 = vmatprep.subr.mxu0 0.0
      %1606 = vmatpush1.msra.mxu0 0.0
      %1607 = vmatprep.subr.mxu0 0.0
      %1608 = vmatpush1.msra.mxu0 0.0
      %1609 = vmatprep.subr.mxu0 0.0
      %1610 = vmatpush1.msra.mxu0 0.0
      %1611 = vmatprep.subr.mxu0 0.0
      %1612 = vmatpush1.msra.mxu0 0.0
      %1613 = vmatprep.subr.mxu0 0.0
      %1614 = vmatpush1.msra.mxu0 0.0
      %1615 = vmatprep.subr.mxu0 0.0
      %1616 = vmatpush1.msra.mxu0 0.0
      %1617 = vmatprep.subr.mxu0 0.0
      %1618 = vmatpush1.msra.mxu0 0.0
      %1619 = vmatprep.subr.mxu0 0.0
      %1620 = vmatpush1.msra.mxu0 0.0
      %1621 = vmatprep.subr.mxu0 0.0
      %1622 = vmatpush1.msra.mxu0 0.0
      %1623 = vmatprep.subr.mxu0 0.0
      %1624 = vmatpush1.msra.mxu0 0.0
      %1625 = vmatprep.subr.mxu0 0.0
      %1626 = vmatpush1.msra.mxu0 0.0
      %1627 = vmatprep.subr.mxu0 0.0
      %1628 = vmatpush1.msra.mxu0 0.0
      %1629 = vmatprep.subr.mxu0 0.0
      %1630 = vmatpush1.msra.mxu0 0.0
      %1631 = vmatprep.subr.mxu0 0.0
      %1632 = vmatpush1.msra.mxu0 0.0
      %1633 = vmatprep.subr.mxu0 0.0
      %1634 = vmatpush1.msra.mxu0 0.0
      %1635 = vmatprep.subr.mxu0 0.0
      %1636 = vmatpush1.msra.mxu0 0.0
      %1637 = vmatprep.subr.mxu0 0.0
      %1638 = vmatpush1.msra.mxu0 0.0
      %1639 = vmatprep.subr.mxu0 0.0
      %1640 = vmatpush1.msra.mxu0 0.0
      %1641 = vmatprep.subr.mxu0 0.0
      %1642 = vmatpush1.msra.mxu0 0.0
      %1643 = vmatprep.subr.mxu0 0.0
      %1644 = vmatpush1.msra.mxu0 0.0
      %1645 = vmatprep.subr.mxu0 0.0
      %1646 = vmatpush1.msra.mxu0 0.0
      %1647 = vmatprep.subr.mxu0 0.0
      %1648 = vmatpush1.msra.mxu0 0.0
      %1649 = vmatprep.subr.mxu0 0.0
      %1650 = vmatpush1.msra.mxu0 0.0
      %1651 = vmatprep.subr.mxu0 0.0
      %1652 = vmatpush1.msra.mxu0 0.0
      %1653 = vmatprep.mubr.f32.mxu0 0.0
      %1654 = vmatmul.mubr.f32.gmra.mrb[0].mxu0 %v250
      %v1655 = vpop.f32.mrb[0].mxu0
      %v1656 = vpop.f32.mrb[0].mxu0
      %1657 = vmatprep.mubr.f32.mxu0 0.0
      %1658 = vmatmul.mubr.f32.gmra.mrb[0].mxu0 %v253
      %v1659 = vpop.f32.mrb[0].mxu0
      %v1660 = vpop.f32.mrb[0].mxu0
      %1661 = vmatprep.mubr.f32.mxu0 0.0
      %1662 = vmatmul.mubr.f32.gmra.mrb[0].mxu0 %v256
      %v1663 = vpop.f32.mrb[0].mxu0
      %v1664 = vadd.f32 0.0, %v1663
      %v1665 = vpop.f32.mrb[0].mxu0
      %1666 = vmatprep.mubr.f32.mxu0 0.0
      %1667 = vmatmul.mubr.f32.gmra.mrb[0].mxu0 %v259
      %v1668 = vpop.f32.mrb[0].mxu0
      %v1669 = vadd.f32 0.0, %v1668
      %v1670 = vpop.f32.mrb[0].mxu0
      %1671 = vmatprep.mubr.f32.mxu0 0.0
      %1672 = vmatmul.mubr.f32.gmra.mrb[0].mxu0 %v262
      %v1673 = vpop.f32.mrb[0].mxu0
      %v1674 = vadd.f32 0.0, %v1673
      %v1675 = vpop.f32.mrb[0].mxu0
      %1676 = vmatprep.mubr.f32.mxu0 0.0
      %1677 = vmatmul.mubr.f32.gmra.mrb[0].mxu0 %v265
      %v1678 = vpop.f32.mrb[0].mxu0
      %v1679 = vadd.f32 0.0, %v1678
      %v1680 = vpop.f32.mrb[0].mxu0
      %1681 = vmatprep.mubr.f32.mxu0 0.0
      %1682 = vmatmul.mubr.f32.gmra.mrb[0].mxu0 %v268
      %v1683 = vpop.f32.mrb[0].mxu0
      %v1684 = vadd.f32 0.0, %v1683
      %v1685 = vpop.f32.mrb[0].mxu0
      %1686 = vmatprep.mubr.f32.mxu0 0.0
      %1687 = vmatmul.mubr.f32.gmra.mrb[0].mxu0 %v271
      %v1688 = vpop.f32.mrb[0].mxu0
      %v1689 = vadd.f32 0.0, %v1688
      %v1690 = vpop.f32.mrb[0].mxu0
      %1691 = vmatprep.mubr.f32.mxu0 0.0
      %1692 = vmatmul.mubr.f32.gmra.mrb[0].mxu0 %v274
      %v1693 = vpop.f32.mrb[0].mxu0
      %v1694 = vadd.f32 0.0, %v1693
      %v1695 = vpop.f32.mrb[0].mxu0
      %1696 = vmatprep.mubr.f32.mxu0 0.0
      %1697 = vmatmul.mubr.f32.gmra.mrb[0].mxu0 %v277
      %v1698 = vpop.f32.mrb[0].mxu0
      %v1699 = vadd.f32 0.0, %v1698
      %v1700 = vpop.f32.mrb[0].mxu0
      %1701 = vmatprep.mubr.f32.mxu0 0.0
      %1702 = vmatmul.mubr.f32.gmra.mrb[0].mxu0 %v280
      %v1703 = vpop.f32.mrb[0].mxu0
      %v1704 = vadd.f32 0.0, %v1703
      %v1705 = vpop.f32.mrb[0].mxu0
      %1706 = vmatprep.mubr.f32.mxu0 0.0
      %1707 = vmatmul.mubr.f32.gmra.mrb[0].mxu0 %v283
      %v1708 = vpop.f32.mrb[0].mxu0
      %v1709 = vadd.f32 0.0, %v1708
      %v1710 = vpop.f32.mrb[0].mxu0
      %1711 = vmatprep.mubr.f32.mxu0 0.0
      %1712 = vmatmul.mubr.f32.gmra.mrb[0].mxu0 %v286
      %v1713 = vpop.f32.mrb[0].mxu0
      %v1714 = vadd.f32 0.0, %v1713
      %v1715 = vpop.f32.mrb[0].mxu0
      %1716 = vmatprep.mubr.f32.mxu0 0.0
      %1717 = vmatmul.mubr.f32.gmra.mrb[0].mxu0 %v289
      %v1718 = vpop.f32.mrb[0].mxu0
      %v1719 = vadd.f32 0.0, %v1718
      %v1720 = vpop.f32.mrb[0].mxu0
      %1721 = vmatprep.mubr.f32.mxu0 0.0
      %1722 = vmatmul.mubr.f32.gmra.mrb[0].mxu0 %v292
      %v1723 = vpop.f32.mrb[0].mxu0
      %v1724 = vadd.f32 0.0, %v1723
      %v1725 = vpop.f32.mrb[0].mxu0
      %1726 = vmatprep.mubr.f32.mxu0 0.0
      %1727 = vmatmul.mubr.f32.gmra.mrb[0].mxu0 %v295
      %v1728 = vpop.f32.mrb[0].mxu0
      %v1729 = vadd.f32 0.0, %v1728
      %v1730 = vpop.f32.mrb[0].mxu0
      %1731 = vmatprep.mubr.f32.mxu0 0.0
      %1732 = vmatmul.mubr.f32.gmra.mrb[0].mxu0 %v298
      %v1733 = vpop.f32.mrb[0].mxu0
      %v1734 = vadd.f32 0.0, %v1733
      %v1735 = vpop.f32.mrb[0].mxu0
      %1736 = vmatprep.mubr.f32.mxu0 0.0
      %1737 = vmatmul.mubr.f32.gmra.mrb[0].mxu0 %v301
      %v1738 = vpop.f32.mrb[0].mxu0
      %v1739 = vadd.f32 0.0, %v1738
      %v1740 = vpop.f32.mrb[0].mxu0
      %1741 = vmatprep.mubr.f32.mxu0 0.0
      %1742 = vmatmul.mubr.f32.gmra.mrb[0].mxu0 %v304
      %v1743 = vpop.f32.mrb[0].mxu0
      %v1744 = vadd.f32 0.0, %v1743
      %v1745 = vpop.f32.mrb[0].mxu0
      %1746 = vmatprep.mubr.f32.mxu0 0.0
      %1747 = vmatmul.mubr.f32.gmra.mrb[0].mxu0 %v307
      %v1748 = vpop.f32.mrb[0].mxu0
      %v1749 = vadd.f32 0.0, %v1748
      %v1750 = vpop.f32.mrb[0].mxu0
      %1751 = vmatprep.mubr.f32.mxu0 0.0
      %1752 = vmatmul.mubr.f32.gmra.mrb[0].mxu0 %v310
      %v1753 = vpop.f32.mrb[0].mxu0
      %v1754 = vadd.f32 0.0, %v1753
      %v1755 = vpop.f32.mrb[0].mxu0
      %1756 = vmatprep.mubr.f32.mxu0 0.0
      %1757 = vmatmul.mubr.f32.gmra.mrb[0].mxu0 %v313
      %v1758 = vpop.f32.mrb[0].mxu0
      %v1759 = vadd.f32 0.0, %v1758
      %v1760 = vpop.f32.mrb[0].mxu0
      %1761 = vmatprep.mubr.f32.mxu0 0.0
      %1762 = vmatmul.mubr.f32.gmra.mrb[0].mxu0 %v316
      %v1763 = vpop.f32.mrb[0].mxu0
      %v1764 = vadd.f32 0.0, %v1763
      %v1765 = vpop.f32.mrb[0].mxu0
      %1766 = vmatprep.mubr.f32.mxu0 0.0
      %1767 = vmatmul.mubr.f32.gmra.mrb[0].mxu0 %v319
      %v1768 = vpop.f32.mrb[0].mxu0
      %v1769 = vadd.f32 0.0, %v1768
      %v1770 = vpop.f32.mrb[0].mxu0
      %1771 = vmatprep.mubr.f32.mxu0 0.0
      %1772 = vmatmul.mubr.f32.gmra.mrb[0].mxu0 %v322
      %v1773 = vpop.f32.mrb[0].mxu0
      %v1774 = vadd.f32 0.0, %v1773
      %v1775 = vpop.f32.mrb[0].mxu0
      %1776 = vmatprep.mubr.f32.mxu0 0.0
      %1777 = vmatmul.mubr.f32.gmra.mrb[0].mxu0 %v325
      %v1778 = vpop.f32.mrb[0].mxu0
      %v1779 = vadd.f32 0.0, %v1778
      %v1780 = vpop.f32.mrb[0].mxu0
      %1781 = vmatprep.mubr.f32.mxu0 0.0
      %1782 = vmatmul.mubr.f32.gmra.mrb[0].mxu0 %v328
      %v1783 = vpop.f32.mrb[0].mxu0
      %v1784 = vadd.f32 0.0, %v1783
      %v1785 = vpop.f32.mrb[0].mxu0
      %1786 = vmatprep.mubr.f32.mxu0 0.0
      %1787 = vmatmul.mubr.f32.gmra.mrb[0].mxu0 %v331
      %v1788 = vpop.f32.mrb[0].mxu0
      %v1789 = vadd.f32 0.0, %v1788
      %v1790 = vpop.f32.mrb[0].mxu0
      %1791 = vmatprep.mubr.f32.mxu0 0.0
      %1792 = vmatmul.mubr.f32.gmra.mrb[0].mxu0 %v334
      %v1793 = vpop.f32.mrb[0].mxu0
      %v1794 = vadd.f32 0.0, %v1793
      %v1795 = vpop.f32.mrb[0].mxu0
      %1796 = vmatprep.mubr.f32.mxu0 0.0
      %1797 = vmatmul.mubr.f32.gmra.mrb[0].mxu0 %v337
      %v1798 = vpop.f32.mrb[0].mxu0
      %v1799 = vadd.f32 0.0, %v1798
      %v1800 = vpop.f32.mrb[0].mxu0
      %1801 = vmatprep.mubr.f32.mxu0 0.0
      %1802 = vmatmul.mubr.f32.gmra.mrb[0].mxu0 %v340
      %v1803 = vpop.f32.mrb[0].mxu0
      %v1804 = vpop.f32.mrb[0].mxu0
      %1805 = vmatprep.mubr.f32.mxu0 0.0
      %1806 = vmatmul.mubr.f32.gmra.mrb[0].mxu0 %v343
      %v1807 = vpop.f32.mrb[0].mxu0
      %v1808 = vpop.f32.mrb[0].mxu0
      %1809 = vdwg.mxu0
      %v1838 = vrot.slane %v1664, 1
      %v1839 = vrot.slane %v1669, 1
      %v1840 = vsel %vm852, %v1838, %v1839
      %v1841 = vrot.slane %v1674, 1
      %v1842 = vsel %vm852, %v1839, %v1841
      %v1843 = vrot.slane %v1679, 1
      %v1844 = vsel %vm852, %v1841, %v1843
      %v1845 = vrot.slane %v1684, 1
      %v1846 = vsel %vm852, %v1843, %v1845
      %v1847 = vrot.slane %v1689, 1
      %v1848 = vsel %vm852, %v1845, %v1847
      %v1849 = vrot.slane %v1694, 1
      %v1850 = vsel %vm852, %v1847, %v1849
      %v1851 = vrot.slane %v1699, 1
      %v1852 = vsel %vm852, %v1849, %v1851
      %v1853 = vrot.slane %v1704, 1
      %v1854 = vsel %vm852, %v1851, %v1853
      %v1855 = vrot.slane %v1709, 1
      %v1856 = vsel %vm852, %v1853, %v1855
      %v1857 = vrot.slane %v1714, 1
      %v1858 = vsel %vm852, %v1855, %v1857
      %v1859 = vrot.slane %v1719, 1
      %v1860 = vsel %vm852, %v1857, %v1859
      %v1861 = vrot.slane %v1724, 1
      %v1862 = vsel %vm852, %v1859, %v1861
      %v1863 = vrot.slane %v1729, 1
      %v1864 = vsel %vm852, %v1861, %v1863
      %v1865 = vrot.slane %v1734, 1
      %v1866 = vsel %vm852, %v1863, %v1865
      %v1867 = vrot.slane %v1739, 1
      %v1868 = vsel %vm852, %v1865, %v1867
      %v1869 = vrot.slane %v1744, 1
      %v1870 = vsel %vm852, %v1867, %v1869
      %v1871 = vrot.slane %v1749, 1
      %v1872 = vsel %vm852, %v1869, %v1871
      %v1873 = vrot.slane %v1754, 1
      %v1874 = vsel %vm852, %v1871, %v1873
      %v1875 = vrot.slane %v1759, 1
      %v1876 = vsel %vm852, %v1873, %v1875
      %v1877 = vrot.slane %v1764, 1
      %v1878 = vsel %vm852, %v1875, %v1877
      %v1879 = vrot.slane %v1769, 1
      %v1880 = vsel %vm852, %v1877, %v1879
      %v1881 = vrot.slane %v1774, 1
      %v1882 = vsel %vm852, %v1879, %v1881
      %v1883 = vrot.slane %v1779, 1
      %v1884 = vsel %vm852, %v1881, %v1883
      %v1885 = vrot.slane %v1784, 1
      %v1886 = vsel %vm852, %v1883, %v1885
      %v1887 = vrot.slane %v1789, 1
      %v1888 = vsel %vm852, %v1885, %v1887
      %v1889 = vrot.slane %v1794, 1
      %v1890 = vsel %vm852, %v1887, %v1889
      %v1891 = vrot.slane %v1799, 1
      %v1892 = vsel %vm852, %v1889, %v1891
      %v1921 = vadd.f32 %v1556, %v1840
      %v1922 = vadd.f32 %v1557, %v1842
      %v1923 = vadd.f32 %v1558, %v1844
      %v1924 = vadd.f32 %v1559, %v1846
      %v1925 = vadd.f32 %v1560, %v1848
      %v1926 = vadd.f32 %v1561, %v1850
      %v1927 = vadd.f32 %v1562, %v1852
      %v1928 = vadd.f32 %v1563, %v1854
      %v1929 = vadd.f32 %v1564, %v1856
      %v1930 = vadd.f32 %v1565, %v1858
      %v1931 = vadd.f32 %v1566, %v1860
      %v1932 = vadd.f32 %v1567, %v1862
      %v1933 = vadd.f32 %v1568, %v1864
      %v1934 = vadd.f32 %v1569, %v1866
      %v1935 = vadd.f32 %v1570, %v1868
      %v1936 = vadd.f32 %v1571, %v1870
      %v1937 = vadd.f32 %v1572, %v1872
      %v1938 = vadd.f32 %v1573, %v1874
      %v1939 = vadd.f32 %v1574, %v1876
      %v1940 = vadd.f32 %v1575, %v1878
      %v1941 = vadd.f32 %v1576, %v1880
      %v1942 = vadd.f32 %v1577, %v1882
      %v1943 = vadd.f32 %v1578, %v1884
      %v1944 = vadd.f32 %v1579, %v1886
      %v1945 = vadd.f32 %v1580, %v1888
      %v1946 = vadd.f32 %v1581, %v1890
      %v1947 = vadd.f32 %v1582, %v1892
      %v1948 = vadd.f32 %v1583, %v1891
      %s1949 = scalar_lea.vmem %s1, 20
      %v1950 = vld [vmem:[%s1949] sm:$0xf]
      %v1952 = vsel %vm345, %v1950, 0
      %1954 = vmatprep.subr.mxu0 0.0
      %1955 = vmatpush1.msra.mxu0 %v1952
      %1956 = vmatprep.subr.mxu0 0.0
      %1957 = vmatpush1.msra.mxu0 0.0
      %1958 = vmatprep.subr.mxu0 0.0
      %1959 = vmatpush1.msra.mxu0 0.0
      %1960 = vmatprep.subr.mxu0 0.0
      %1961 = vmatpush1.msra.mxu0 0.0
      %1962 = vmatprep.subr.mxu0 0.0
      %1963 = vmatpush1.msra.mxu0 0.0
      %1964 = vmatprep.subr.mxu0 0.0
      %1965 = vmatpush1.msra.mxu0 0.0
      %1966 = vmatprep.subr.mxu0 0.0
      %1967 = vmatpush1.msra.mxu0 0.0
      %1968 = vmatprep.subr.mxu0 0.0
      %1969 = vmatpush1.msra.mxu0 0.0
      %1970 = vmatprep.subr.mxu0 0.0
      %1971 = vmatpush1.msra.mxu0 0.0
      %1972 = vmatprep.subr.mxu0 0.0
      %1973 = vmatpush1.msra.mxu0 0.0
      %1974 = vmatprep.subr.mxu0 0.0
      %1975 = vmatpush1.msra.mxu0 0.0
      %1976 = vmatprep.subr.mxu0 0.0
      %1977 = vmatpush1.msra.mxu0 0.0
      %1978 = vmatprep.subr.mxu0 0.0
      %1979 = vmatpush1.msra.mxu0 0.0
      %1980 = vmatprep.subr.mxu0 0.0
      %1981 = vmatpush1.msra.mxu0 0.0
      %1982 = vmatprep.subr.mxu0 0.0
      %1983 = vmatpush1.msra.mxu0 0.0
      %1984 = vmatprep.subr.mxu0 0.0
      %1985 = vmatpush1.msra.mxu0 0.0
      %1986 = vmatprep.subr.mxu0 0.0
      %1987 = vmatpush1.msra.mxu0 0.0
      %1988 = vmatprep.subr.mxu0 0.0
      %1989 = vmatpush1.msra.mxu0 0.0
      %1990 = vmatprep.subr.mxu0 0.0
      %1991 = vmatpush1.msra.mxu0 0.0
      %1992 = vmatprep.subr.mxu0 0.0
      %1993 = vmatpush1.msra.mxu0 0.0
      %1994 = vmatprep.subr.mxu0 0.0
      %1995 = vmatpush1.msra.mxu0 0.0
      %1996 = vmatprep.subr.mxu0 0.0
      %1997 = vmatpush1.msra.mxu0 0.0
      %1998 = vmatprep.subr.mxu0 0.0
      %1999 = vmatpush1.msra.mxu0 0.0
      %2000 = vmatprep.subr.mxu0 0.0
      %2001 = vmatpush1.msra.mxu0 0.0
      %2002 = vmatprep.subr.mxu0 0.0
      %2003 = vmatpush1.msra.mxu0 0.0
      %2004 = vmatprep.subr.mxu0 0.0
      %2005 = vmatpush1.msra.mxu0 0.0
      %2006 = vmatprep.subr.mxu0 0.0
      %2007 = vmatpush1.msra.mxu0 0.0
      %2008 = vmatprep.subr.mxu0 0.0
      %2009 = vmatpush1.msra.mxu0 0.0
      %2010 = vmatprep.subr.mxu0 0.0
      %2011 = vmatpush1.msra.mxu0 0.0
      %2012 = vmatprep.subr.mxu0 0.0
      %2013 = vmatpush1.msra.mxu0 0.0
      %2014 = vmatprep.subr.mxu0 0.0
      %2015 = vmatpush1.msra.mxu0 0.0
      %2016 = vmatprep.subr.mxu0 0.0
      %2017 = vmatpush1.msra.mxu0 0.0
      %2018 = vmatprep.mubr.f32.mxu0 0.0
      %2019 = vmatmul.mubr.f32.gmra.mrb[0].mxu0 %v250
      %v2020 = vpop.f32.mrb[0].mxu0
      %v2021 = vpop.f32.mrb[0].mxu0
      %2022 = vmatprep.mubr.f32.mxu0 0.0
      %2023 = vmatmul.mubr.f32.gmra.mrb[0].mxu0 %v253
      %v2024 = vpop.f32.mrb[0].mxu0
      %v2025 = vpop.f32.mrb[0].mxu0
      %2026 = vmatprep.mubr.f32.mxu0 0.0
      %2027 = vmatmul.mubr.f32.gmra.mrb[0].mxu0 %v256
      %v2028 = vpop.f32.mrb[0].mxu0
      %v2029 = vadd.f32 0.0, %v2028
      %v2030 = vpop.f32.mrb[0].mxu0
      %2031 = vmatprep.mubr.f32.mxu0 0.0
      %2032 = vmatmul.mubr.f32.gmra.mrb[0].mxu0 %v259
      %v2033 = vpop.f32.mrb[0].mxu0
      %v2034 = vadd.f32 0.0, %v2033
      %v2035 = vpop.f32.mrb[0].mxu0
      %2036 = vmatprep.mubr.f32.mxu0 0.0
      %2037 = vmatmul.mubr.f32.gmra.mrb[0].mxu0 %v262
      %v2038 = vpop.f32.mrb[0].mxu0
      %v2039 = vadd.f32 0.0, %v2038
      %v2040 = vpop.f32.mrb[0].mxu0
      %2041 = vmatprep.mubr.f32.mxu0 0.0
      %2042 = vmatmul.mubr.f32.gmra.mrb[0].mxu0 %v265
      %v2043 = vpop.f32.mrb[0].mxu0
      %v2044 = vadd.f32 0.0, %v2043
      %v2045 = vpop.f32.mrb[0].mxu0
      %2046 = vmatprep.mubr.f32.mxu0 0.0
      %2047 = vmatmul.mubr.f32.gmra.mrb[0].mxu0 %v268
      %v2048 = vpop.f32.mrb[0].mxu0
      %v2049 = vadd.f32 0.0, %v2048
      %v2050 = vpop.f32.mrb[0].mxu0
      %2051 = vmatprep.mubr.f32.mxu0 0.0
      %2052 = vmatmul.mubr.f32.gmra.mrb[0].mxu0 %v271
      %v2053 = vpop.f32.mrb[0].mxu0
      %v2054 = vadd.f32 0.0, %v2053
      %v2055 = vpop.f32.mrb[0].mxu0
      %2056 = vmatprep.mubr.f32.mxu0 0.0
      %2057 = vmatmul.mubr.f32.gmra.mrb[0].mxu0 %v274
      %v2058 = vpop.f32.mrb[0].mxu0
      %v2059 = vadd.f32 0.0, %v2058
      %v2060 = vpop.f32.mrb[0].mxu0
      %2061 = vmatprep.mubr.f32.mxu0 0.0
      %2062 = vmatmul.mubr.f32.gmra.mrb[0].mxu0 %v277
      %v2063 = vpop.f32.mrb[0].mxu0
      %v2064 = vadd.f32 0.0, %v2063
      %v2065 = vpop.f32.mrb[0].mxu0
      %2066 = vmatprep.mubr.f32.mxu0 0.0
      %2067 = vmatmul.mubr.f32.gmra.mrb[0].mxu0 %v280
      %v2068 = vpop.f32.mrb[0].mxu0
      %v2069 = vadd.f32 0.0, %v2068
      %v2070 = vpop.f32.mrb[0].mxu0
      %2071 = vmatprep.mubr.f32.mxu0 0.0
      %2072 = vmatmul.mubr.f32.gmra.mrb[0].mxu0 %v283
      %v2073 = vpop.f32.mrb[0].mxu0
      %v2074 = vadd.f32 0.0, %v2073
      %v2075 = vpop.f32.mrb[0].mxu0
      %2076 = vmatprep.mubr.f32.mxu0 0.0
      %2077 = vmatmul.mubr.f32.gmra.mrb[0].mxu0 %v286
      %v2078 = vpop.f32.mrb[0].mxu0
      %v2079 = vadd.f32 0.0, %v2078
      %v2080 = vpop.f32.mrb[0].mxu0
      %2081 = vmatprep.mubr.f32.mxu0 0.0
      %2082 = vmatmul.mubr.f32.gmra.mrb[0].mxu0 %v289
      %v2083 = vpop.f32.mrb[0].mxu0
      %v2084 = vadd.f32 0.0, %v2083
      %v2085 = vpop.f32.mrb[0].mxu0
      %2086 = vmatprep.mubr.f32.mxu0 0.0
      %2087 = vmatmul.mubr.f32.gmra.mrb[0].mxu0 %v292
      %v2088 = vpop.f32.mrb[0].mxu0
      %v2089 = vadd.f32 0.0, %v2088
      %v2090 = vpop.f32.mrb[0].mxu0
      %2091 = vmatprep.mubr.f32.mxu0 0.0
      %2092 = vmatmul.mubr.f32.gmra.mrb[0].mxu0 %v295
      %v2093 = vpop.f32.mrb[0].mxu0
      %v2094 = vadd.f32 0.0, %v2093
      %v2095 = vpop.f32.mrb[0].mxu0
      %2096 = vmatprep.mubr.f32.mxu0 0.0
      %2097 = vmatmul.mubr.f32.gmra.mrb[0].mxu0 %v298
      %v2098 = vpop.f32.mrb[0].mxu0
      %v2099 = vadd.f32 0.0, %v2098
      %v2100 = vpop.f32.mrb[0].mxu0
      %2101 = vmatprep.mubr.f32.mxu0 0.0
      %2102 = vmatmul.mubr.f32.gmra.mrb[0].mxu0 %v301
      %v2103 = vpop.f32.mrb[0].mxu0
      %v2104 = vadd.f32 0.0, %v2103
      %v2105 = vpop.f32.mrb[0].mxu0
      %2106 = vmatprep.mubr.f32.mxu0 0.0
      %2107 = vmatmul.mubr.f32.gmra.mrb[0].mxu0 %v304
      %v2108 = vpop.f32.mrb[0].mxu0
      %v2109 = vadd.f32 0.0, %v2108
      %v2110 = vpop.f32.mrb[0].mxu0
      %2111 = vmatprep.mubr.f32.mxu0 0.0
      %2112 = vmatmul.mubr.f32.gmra.mrb[0].mxu0 %v307
      %v2113 = vpop.f32.mrb[0].mxu0
      %v2114 = vadd.f32 0.0, %v2113
      %v2115 = vpop.f32.mrb[0].mxu0
      %2116 = vmatprep.mubr.f32.mxu0 0.0
      %2117 = vmatmul.mubr.f32.gmra.mrb[0].mxu0 %v310
      %v2118 = vpop.f32.mrb[0].mxu0
      %v2119 = vadd.f32 0.0, %v2118
      %v2120 = vpop.f32.mrb[0].mxu0
      %2121 = vmatprep.mubr.f32.mxu0 0.0
      %2122 = vmatmul.mubr.f32.gmra.mrb[0].mxu0 %v313
      %v2123 = vpop.f32.mrb[0].mxu0
      %v2124 = vadd.f32 0.0, %v2123
      %v2125 = vpop.f32.mrb[0].mxu0
      %2126 = vmatprep.mubr.f32.mxu0 0.0
      %2127 = vmatmul.mubr.f32.gmra.mrb[0].mxu0 %v316
      %v2128 = vpop.f32.mrb[0].mxu0
      %v2129 = vadd.f32 0.0, %v2128
      %v2130 = vpop.f32.mrb[0].mxu0
      %2131 = vmatprep.mubr.f32.mxu0 0.0
      %2132 = vmatmul.mubr.f32.gmra.mrb[0].mxu0 %v319
      %v2133 = vpop.f32.mrb[0].mxu0
      %v2134 = vadd.f32 0.0, %v2133
      %v2135 = vpop.f32.mrb[0].mxu0
      %2136 = vmatprep.mubr.f32.mxu0 0.0
      %2137 = vmatmul.mubr.f32.gmra.mrb[0].mxu0 %v322
      %v2138 = vpop.f32.mrb[0].mxu0
      %v2139 = vadd.f32 0.0, %v2138
      %v2140 = vpop.f32.mrb[0].mxu0
      %2141 = vmatprep.mubr.f32.mxu0 0.0
      %2142 = vmatmul.mubr.f32.gmra.mrb[0].mxu0 %v325
      %v2143 = vpop.f32.mrb[0].mxu0
      %v2144 = vadd.f32 0.0, %v2143
      %v2145 = vpop.f32.mrb[0].mxu0
      %2146 = vmatprep.mubr.f32.mxu0 0.0
      %2147 = vmatmul.mubr.f32.gmra.mrb[0].mxu0 %v328
      %v2148 = vpop.f32.mrb[0].mxu0
      %v2149 = vadd.f32 0.0, %v2148
      %v2150 = vpop.f32.mrb[0].mxu0
      %2151 = vmatprep.mubr.f32.mxu0 0.0
      %2152 = vmatmul.mubr.f32.gmra.mrb[0].mxu0 %v331
      %v2153 = vpop.f32.mrb[0].mxu0
      %v2154 = vadd.f32 0.0, %v2153
      %v2155 = vpop.f32.mrb[0].mxu0
      %2156 = vmatprep.mubr.f32.mxu0 0.0
      %2157 = vmatmul.mubr.f32.gmra.mrb[0].mxu0 %v334
      %v2158 = vpop.f32.mrb[0].mxu0
      %v2159 = vadd.f32 0.0, %v2158
      %v2160 = vpop.f32.mrb[0].mxu0
      %2161 = vmatprep.mubr.f32.mxu0 0.0
      %2162 = vmatmul.mubr.f32.gmra.mrb[0].mxu0 %v337
      %v2163 = vpop.f32.mrb[0].mxu0
      %v2164 = vadd.f32 0.0, %v2163
      %v2165 = vpop.f32.mrb[0].mxu0
      %2166 = vmatprep.mubr.f32.mxu0 0.0
      %2167 = vmatmul.mubr.f32.gmra.mrb[0].mxu0 %v340
      %v2168 = vpop.f32.mrb[0].mxu0
      %v2169 = vpop.f32.mrb[0].mxu0
      %2170 = vmatprep.mubr.f32.mxu0 0.0
      %2171 = vmatmul.mubr.f32.gmra.mrb[0].mxu0 %v343
      %v2172 = vpop.f32.mrb[0].mxu0
      %v2173 = vpop.f32.mrb[0].mxu0
      %2174 = vdwg.mxu0
      %v2203 = vrot.slane %v2029, 2
      %v2204 = vrot.slane %v2034, 2
      %v2205 = vsel %vm1218, %v2203, %v2204
      %v2206 = vrot.slane %v2039, 2
      %v2207 = vsel %vm1218, %v2204, %v2206
      %v2208 = vrot.slane %v2044, 2
      %v2209 = vsel %vm1218, %v2206, %v2208
      %v2210 = vrot.slane %v2049, 2
      %v2211 = vsel %vm1218, %v2208, %v2210
      %v2212 = vrot.slane %v2054, 2
      %v2213 = vsel %vm1218, %v2210, %v2212
      %v2214 = vrot.slane %v2059, 2
      %v2215 = vsel %vm1218, %v2212, %v2214
      %v2216 = vrot.slane %v2064, 2
      %v2217 = vsel %vm1218, %v2214, %v2216
      %v2218 = vrot.slane %v2069, 2
      %v2219 = vsel %vm1218, %v2216, %v2218
      %v2220 = vrot.slane %v2074, 2
      %v2221 = vsel %vm1218, %v2218, %v2220
      %v2222 = vrot.slane %v2079, 2
      %v2223 = vsel %vm1218, %v2220, %v2222
      %v2224 = vrot.slane %v2084, 2
      %v2225 = vsel %vm1218, %v2222, %v2224
      %v2226 = vrot.slane %v2089, 2
      %v2227 = vsel %vm1218, %v2224, %v2226
      %v2228 = vrot.slane %v2094, 2
      %v2229 = vsel %vm1218, %v2226, %v2228
      %v2230 = vrot.slane %v2099, 2
      %v2231 = vsel %vm1218, %v2228, %v2230
      %v2232 = vrot.slane %v2104, 2
      %v2233 = vsel %vm1218, %v2230, %v2232
      %v2234 = vrot.slane %v2109, 2
      %v2235 = vsel %vm1218, %v2232, %v2234
      %v2236 = vrot.slane %v2114, 2
      %v2237 = vsel %vm1218, %v2234, %v2236
      %v2238 = vrot.slane %v2119, 2
      %v2239 = vsel %vm1218, %v2236, %v2238
      %v2240 = vrot.slane %v2124, 2
      %v2241 = vsel %vm1218, %v2238, %v2240
      %v2242 = vrot.slane %v2129, 2
      %v2243 = vsel %vm1218, %v2240, %v2242
      %v2244 = vrot.slane %v2134, 2
      %v2245 = vsel %vm1218, %v2242, %v2244
      %v2246 = vrot.slane %v2139, 2
      %v2247 = vsel %vm1218, %v2244, %v2246
      %v2248 = vrot.slane %v2144, 2
      %v2249 = vsel %vm1218, %v2246, %v2248
      %v2250 = vrot.slane %v2149, 2
      %v2251 = vsel %vm1218, %v2248, %v2250
      %v2252 = vrot.slane %v2154, 2
      %v2253 = vsel %vm1218, %v2250, %v2252
      %v2254 = vrot.slane %v2159, 2
      %v2255 = vsel %vm1218, %v2252, %v2254
      %v2256 = vrot.slane %v2164, 2
      %v2257 = vsel %vm1218, %v2254, %v2256
      %v2286 = vadd.f32 %v1921, %v2205
      %v2287 = vadd.f32 %v1922, %v2207
      %v2288 = vadd.f32 %v1923, %v2209
      %v2289 = vadd.f32 %v1924, %v2211
      %v2290 = vadd.f32 %v1925, %v2213
      %v2291 = vadd.f32 %v1926, %v2215
      %v2292 = vadd.f32 %v1927, %v2217
      %v2293 = vadd.f32 %v1928, %v2219
      %v2294 = vadd.f32 %v1929, %v2221
      %v2295 = vadd.f32 %v1930, %v2223
      %v2296 = vadd.f32 %v1931, %v2225
      %v2297 = vadd.f32 %v1932, %v2227
      %v2298 = vadd.f32 %v1933, %v2229
      %v2299 = vadd.f32 %v1934, %v2231
      %v2300 = vadd.f32 %v1935, %v2233
      %v2301 = vadd.f32 %v1936, %v2235
      %v2302 = vadd.f32 %v1937, %v2237
      %v2303 = vadd.f32 %v1938, %v2239
      %v2304 = vadd.f32 %v1939, %v2241
      %v2305 = vadd.f32 %v1940, %v2243
      %v2306 = vadd.f32 %v1941, %v2245
      %v2307 = vadd.f32 %v1942, %v2247
      %v2308 = vadd.f32 %v1943, %v2249
      %v2309 = vadd.f32 %v1944, %v2251
      %v2310 = vadd.f32 %v1945, %v2253
      %v2311 = vadd.f32 %v1946, %v2255
      %v2312 = vadd.f32 %v1947, %v2257
      %v2313 = vadd.f32 %v1948, %v2256
      %s2314 = scalar_lea.vmem %s1, 24
      %v2315 = vld [vmem:[%s2314] sm:$0xf]
      %v2317 = vsel %vm345, %v2315, 0
      %2319 = vmatprep.subr.mxu0 0.0
      %2320 = vmatpush1.msra.mxu0 %v2317
      %2321 = vmatprep.subr.mxu0 0.0
      %2322 = vmatpush1.msra.mxu0 0.0
      %2323 = vmatprep.subr.mxu0 0.0
      %2324 = vmatpush1.msra.mxu0 0.0
      %2325 = vmatprep.subr.mxu0 0.0
      %2326 = vmatpush1.msra.mxu0 0.0
      %2327 = vmatprep.subr.mxu0 0.0
      %2328 = vmatpush1.msra.mxu0 0.0
      %2329 = vmatprep.subr.mxu0 0.0
      %2330 = vmatpush1.msra.mxu0 0.0
      %2331 = vmatprep.subr.mxu0 0.0
      %2332 = vmatpush1.msra.mxu0 0.0
      %2333 = vmatprep.subr.mxu0 0.0
      %2334 = vmatpush1.msra.mxu0 0.0
      %2335 = vmatprep.subr.mxu0 0.0
      %2336 = vmatpush1.msra.mxu0 0.0
      %2337 = vmatprep.subr.mxu0 0.0
      %2338 = vmatpush1.msra.mxu0 0.0
      %2339 = vmatprep.subr.mxu0 0.0
      %2340 = vmatpush1.msra.mxu0 0.0
      %2341 = vmatprep.subr.mxu0 0.0
      %2342 = vmatpush1.msra.mxu0 0.0
      %2343 = vmatprep.subr.mxu0 0.0
      %2344 = vmatpush1.msra.mxu0 0.0
      %2345 = vmatprep.subr.mxu0 0.0
      %2346 = vmatpush1.msra.mxu0 0.0
      %2347 = vmatprep.subr.mxu0 0.0
      %2348 = vmatpush1.msra.mxu0 0.0
      %2349 = vmatprep.subr.mxu0 0.0
      %2350 = vmatpush1.msra.mxu0 0.0
      %2351 = vmatprep.subr.mxu0 0.0
      %2352 = vmatpush1.msra.mxu0 0.0
      %2353 = vmatprep.subr.mxu0 0.0
      %2354 = vmatpush1.msra.mxu0 0.0
      %2355 = vmatprep.subr.mxu0 0.0
      %2356 = vmatpush1.msra.mxu0 0.0
      %2357 = vmatprep.subr.mxu0 0.0
      %2358 = vmatpush1.msra.mxu0 0.0
      %2359 = vmatprep.subr.mxu0 0.0
      %2360 = vmatpush1.msra.mxu0 0.0
      %2361 = vmatprep.subr.mxu0 0.0
      %2362 = vmatpush1.msra.mxu0 0.0
      %2363 = vmatprep.subr.mxu0 0.0
      %2364 = vmatpush1.msra.mxu0 0.0
      %2365 = vmatprep.subr.mxu0 0.0
      %2366 = vmatpush1.msra.mxu0 0.0
      %2367 = vmatprep.subr.mxu0 0.0
      %2368 = vmatpush1.msra.mxu0 0.0
      %2369 = vmatprep.subr.mxu0 0.0
      %2370 = vmatpush1.msra.mxu0 0.0
      %2371 = vmatprep.subr.mxu0 0.0
      %2372 = vmatpush1.msra.mxu0 0.0
      %2373 = vmatprep.subr.mxu0 0.0
      %2374 = vmatpush1.msra.mxu0 0.0
      %2375 = vmatprep.subr.mxu0 0.0
      %2376 = vmatpush1.msra.mxu0 0.0
      %2377 = vmatprep.subr.mxu0 0.0
      %2378 = vmatpush1.msra.mxu0 0.0
      %2379 = vmatprep.subr.mxu0 0.0
      %2380 = vmatpush1.msra.mxu0 0.0
      %2381 = vmatprep.subr.mxu0 0.0
      %2382 = vmatpush1.msra.mxu0 0.0
      %2383 = vmatprep.mubr.f32.mxu0 0.0
      %2384 = vmatmul.mubr.f32.gmra.mrb[0].mxu0 %v250
      %v2385 = vpop.f32.mrb[0].mxu0
      %v2386 = vpop.f32.mrb[0].mxu0
      %2387 = vmatprep.mubr.f32.mxu0 0.0
      %2388 = vmatmul.mubr.f32.gmra.mrb[0].mxu0 %v253
      %v2389 = vpop.f32.mrb[0].mxu0
      %v2390 = vpop.f32.mrb[0].mxu0
      %2391 = vmatprep.mubr.f32.mxu0 0.0
      %2392 = vmatmul.mubr.f32.gmra.mrb[0].mxu0 %v256
      %v2393 = vpop.f32.mrb[0].mxu0
      %v2394 = vpop.f32.mrb[0].mxu0
      %2395 = vmatprep.mubr.f32.mxu0 0.0
      %2396 = vmatmul.mubr.f32.gmra.mrb[0].mxu0 %v259
      %v2397 = vpop.f32.mrb[0].mxu0
      %v2398 = vpop.f32.mrb[0].mxu0
      %2399 = vmatprep.mubr.f32.mxu0 0.0
      %2400 = vmatmul.mubr.f32.gmra.mrb[0].mxu0 %v262
      %v2401 = vpop.f32.mrb[0].mxu0
      %v2402 = vadd.f32 0.0, %v2401
      %v2403 = vpop.f32.mrb[0].mxu0
      %2404 = vmatprep.mubr.f32.mxu0 0.0
      %2405 = vmatmul.mubr.f32.gmra.mrb[0].mxu0 %v265
      %v2406 = vpop.f32.mrb[0].mxu0
      %v2407 = vadd.f32 0.0, %v2406
      %v2408 = vpop.f32.mrb[0].mxu0
      %2409 = vmatprep.mubr.f32.mxu0 0.0
      %2410 = vmatmul.mubr.f32.gmra.mrb[0].mxu0 %v268
      %v2411 = vpop.f32.mrb[0].mxu0
      %v2412 = vadd.f32 0.0, %v2411
      %v2413 = vpop.f32.mrb[0].mxu0
      %2414 = vmatprep.mubr.f32.mxu0 0.0
      %2415 = vmatmul.mubr.f32.gmra.mrb[0].mxu0 %v271
      %v2416 = vpop.f32.mrb[0].mxu0
      %v2417 = vadd.f32 0.0, %v2416
      %v2418 = vpop.f32.mrb[0].mxu0
      %2419 = vmatprep.mubr.f32.mxu0 0.0
      %2420 = vmatmul.mubr.f32.gmra.mrb[0].mxu0 %v274
      %v2421 = vpop.f32.mrb[0].mxu0
      %v2422 = vadd.f32 0.0, %v2421
      %v2423 = vpop.f32.mrb[0].mxu0
      %2424 = vmatprep.mubr.f32.mxu0 0.0
      %2425 = vmatmul.mubr.f32.gmra.mrb[0].mxu0 %v277
      %v2426 = vpop.f32.mrb[0].mxu0
      %v2427 = vadd.f32 0.0, %v2426
      %v2428 = vpop.f32.mrb[0].mxu0
      %2429 = vmatprep.mubr.f32.mxu0 0.0
      %2430 = vmatmul.mubr.f32.gmra.mrb[0].mxu0 %v280
      %v2431 = vpop.f32.mrb[0].mxu0
      %v2432 = vadd.f32 0.0, %v2431
      %v2433 = vpop.f32.mrb[0].mxu0
      %2434 = vmatprep.mubr.f32.mxu0 0.0
      %2435 = vmatmul.mubr.f32.gmra.mrb[0].mxu0 %v283
      %v2436 = vpop.f32.mrb[0].mxu0
      %v2437 = vadd.f32 0.0, %v2436
      %v2438 = vpop.f32.mrb[0].mxu0
      %2439 = vmatprep.mubr.f32.mxu0 0.0
      %2440 = vmatmul.mubr.f32.gmra.mrb[0].mxu0 %v286
      %v2441 = vpop.f32.mrb[0].mxu0
      %v2442 = vadd.f32 0.0, %v2441
      %v2443 = vpop.f32.mrb[0].mxu0
      %2444 = vmatprep.mubr.f32.mxu0 0.0
      %2445 = vmatmul.mubr.f32.gmra.mrb[0].mxu0 %v289
      %v2446 = vpop.f32.mrb[0].mxu0
      %v2447 = vadd.f32 0.0, %v2446
      %v2448 = vpop.f32.mrb[0].mxu0
      %2449 = vmatprep.mubr.f32.mxu0 0.0
      %2450 = vmatmul.mubr.f32.gmra.mrb[0].mxu0 %v292
      %v2451 = vpop.f32.mrb[0].mxu0
      %v2452 = vadd.f32 0.0, %v2451
      %v2453 = vpop.f32.mrb[0].mxu0
      %2454 = vmatprep.mubr.f32.mxu0 0.0
      %2455 = vmatmul.mubr.f32.gmra.mrb[0].mxu0 %v295
      %v2456 = vpop.f32.mrb[0].mxu0
      %v2457 = vadd.f32 0.0, %v2456
      %v2458 = vpop.f32.mrb[0].mxu0
      %2459 = vmatprep.mubr.f32.mxu0 0.0
      %2460 = vmatmul.mubr.f32.gmra.mrb[0].mxu0 %v298
      %v2461 = vpop.f32.mrb[0].mxu0
      %v2462 = vadd.f32 0.0, %v2461
      %v2463 = vpop.f32.mrb[0].mxu0
      %2464 = vmatprep.mubr.f32.mxu0 0.0
      %2465 = vmatmul.mubr.f32.gmra.mrb[0].mxu0 %v301
      %v2466 = vpop.f32.mrb[0].mxu0
      %v2467 = vadd.f32 0.0, %v2466
      %v2468 = vpop.f32.mrb[0].mxu0
      %2469 = vmatprep.mubr.f32.mxu0 0.0
      %2470 = vmatmul.mubr.f32.gmra.mrb[0].mxu0 %v304
      %v2471 = vpop.f32.mrb[0].mxu0
      %v2472 = vadd.f32 0.0, %v2471
      %v2473 = vpop.f32.mrb[0].mxu0
      %2474 = vmatprep.mubr.f32.mxu0 0.0
      %2475 = vmatmul.mubr.f32.gmra.mrb[0].mxu0 %v307
      %v2476 = vpop.f32.mrb[0].mxu0
      %v2477 = vadd.f32 0.0, %v2476
      %v2478 = vpop.f32.mrb[0].mxu0
      %2479 = vmatprep.mubr.f32.mxu0 0.0
      %2480 = vmatmul.mubr.f32.gmra.mrb[0].mxu0 %v310
      %v2481 = vpop.f32.mrb[0].mxu0
      %v2482 = vadd.f32 0.0, %v2481
      %v2483 = vpop.f32.mrb[0].mxu0
      %2484 = vmatprep.mubr.f32.mxu0 0.0
      %2485 = vmatmul.mubr.f32.gmra.mrb[0].mxu0 %v313
      %v2486 = vpop.f32.mrb[0].mxu0
      %v2487 = vadd.f32 0.0, %v2486
      %v2488 = vpop.f32.mrb[0].mxu0
      %2489 = vmatprep.mubr.f32.mxu0 0.0
      %2490 = vmatmul.mubr.f32.gmra.mrb[0].mxu0 %v316
      %v2491 = vpop.f32.mrb[0].mxu0
      %v2492 = vadd.f32 0.0, %v2491
      %v2493 = vpop.f32.mrb[0].mxu0
      %2494 = vmatprep.mubr.f32.mxu0 0.0
      %2495 = vmatmul.mubr.f32.gmra.mrb[0].mxu0 %v319
      %v2496 = vpop.f32.mrb[0].mxu0
      %v2497 = vadd.f32 0.0, %v2496
      %v2498 = vpop.f32.mrb[0].mxu0
      %2499 = vmatprep.mubr.f32.mxu0 0.0
      %2500 = vmatmul.mubr.f32.gmra.mrb[0].mxu0 %v322
      %v2501 = vpop.f32.mrb[0].mxu0
      %v2502 = vadd.f32 0.0, %v2501
      %v2503 = vpop.f32.mrb[0].mxu0
      %2504 = vmatprep.mubr.f32.mxu0 0.0
      %2505 = vmatmul.mubr.f32.gmra.mrb[0].mxu0 %v325
      %v2506 = vpop.f32.mrb[0].mxu0
      %v2507 = vadd.f32 0.0, %v2506
      %v2508 = vpop.f32.mrb[0].mxu0
      %2509 = vmatprep.mubr.f32.mxu0 0.0
      %2510 = vmatmul.mubr.f32.gmra.mrb[0].mxu0 %v328
      %v2511 = vpop.f32.mrb[0].mxu0
      %v2512 = vadd.f32 0.0, %v2511
      %v2513 = vpop.f32.mrb[0].mxu0
      %2514 = vmatprep.mubr.f32.mxu0 0.0
      %2515 = vmatmul.mubr.f32.gmra.mrb[0].mxu0 %v331
      %v2516 = vpop.f32.mrb[0].mxu0
      %v2517 = vadd.f32 0.0, %v2516
      %v2518 = vpop.f32.mrb[0].mxu0
      %2519 = vmatprep.mubr.f32.mxu0 0.0
      %2520 = vmatmul.mubr.f32.gmra.mrb[0].mxu0 %v334
      %v2521 = vpop.f32.mrb[0].mxu0
      %v2522 = vadd.f32 0.0, %v2521
      %v2523 = vpop.f32.mrb[0].mxu0
      %2524 = vmatprep.mubr.f32.mxu0 0.0
      %2525 = vmatmul.mubr.f32.gmra.mrb[0].mxu0 %v337
      %v2526 = vpop.f32.mrb[0].mxu0
      %v2527 = vadd.f32 0.0, %v2526
      %v2528 = vpop.f32.mrb[0].mxu0
      %2529 = vmatprep.mubr.f32.mxu0 0.0
      %2530 = vmatmul.mubr.f32.gmra.mrb[0].mxu0 %v340
      %v2531 = vpop.f32.mrb[0].mxu0
      %v2532 = vadd.f32 0.0, %v2531
      %v2533 = vpop.f32.mrb[0].mxu0
      %2534 = vmatprep.mubr.f32.mxu0 0.0
      %2535 = vmatmul.mubr.f32.gmra.mrb[0].mxu0 %v343
      %v2536 = vpop.f32.mrb[0].mxu0
      %v2537 = vadd.f32 0.0, %v2536
      %v2538 = vpop.f32.mrb[0].mxu0
      %2539 = vdwg.mxu0
      %v2540 = vadd.f32 %v2286, %v2402
      %v2541 = vadd.f32 %v2287, %v2407
      %v2542 = vadd.f32 %v2288, %v2412
      %v2543 = vadd.f32 %v2289, %v2417
      %v2544 = vadd.f32 %v2290, %v2422
      %v2545 = vadd.f32 %v2291, %v2427
      %v2546 = vadd.f32 %v2292, %v2432
      %v2547 = vadd.f32 %v2293, %v2437
      %v2548 = vadd.f32 %v2294, %v2442
      %v2549 = vadd.f32 %v2295, %v2447
      %v2550 = vadd.f32 %v2296, %v2452
      %v2551 = vadd.f32 %v2297, %v2457
      %v2552 = vadd.f32 %v2298, %v2462
      %v2553 = vadd.f32 %v2299, %v2467
      %v2554 = vadd.f32 %v2300, %v2472
      %v2555 = vadd.f32 %v2301, %v2477
      %v2556 = vadd.f32 %v2302, %v2482
      %v2557 = vadd.f32 %v2303, %v2487
      %v2558 = vadd.f32 %v2304, %v2492
      %v2559 = vadd.f32 %v2305, %v2497
      %v2560 = vadd.f32 %v2306, %v2502
      %v2561 = vadd.f32 %v2307, %v2507
      %v2562 = vadd.f32 %v2308, %v2512
      %v2563 = vadd.f32 %v2309, %v2517
      %v2564 = vadd.f32 %v2310, %v2522
      %v2565 = vadd.f32 %v2311, %v2527
      %v2566 = vadd.f32 %v2312, %v2532
      %v2567 = vadd.f32 %v2313, %v2537
      %s2568 = scalar_lea.vmem %s1, 28
      %v2569 = vld [vmem:[%s2568] sm:$0xf]
      %v2571 = vsel %vm345, %v2569, 0
      %2573 = vmatprep.subr.mxu0 0.0
      %2574 = vmatpush1.msra.mxu0 %v2571
      %2575 = vmatprep.subr.mxu0 0.0
      %2576 = vmatpush1.msra.mxu0 0.0
      %2577 = vmatprep.subr.mxu0 0.0
      %2578 = vmatpush1.msra.mxu0 0.0
      %2579 = vmatprep.subr.mxu0 0.0
      %2580 = vmatpush1.msra.mxu0 0.0
      %2581 = vmatprep.subr.mxu0 0.0
      %2582 = vmatpush1.msra.mxu0 0.0
      %2583 = vmatprep.subr.mxu0 0.0
      %2584 = vmatpush1.msra.mxu0 0.0
      %2585 = vmatprep.subr.mxu0 0.0
      %2586 = vmatpush1.msra.mxu0 0.0
      %2587 = vmatprep.subr.mxu0 0.0
      %2588 = vmatpush1.msra.mxu0 0.0
      %2589 = vmatprep.subr.mxu0 0.0
      %2590 = vmatpush1.msra.mxu0 0.0
      %2591 = vmatprep.subr.mxu0 0.0
      %2592 = vmatpush1.msra.mxu0 0.0
      %2593 = vmatprep.subr.mxu0 0.0
      %2594 = vmatpush1.msra.mxu0 0.0
      %2595 = vmatprep.subr.mxu0 0.0
      %2596 = vmatpush1.msra.mxu0 0.0
      %2597 = vmatprep.subr.mxu0 0.0
      %2598 = vmatpush1.msra.mxu0 0.0
      %2599 = vmatprep.subr.mxu0 0.0
      %2600 = vmatpush1.msra.mxu0 0.0
      %2601 = vmatprep.subr.mxu0 0.0
      %2602 = vmatpush1.msra.mxu0 0.0
      %2603 = vmatprep.subr.mxu0 0.0
      %2604 = vmatpush1.msra.mxu0 0.0
      %2605 = vmatprep.subr.mxu0 0.0
      %2606 = vmatpush1.msra.mxu0 0.0
      %2607 = vmatprep.subr.mxu0 0.0
      %2608 = vmatpush1.msra.mxu0 0.0
      %2609 = vmatprep.subr.mxu0 0.0
      %2610 = vmatpush1.msra.mxu0 0.0
      %2611 = vmatprep.subr.mxu0 0.0
      %2612 = vmatpush1.msra.mxu0 0.0
      %2613 = vmatprep.subr.mxu0 0.0
      %2614 = vmatpush1.msra.mxu0 0.0
      %2615 = vmatprep.subr.mxu0 0.0
      %2616 = vmatpush1.msra.mxu0 0.0
      %2617 = vmatprep.subr.mxu0 0.0
      %2618 = vmatpush1.msra.mxu0 0.0
      %2619 = vmatprep.subr.mxu0 0.0
      %2620 = vmatpush1.msra.mxu0 0.0
      %2621 = vmatprep.subr.mxu0 0.0
      %2622 = vmatpush1.msra.mxu0 0.0
      %2623 = vmatprep.subr.mxu0 0.0
      %2624 = vmatpush1.msra.mxu0 0.0
      %2625 = vmatprep.subr.mxu0 0.0
      %2626 = vmatpush1.msra.mxu0 0.0
      %2627 = vmatprep.subr.mxu0 0.0
      %2628 = vmatpush1.msra.mxu0 0.0
      %2629 = vmatprep.subr.mxu0 0.0
      %2630 = vmatpush1.msra.mxu0 0.0
      %2631 = vmatprep.subr.mxu0 0.0
      %2632 = vmatpush1.msra.mxu0 0.0
      %2633 = vmatprep.subr.mxu0 0.0
      %2634 = vmatpush1.msra.mxu0 0.0
      %2635 = vmatprep.subr.mxu0 0.0
      %2636 = vmatpush1.msra.mxu0 0.0
      %2637 = vmatprep.mubr.f32.mxu0 0.0
      %2638 = vmatmul.mubr.f32.gmra.mrb[0].mxu0 %v250
      %v2639 = vpop.f32.mrb[0].mxu0
      %v2640 = vpop.f32.mrb[0].mxu0
      %2641 = vmatprep.mubr.f32.mxu0 0.0
      %2642 = vmatmul.mubr.f32.gmra.mrb[0].mxu0 %v253
      %v2643 = vpop.f32.mrb[0].mxu0
      %v2644 = vpop.f32.mrb[0].mxu0
      %2645 = vmatprep.mubr.f32.mxu0 0.0
      %2646 = vmatmul.mubr.f32.gmra.mrb[0].mxu0 %v256
      %v2647 = vpop.f32.mrb[0].mxu0
      %v2648 = vpop.f32.mrb[0].mxu0
      %2649 = vmatprep.mubr.f32.mxu0 0.0
      %2650 = vmatmul.mubr.f32.gmra.mrb[0].mxu0 %v259
      %v2651 = vpop.f32.mrb[0].mxu0
      %v2652 = vpop.f32.mrb[0].mxu0
      %2653 = vmatprep.mubr.f32.mxu0 0.0
      %2654 = vmatmul.mubr.f32.gmra.mrb[0].mxu0 %v262
      %v2655 = vpop.f32.mrb[0].mxu0
      %v2656 = vadd.f32 0.0, %v2655
      %v2657 = vpop.f32.mrb[0].mxu0
      %2658 = vmatprep.mubr.f32.mxu0 0.0
      %2659 = vmatmul.mubr.f32.gmra.mrb[0].mxu0 %v265
      %v2660 = vpop.f32.mrb[0].mxu0
      %v2661 = vadd.f32 0.0, %v2660
      %v2662 = vpop.f32.mrb[0].mxu0
      %2663 = vmatprep.mubr.f32.mxu0 0.0
      %2664 = vmatmul.mubr.f32.gmra.mrb[0].mxu0 %v268
      %v2665 = vpop.f32.mrb[0].mxu0
      %v2666 = vadd.f32 0.0, %v2665
      %v2667 = vpop.f32.mrb[0].mxu0
      %2668 = vmatprep.mubr.f32.mxu0 0.0
      %2669 = vmatmul.mubr.f32.gmra.mrb[0].mxu0 %v271
      %v2670 = vpop.f32.mrb[0].mxu0
      %v2671 = vadd.f32 0.0, %v2670
      %v2672 = vpop.f32.mrb[0].mxu0
      %2673 = vmatprep.mubr.f32.mxu0 0.0
      %2674 = vmatmul.mubr.f32.gmra.mrb[0].mxu0 %v274
      %v2675 = vpop.f32.mrb[0].mxu0
      %v2676 = vadd.f32 0.0, %v2675
      %v2677 = vpop.f32.mrb[0].mxu0
      %2678 = vmatprep.mubr.f32.mxu0 0.0
      %2679 = vmatmul.mubr.f32.gmra.mrb[0].mxu0 %v277
      %v2680 = vpop.f32.mrb[0].mxu0
      %v2681 = vadd.f32 0.0, %v2680
      %v2682 = vpop.f32.mrb[0].mxu0
      %2683 = vmatprep.mubr.f32.mxu0 0.0
      %2684 = vmatmul.mubr.f32.gmra.mrb[0].mxu0 %v280
      %v2685 = vpop.f32.mrb[0].mxu0
      %v2686 = vadd.f32 0.0, %v2685
      %v2687 = vpop.f32.mrb[0].mxu0
      %2688 = vmatprep.mubr.f32.mxu0 0.0
      %2689 = vmatmul.mubr.f32.gmra.mrb[0].mxu0 %v283
      %v2690 = vpop.f32.mrb[0].mxu0
      %v2691 = vadd.f32 0.0, %v2690
      %v2692 = vpop.f32.mrb[0].mxu0
      %2693 = vmatprep.mubr.f32.mxu0 0.0
      %2694 = vmatmul.mubr.f32.gmra.mrb[0].mxu0 %v286
      %v2695 = vpop.f32.mrb[0].mxu0
      %v2696 = vadd.f32 0.0, %v2695
      %v2697 = vpop.f32.mrb[0].mxu0
      %2698 = vmatprep.mubr.f32.mxu0 0.0
      %2699 = vmatmul.mubr.f32.gmra.mrb[0].mxu0 %v289
      %v2700 = vpop.f32.mrb[0].mxu0
      %v2701 = vadd.f32 0.0, %v2700
      %v2702 = vpop.f32.mrb[0].mxu0
      %2703 = vmatprep.mubr.f32.mxu0 0.0
      %2704 = vmatmul.mubr.f32.gmra.mrb[0].mxu0 %v292
      %v2705 = vpop.f32.mrb[0].mxu0
      %v2706 = vadd.f32 0.0, %v2705
      %v2707 = vpop.f32.mrb[0].mxu0
      %2708 = vmatprep.mubr.f32.mxu0 0.0
      %2709 = vmatmul.mubr.f32.gmra.mrb[0].mxu0 %v295
      %v2710 = vpop.f32.mrb[0].mxu0
      %v2711 = vadd.f32 0.0, %v2710
      %v2712 = vpop.f32.mrb[0].mxu0
      %2713 = vmatprep.mubr.f32.mxu0 0.0
      %2714 = vmatmul.mubr.f32.gmra.mrb[0].mxu0 %v298
      %v2715 = vpop.f32.mrb[0].mxu0
      %v2716 = vadd.f32 0.0, %v2715
      %v2717 = vpop.f32.mrb[0].mxu0
      %2718 = vmatprep.mubr.f32.mxu0 0.0
      %2719 = vmatmul.mubr.f32.gmra.mrb[0].mxu0 %v301
      %v2720 = vpop.f32.mrb[0].mxu0
      %v2721 = vadd.f32 0.0, %v2720
      %v2722 = vpop.f32.mrb[0].mxu0
      %2723 = vmatprep.mubr.f32.mxu0 0.0
      %2724 = vmatmul.mubr.f32.gmra.mrb[0].mxu0 %v304
      %v2725 = vpop.f32.mrb[0].mxu0
      %v2726 = vadd.f32 0.0, %v2725
      %v2727 = vpop.f32.mrb[0].mxu0
      %2728 = vmatprep.mubr.f32.mxu0 0.0
      %2729 = vmatmul.mubr.f32.gmra.mrb[0].mxu0 %v307
      %v2730 = vpop.f32.mrb[0].mxu0
      %v2731 = vadd.f32 0.0, %v2730
      %v2732 = vpop.f32.mrb[0].mxu0
      %2733 = vmatprep.mubr.f32.mxu0 0.0
      %2734 = vmatmul.mubr.f32.gmra.mrb[0].mxu0 %v310
      %v2735 = vpop.f32.mrb[0].mxu0
      %v2736 = vadd.f32 0.0, %v2735
      %v2737 = vpop.f32.mrb[0].mxu0
      %2738 = vmatprep.mubr.f32.mxu0 0.0
      %2739 = vmatmul.mubr.f32.gmra.mrb[0].mxu0 %v313
      %v2740 = vpop.f32.mrb[0].mxu0
      %v2741 = vadd.f32 0.0, %v2740
      %v2742 = vpop.f32.mrb[0].mxu0
      %2743 = vmatprep.mubr.f32.mxu0 0.0
      %2744 = vmatmul.mubr.f32.gmra.mrb[0].mxu0 %v316
      %v2745 = vpop.f32.mrb[0].mxu0
      %v2746 = vadd.f32 0.0, %v2745
      %v2747 = vpop.f32.mrb[0].mxu0
      %2748 = vmatprep.mubr.f32.mxu0 0.0
      %2749 = vmatmul.mubr.f32.gmra.mrb[0].mxu0 %v319
      %v2750 = vpop.f32.mrb[0].mxu0
      %v2751 = vadd.f32 0.0, %v2750
      %v2752 = vpop.f32.mrb[0].mxu0
      %2753 = vmatprep.mubr.f32.mxu0 0.0
      %2754 = vmatmul.mubr.f32.gmra.mrb[0].mxu0 %v322
      %v2755 = vpop.f32.mrb[0].mxu0
      %v2756 = vadd.f32 0.0, %v2755
      %v2757 = vpop.f32.mrb[0].mxu0
      %2758 = vmatprep.mubr.f32.mxu0 0.0
      %2759 = vmatmul.mubr.f32.gmra.mrb[0].mxu0 %v325
      %v2760 = vpop.f32.mrb[0].mxu0
      %v2761 = vadd.f32 0.0, %v2760
      %v2762 = vpop.f32.mrb[0].mxu0
      %2763 = vmatprep.mubr.f32.mxu0 0.0
      %2764 = vmatmul.mubr.f32.gmra.mrb[0].mxu0 %v328
      %v2765 = vpop.f32.mrb[0].mxu0
      %v2766 = vadd.f32 0.0, %v2765
      %v2767 = vpop.f32.mrb[0].mxu0
      %2768 = vmatprep.mubr.f32.mxu0 0.0
      %2769 = vmatmul.mubr.f32.gmra.mrb[0].mxu0 %v331
      %v2770 = vpop.f32.mrb[0].mxu0
      %v2771 = vadd.f32 0.0, %v2770
      %v2772 = vpop.f32.mrb[0].mxu0
      %2773 = vmatprep.mubr.f32.mxu0 0.0
      %2774 = vmatmul.mubr.f32.gmra.mrb[0].mxu0 %v334
      %v2775 = vpop.f32.mrb[0].mxu0
      %v2776 = vadd.f32 0.0, %v2775
      %v2777 = vpop.f32.mrb[0].mxu0
      %2778 = vmatprep.mubr.f32.mxu0 0.0
      %2779 = vmatmul.mubr.f32.gmra.mrb[0].mxu0 %v337
      %v2780 = vpop.f32.mrb[0].mxu0
      %v2781 = vadd.f32 0.0, %v2780
      %v2782 = vpop.f32.mrb[0].mxu0
      %2783 = vmatprep.mubr.f32.mxu0 0.0
      %2784 = vmatmul.mubr.f32.gmra.mrb[0].mxu0 %v340
      %v2785 = vpop.f32.mrb[0].mxu0
      %v2786 = vadd.f32 0.0, %v2785
      %v2787 = vpop.f32.mrb[0].mxu0
      %2788 = vmatprep.mubr.f32.mxu0 0.0
      %2789 = vmatmul.mubr.f32.gmra.mrb[0].mxu0 %v343
      %v2790 = vpop.f32.mrb[0].mxu0
      %v2791 = vadd.f32 0.0, %v2790
      %v2792 = vpop.f32.mrb[0].mxu0
      %2793 = vdwg.mxu0
      %v2822 = vrot.slane %v2656, 1
      %v2823 = vrot.slane %v2661, 1
      %v2824 = vsel %vm852, %v2822, %v2823
      %v2825 = vrot.slane %v2666, 1
      %v2826 = vsel %vm852, %v2823, %v2825
      %v2827 = vrot.slane %v2671, 1
      %v2828 = vsel %vm852, %v2825, %v2827
      %v2829 = vrot.slane %v2676, 1
      %v2830 = vsel %vm852, %v2827, %v2829
      %v2831 = vrot.slane %v2681, 1
      %v2832 = vsel %vm852, %v2829, %v2831
      %v2833 = vrot.slane %v2686, 1
      %v2834 = vsel %vm852, %v2831, %v2833
      %v2835 = vrot.slane %v2691, 1
      %v2836 = vsel %vm852, %v2833, %v2835
      %v2837 = vrot.slane %v2696, 1
      %v2838 = vsel %vm852, %v2835, %v2837
      %v2839 = vrot.slane %v2701, 1
      %v2840 = vsel %vm852, %v2837, %v2839
      %v2841 = vrot.slane %v2706, 1
      %v2842 = vsel %vm852, %v2839, %v2841
      %v2843 = vrot.slane %v2711, 1
      %v2844 = vsel %vm852, %v2841, %v2843
      %v2845 = vrot.slane %v2716, 1
      %v2846 = vsel %vm852, %v2843, %v2845
      %v2847 = vrot.slane %v2721, 1
      %v2848 = vsel %vm852, %v2845, %v2847
      %v2849 = vrot.slane %v2726, 1
      %v2850 = vsel %vm852, %v2847, %v2849
      %v2851 = vrot.slane %v2731, 1
      %v2852 = vsel %vm852, %v2849, %v2851
      %v2853 = vrot.slane %v2736, 1
      %v2854 = vsel %vm852, %v2851, %v2853
      %v2855 = vrot.slane %v2741, 1
      %v2856 = vsel %vm852, %v2853, %v2855
      %v2857 = vrot.slane %v2746, 1
      %v2858 = vsel %vm852, %v2855, %v2857
      %v2859 = vrot.slane %v2751, 1
      %v2860 = vsel %vm852, %v2857, %v2859
      %v2861 = vrot.slane %v2756, 1
      %v2862 = vsel %vm852, %v2859, %v2861
      %v2863 = vrot.slane %v2761, 1
      %v2864 = vsel %vm852, %v2861, %v2863
      %v2865 = vrot.slane %v2766, 1
      %v2866 = vsel %vm852, %v2863, %v2865
      %v2867 = vrot.slane %v2771, 1
      %v2868 = vsel %vm852, %v2865, %v2867
      %v2869 = vrot.slane %v2776, 1
      %v2870 = vsel %vm852, %v2867, %v2869
      %v2871 = vrot.slane %v2781, 1
      %v2872 = vsel %vm852, %v2869, %v2871
      %v2873 = vrot.slane %v2786, 1
      %v2874 = vsel %vm852, %v2871, %v2873
      %v2875 = vrot.slane %v2791, 1
      %v2876 = vsel %vm852, %v2873, %v2875
      %v2905 = vadd.f32 %v2540, %v2824
      %v2906 = vadd.f32 %v2541, %v2826
      %v2907 = vadd.f32 %v2542, %v2828
      %v2908 = vadd.f32 %v2543, %v2830
      %v2909 = vadd.f32 %v2544, %v2832
      %v2910 = vadd.f32 %v2545, %v2834
      %v2911 = vadd.f32 %v2546, %v2836
      %v2912 = vadd.f32 %v2547, %v2838
      %v2913 = vadd.f32 %v2548, %v2840
      %v2914 = vadd.f32 %v2549, %v2842
      %v2915 = vadd.f32 %v2550, %v2844
      %v2916 = vadd.f32 %v2551, %v2846
      %v2917 = vadd.f32 %v2552, %v2848
      %v2918 = vadd.f32 %v2553, %v2850
      %v2919 = vadd.f32 %v2554, %v2852
      %v2920 = vadd.f32 %v2555, %v2854
      %v2921 = vadd.f32 %v2556, %v2856
      %v2922 = vadd.f32 %v2557, %v2858
      %v2923 = vadd.f32 %v2558, %v2860
      %v2924 = vadd.f32 %v2559, %v2862
      %v2925 = vadd.f32 %v2560, %v2864
      %v2926 = vadd.f32 %v2561, %v2866
      %v2927 = vadd.f32 %v2562, %v2868
      %v2928 = vadd.f32 %v2563, %v2870
      %v2929 = vadd.f32 %v2564, %v2872
      %v2930 = vadd.f32 %v2565, %v2874
      %v2931 = vadd.f32 %v2566, %v2876
      %v2932 = vadd.f32 %v2567, %v2875
      %s2933 = scalar_lea.vmem %s1, 32
      %v2934 = vld [vmem:[%s2933] sm:$0xf]
      %v2936 = vsel %vm345, %v2934, 0
      %2938 = vmatprep.subr.mxu0 0.0
      %2939 = vmatpush1.msra.mxu0 %v2936
      %2940 = vmatprep.subr.mxu0 0.0
      %2941 = vmatpush1.msra.mxu0 0.0
      %2942 = vmatprep.subr.mxu0 0.0
      %2943 = vmatpush1.msra.mxu0 0.0
      %2944 = vmatprep.subr.mxu0 0.0
      %2945 = vmatpush1.msra.mxu0 0.0
      %2946 = vmatprep.subr.mxu0 0.0
      %2947 = vmatpush1.msra.mxu0 0.0
      %2948 = vmatprep.subr.mxu0 0.0
      %2949 = vmatpush1.msra.mxu0 0.0
      %2950 = vmatprep.subr.mxu0 0.0
      %2951 = vmatpush1.msra.mxu0 0.0
      %2952 = vmatprep.subr.mxu0 0.0
      %2953 = vmatpush1.msra.mxu0 0.0
      %2954 = vmatprep.subr.mxu0 0.0
      %2955 = vmatpush1.msra.mxu0 0.0
      %2956 = vmatprep.subr.mxu0 0.0
      %2957 = vmatpush1.msra.mxu0 0.0
      %2958 = vmatprep.subr.mxu0 0.0
      %2959 = vmatpush1.msra.mxu0 0.0
      %2960 = vmatprep.subr.mxu0 0.0
      %2961 = vmatpush1.msra.mxu0 0.0
      %2962 = vmatprep.subr.mxu0 0.0
      %2963 = vmatpush1.msra.mxu0 0.0
      %2964 = vmatprep.subr.mxu0 0.0
      %2965 = vmatpush1.msra.mxu0 0.0
      %2966 = vmatprep.subr.mxu0 0.0
      %2967 = vmatpush1.msra.mxu0 0.0
      %2968 = vmatprep.subr.mxu0 0.0
      %2969 = vmatpush1.msra.mxu0 0.0
      %2970 = vmatprep.subr.mxu0 0.0
      %2971 = vmatpush1.msra.mxu0 0.0
      %2972 = vmatprep.subr.mxu0 0.0
      %2973 = vmatpush1.msra.mxu0 0.0
      %2974 = vmatprep.subr.mxu0 0.0
      %2975 = vmatpush1.msra.mxu0 0.0
      %2976 = vmatprep.subr.mxu0 0.0
      %2977 = vmatpush1.msra.mxu0 0.0
      %2978 = vmatprep.subr.mxu0 0.0
      %2979 = vmatpush1.msra.mxu0 0.0
      %2980 = vmatprep.subr.mxu0 0.0
      %2981 = vmatpush1.msra.mxu0 0.0
      %2982 = vmatprep.subr.mxu0 0.0
      %2983 = vmatpush1.msra.mxu0 0.0
      %2984 = vmatprep.subr.mxu0 0.0
      %2985 = vmatpush1.msra.mxu0 0.0
      %2986 = vmatprep.subr.mxu0 0.0
      %2987 = vmatpush1.msra.mxu0 0.0
      %2988 = vmatprep.subr.mxu0 0.0
      %2989 = vmatpush1.msra.mxu0 0.0
      %2990 = vmatprep.subr.mxu0 0.0
      %2991 = vmatpush1.msra.mxu0 0.0
      %2992 = vmatprep.subr.mxu0 0.0
      %2993 = vmatpush1.msra.mxu0 0.0
      %2994 = vmatprep.subr.mxu0 0.0
      %2995 = vmatpush1.msra.mxu0 0.0
      %2996 = vmatprep.subr.mxu0 0.0
      %2997 = vmatpush1.msra.mxu0 0.0
      %2998 = vmatprep.subr.mxu0 0.0
      %2999 = vmatpush1.msra.mxu0 0.0
      %3000 = vmatprep.subr.mxu0 0.0
      %3001 = vmatpush1.msra.mxu0 0.0
      %3002 = vmatprep.mubr.f32.mxu0 0.0
      %3003 = vmatmul.mubr.f32.gmra.mrb[0].mxu0 %v250
      %v3004 = vpop.f32.mrb[0].mxu0
      %v3005 = vpop.f32.mrb[0].mxu0
      %3006 = vmatprep.mubr.f32.mxu0 0.0
      %3007 = vmatmul.mubr.f32.gmra.mrb[0].mxu0 %v253
      %v3008 = vpop.f32.mrb[0].mxu0
      %v3009 = vpop.f32.mrb[0].mxu0
      %3010 = vmatprep.mubr.f32.mxu0 0.0
      %3011 = vmatmul.mubr.f32.gmra.mrb[0].mxu0 %v256
      %v3012 = vpop.f32.mrb[0].mxu0
      %v3013 = vpop.f32.mrb[0].mxu0
      %3014 = vmatprep.mubr.f32.mxu0 0.0
      %3015 = vmatmul.mubr.f32.gmra.mrb[0].mxu0 %v259
      %v3016 = vpop.f32.mrb[0].mxu0
      %v3017 = vpop.f32.mrb[0].mxu0
      %3018 = vmatprep.mubr.f32.mxu0 0.0
      %3019 = vmatmul.mubr.f32.gmra.mrb[0].mxu0 %v262
      %v3020 = vpop.f32.mrb[0].mxu0
      %v3021 = vadd.f32 0.0, %v3020
      %v3022 = vpop.f32.mrb[0].mxu0
      %3023 = vmatprep.mubr.f32.mxu0 0.0
      %3024 = vmatmul.mubr.f32.gmra.mrb[0].mxu0 %v265
      %v3025 = vpop.f32.mrb[0].mxu0
      %v3026 = vadd.f32 0.0, %v3025
      %v3027 = vpop.f32.mrb[0].mxu0
      %3028 = vmatprep.mubr.f32.mxu0 0.0
      %3029 = vmatmul.mubr.f32.gmra.mrb[0].mxu0 %v268
      %v3030 = vpop.f32.mrb[0].mxu0
      %v3031 = vadd.f32 0.0, %v3030
      %v3032 = vpop.f32.mrb[0].mxu0
      %3033 = vmatprep.mubr.f32.mxu0 0.0
      %3034 = vmatmul.mubr.f32.gmra.mrb[0].mxu0 %v271
      %v3035 = vpop.f32.mrb[0].mxu0
      %v3036 = vadd.f32 0.0, %v3035
      %v3037 = vpop.f32.mrb[0].mxu0
      %3038 = vmatprep.mubr.f32.mxu0 0.0
      %3039 = vmatmul.mubr.f32.gmra.mrb[0].mxu0 %v274
      %v3040 = vpop.f32.mrb[0].mxu0
      %v3041 = vadd.f32 0.0, %v3040
      %v3042 = vpop.f32.mrb[0].mxu0
      %3043 = vmatprep.mubr.f32.mxu0 0.0
      %3044 = vmatmul.mubr.f32.gmra.mrb[0].mxu0 %v277
      %v3045 = vpop.f32.mrb[0].mxu0
      %v3046 = vadd.f32 0.0, %v3045
      %v3047 = vpop.f32.mrb[0].mxu0
      %3048 = vmatprep.mubr.f32.mxu0 0.0
      %3049 = vmatmul.mubr.f32.gmra.mrb[0].mxu0 %v280
      %v3050 = vpop.f32.mrb[0].mxu0
      %v3051 = vadd.f32 0.0, %v3050
      %v3052 = vpop.f32.mrb[0].mxu0
      %3053 = vmatprep.mubr.f32.mxu0 0.0
      %3054 = vmatmul.mubr.f32.gmra.mrb[0].mxu0 %v283
      %v3055 = vpop.f32.mrb[0].mxu0
      %v3056 = vadd.f32 0.0, %v3055
      %v3057 = vpop.f32.mrb[0].mxu0
      %3058 = vmatprep.mubr.f32.mxu0 0.0
      %3059 = vmatmul.mubr.f32.gmra.mrb[0].mxu0 %v286
      %v3060 = vpop.f32.mrb[0].mxu0
      %v3061 = vadd.f32 0.0, %v3060
      %v3062 = vpop.f32.mrb[0].mxu0
      %3063 = vmatprep.mubr.f32.mxu0 0.0
      %3064 = vmatmul.mubr.f32.gmra.mrb[0].mxu0 %v289
      %v3065 = vpop.f32.mrb[0].mxu0
      %v3066 = vadd.f32 0.0, %v3065
      %v3067 = vpop.f32.mrb[0].mxu0
      %3068 = vmatprep.mubr.f32.mxu0 0.0
      %3069 = vmatmul.mubr.f32.gmra.mrb[0].mxu0 %v292
      %v3070 = vpop.f32.mrb[0].mxu0
      %v3071 = vadd.f32 0.0, %v3070
      %v3072 = vpop.f32.mrb[0].mxu0
      %3073 = vmatprep.mubr.f32.mxu0 0.0
      %3074 = vmatmul.mubr.f32.gmra.mrb[0].mxu0 %v295
      %v3075 = vpop.f32.mrb[0].mxu0
      %v3076 = vadd.f32 0.0, %v3075
      %v3077 = vpop.f32.mrb[0].mxu0
      %3078 = vmatprep.mubr.f32.mxu0 0.0
      %3079 = vmatmul.mubr.f32.gmra.mrb[0].mxu0 %v298
      %v3080 = vpop.f32.mrb[0].mxu0
      %v3081 = vadd.f32 0.0, %v3080
      %v3082 = vpop.f32.mrb[0].mxu0
      %3083 = vmatprep.mubr.f32.mxu0 0.0
      %3084 = vmatmul.mubr.f32.gmra.mrb[0].mxu0 %v301
      %v3085 = vpop.f32.mrb[0].mxu0
      %v3086 = vadd.f32 0.0, %v3085
      %v3087 = vpop.f32.mrb[0].mxu0
      %3088 = vmatprep.mubr.f32.mxu0 0.0
      %3089 = vmatmul.mubr.f32.gmra.mrb[0].mxu0 %v304
      %v3090 = vpop.f32.mrb[0].mxu0
      %v3091 = vadd.f32 0.0, %v3090
      %v3092 = vpop.f32.mrb[0].mxu0
      %3093 = vmatprep.mubr.f32.mxu0 0.0
      %3094 = vmatmul.mubr.f32.gmra.mrb[0].mxu0 %v307
      %v3095 = vpop.f32.mrb[0].mxu0
      %v3096 = vadd.f32 0.0, %v3095
      %v3097 = vpop.f32.mrb[0].mxu0
      %3098 = vmatprep.mubr.f32.mxu0 0.0
      %3099 = vmatmul.mubr.f32.gmra.mrb[0].mxu0 %v310
      %v3100 = vpop.f32.mrb[0].mxu0
      %v3101 = vadd.f32 0.0, %v3100
      %v3102 = vpop.f32.mrb[0].mxu0
      %3103 = vmatprep.mubr.f32.mxu0 0.0
      %3104 = vmatmul.mubr.f32.gmra.mrb[0].mxu0 %v313
      %v3105 = vpop.f32.mrb[0].mxu0
      %v3106 = vadd.f32 0.0, %v3105
      %v3107 = vpop.f32.mrb[0].mxu0
      %3108 = vmatprep.mubr.f32.mxu0 0.0
      %3109 = vmatmul.mubr.f32.gmra.mrb[0].mxu0 %v316
      %v3110 = vpop.f32.mrb[0].mxu0
      %v3111 = vadd.f32 0.0, %v3110
      %v3112 = vpop.f32.mrb[0].mxu0
      %3113 = vmatprep.mubr.f32.mxu0 0.0
      %3114 = vmatmul.mubr.f32.gmra.mrb[0].mxu0 %v319
      %v3115 = vpop.f32.mrb[0].mxu0
      %v3116 = vadd.f32 0.0, %v3115
      %v3117 = vpop.f32.mrb[0].mxu0
      %3118 = vmatprep.mubr.f32.mxu0 0.0
      %3119 = vmatmul.mubr.f32.gmra.mrb[0].mxu0 %v322
      %v3120 = vpop.f32.mrb[0].mxu0
      %v3121 = vadd.f32 0.0, %v3120
      %v3122 = vpop.f32.mrb[0].mxu0
      %3123 = vmatprep.mubr.f32.mxu0 0.0
      %3124 = vmatmul.mubr.f32.gmra.mrb[0].mxu0 %v325
      %v3125 = vpop.f32.mrb[0].mxu0
      %v3126 = vadd.f32 0.0, %v3125
      %v3127 = vpop.f32.mrb[0].mxu0
      %3128 = vmatprep.mubr.f32.mxu0 0.0
      %3129 = vmatmul.mubr.f32.gmra.mrb[0].mxu0 %v328
      %v3130 = vpop.f32.mrb[0].mxu0
      %v3131 = vadd.f32 0.0, %v3130
      %v3132 = vpop.f32.mrb[0].mxu0
      %3133 = vmatprep.mubr.f32.mxu0 0.0
      %3134 = vmatmul.mubr.f32.gmra.mrb[0].mxu0 %v331
      %v3135 = vpop.f32.mrb[0].mxu0
      %v3136 = vadd.f32 0.0, %v3135
      %v3137 = vpop.f32.mrb[0].mxu0
      %3138 = vmatprep.mubr.f32.mxu0 0.0
      %3139 = vmatmul.mubr.f32.gmra.mrb[0].mxu0 %v334
      %v3140 = vpop.f32.mrb[0].mxu0
      %v3141 = vadd.f32 0.0, %v3140
      %v3142 = vpop.f32.mrb[0].mxu0
      %3143 = vmatprep.mubr.f32.mxu0 0.0
      %3144 = vmatmul.mubr.f32.gmra.mrb[0].mxu0 %v337
      %v3145 = vpop.f32.mrb[0].mxu0
      %v3146 = vadd.f32 0.0, %v3145
      %v3147 = vpop.f32.mrb[0].mxu0
      %3148 = vmatprep.mubr.f32.mxu0 0.0
      %3149 = vmatmul.mubr.f32.gmra.mrb[0].mxu0 %v340
      %v3150 = vpop.f32.mrb[0].mxu0
      %v3151 = vadd.f32 0.0, %v3150
      %v3152 = vpop.f32.mrb[0].mxu0
      %3153 = vmatprep.mubr.f32.mxu0 0.0
      %3154 = vmatmul.mubr.f32.gmra.mrb[0].mxu0 %v343
      %v3155 = vpop.f32.mrb[0].mxu0
      %v3156 = vadd.f32 0.0, %v3155
      %v3157 = vpop.f32.mrb[0].mxu0
      %3158 = vdwg.mxu0
      %v3187 = vrot.slane %v3021, 2
      %v3188 = vrot.slane %v3026, 2
      %v3189 = vsel %vm1218, %v3187, %v3188
      %v3190 = vrot.slane %v3031, 2
      %v3191 = vsel %vm1218, %v3188, %v3190
      %v3192 = vrot.slane %v3036, 2
      %v3193 = vsel %vm1218, %v3190, %v3192
      %v3194 = vrot.slane %v3041, 2
      %v3195 = vsel %vm1218, %v3192, %v3194
      %v3196 = vrot.slane %v3046, 2
      %v3197 = vsel %vm1218, %v3194, %v3196
      %v3198 = vrot.slane %v3051, 2
      %v3199 = vsel %vm1218, %v3196, %v3198
      %v3200 = vrot.slane %v3056, 2
      %v3201 = vsel %vm1218, %v3198, %v3200
      %v3202 = vrot.slane %v3061, 2
      %v3203 = vsel %vm1218, %v3200, %v3202
      %v3204 = vrot.slane %v3066, 2
      %v3205 = vsel %vm1218, %v3202, %v3204
      %v3206 = vrot.slane %v3071, 2
      %v3207 = vsel %vm1218, %v3204, %v3206
      %v3208 = vrot.slane %v3076, 2
      %v3209 = vsel %vm1218, %v3206, %v3208
      %v3210 = vrot.slane %v3081, 2
      %v3211 = vsel %vm1218, %v3208, %v3210
      %v3212 = vrot.slane %v3086, 2
      %v3213 = vsel %vm1218, %v3210, %v3212
      %v3214 = vrot.slane %v3091, 2
      %v3215 = vsel %vm1218, %v3212, %v3214
      %v3216 = vrot.slane %v3096, 2
      %v3217 = vsel %vm1218, %v3214, %v3216
      %v3218 = vrot.slane %v3101, 2
      %v3219 = vsel %vm1218, %v3216, %v3218
      %v3220 = vrot.slane %v3106, 2
      %v3221 = vsel %vm1218, %v3218, %v3220
      %v3222 = vrot.slane %v3111, 2
      %v3223 = vsel %vm1218, %v3220, %v3222
      %v3224 = vrot.slane %v3116, 2
      %v3225 = vsel %vm1218, %v3222, %v3224
      %v3226 = vrot.slane %v3121, 2
      %v3227 = vsel %vm1218, %v3224, %v3226
      %v3228 = vrot.slane %v3126, 2
      %v3229 = vsel %vm1218, %v3226, %v3228
      %v3230 = vrot.slane %v3131, 2
      %v3231 = vsel %vm1218, %v3228, %v3230
      %v3232 = vrot.slane %v3136, 2
      %v3233 = vsel %vm1218, %v3230, %v3232
      %v3234 = vrot.slane %v3141, 2
      %v3235 = vsel %vm1218, %v3232, %v3234
      %v3236 = vrot.slane %v3146, 2
      %v3237 = vsel %vm1218, %v3234, %v3236
      %v3238 = vrot.slane %v3151, 2
      %v3239 = vsel %vm1218, %v3236, %v3238
      %v3240 = vrot.slane %v3156, 2
      %v3241 = vsel %vm1218, %v3238, %v3240
      %v3270 = vadd.f32 %v2905, %v3189
      %v3271 = vadd.f32 %v2906, %v3191
      %v3272 = vadd.f32 %v2907, %v3193
      %v3273 = vadd.f32 %v2908, %v3195
      %v3274 = vadd.f32 %v2909, %v3197
      %v3275 = vadd.f32 %v2910, %v3199
      %v3276 = vadd.f32 %v2911, %v3201
      %v3277 = vadd.f32 %v2912, %v3203
      %v3278 = vadd.f32 %v2913, %v3205
      %v3279 = vadd.f32 %v2914, %v3207
      %v3280 = vadd.f32 %v2915, %v3209
      %v3281 = vadd.f32 %v2916, %v3211
      %v3282 = vadd.f32 %v2917, %v3213
      %v3283 = vadd.f32 %v2918, %v3215
      %v3284 = vadd.f32 %v2919, %v3217
      %v3285 = vadd.f32 %v2920, %v3219
      %v3286 = vadd.f32 %v2921, %v3221
      %v3287 = vadd.f32 %v2922, %v3223
      %v3288 = vadd.f32 %v2923, %v3225
      %v3289 = vadd.f32 %v2924, %v3227
      %v3290 = vadd.f32 %v2925, %v3229
      %v3291 = vadd.f32 %v2926, %v3231
      %v3292 = vadd.f32 %v2927, %v3233
      %v3293 = vadd.f32 %v2928, %v3235
      %v3294 = vadd.f32 %v2929, %v3237
      %v3295 = vadd.f32 %v2930, %v3239
      %v3296 = vadd.f32 %v2931, %v3241
      %v3297 = vadd.f32 %v2932, %v3240
      %vm3298 = vcmask 64512
      %3299 = vst.msk [vmem:[%s208] sm:$0xff] %vm3298, %v3270
      %vm3300 = vcmask 62464
      %3301 = vst.msk [vmem:[%s208 + $0x8] sm:$0x3f] %vm3300, %v3271
      %v3302 = vsel %vm3298, %v3270, 0.0
      %v3303 = vsel %vm3300, %v3271, 0.0
      %v3304 = vadd.f32 %v3302, %v3303
      %v3305 = vrot.slane %v3304, 4
      %v3306 = vadd.f32 %v3304, %v3305
      %v3307 = vrot.slane %v3306, 2
      %v3308 = vadd.f32 %v3306, %v3307
      %v3309 = vrot.slane %v3308, 1
      %v3310 = vadd.f32 %v3308, %v3309
      %v3311 = vadd.f32 %v3310, 0.0
      %v3312 = vmul.f32 %v3270, %v3270
      %v3313 = vmul.f32 %v3271, %v3271
      %v3314 = vsel %vm3298, %v3312, 0.0
      %v3315 = vsel %vm3300, %v3313, 0.0
      %v3316 = vadd.f32 %v3314, %v3315
      %v3317 = vrot.slane %v3316, 4
      %v3318 = vadd.f32 %v3316, %v3317
      %v3319 = vrot.slane %v3318, 2
      %v3320 = vadd.f32 %v3318, %v3319
      %v3321 = vrot.slane %v3320, 1
      %v3322 = vadd.f32 %v3320, %v3321
      %v3323 = vadd.f32 %v3322, 0.0
      %s3324 = scalar_lea.vmem %s208, 16
      %3325 = vst.msk [vmem:[%s3324] sm:$0xff] %vm3298, %v3272
      %3326 = vst.msk [vmem:[%s3324 + $0x8] sm:$0x3f] %vm3300, %v3273
      %v3327 = vsel %vm3298, %v3272, 0.0
      %v3328 = vsel %vm3300, %v3273, 0.0
      %v3329 = vadd.f32 %v3327, %v3328
      %v3330 = vrot.slane %v3329, 4
      %v3331 = vadd.f32 %v3329, %v3330
      %v3332 = vrot.slane %v3331, 2
      %v3333 = vadd.f32 %v3331, %v3332
      %v3334 = vrot.slane %v3333, 1
      %v3335 = vadd.f32 %v3333, %v3334
      %v3336 = vadd.f32 %v3311, %v3335
      %v3337 = vmul.f32 %v3272, %v3272
      %v3338 = vmul.f32 %v3273, %v3273
      %v3339 = vsel %vm3298, %v3337, 0.0
      %v3340 = vsel %vm3300, %v3338, 0.0
      %v3341 = vadd.f32 %v3339, %v3340
      %v3342 = vrot.slane %v3341, 4
      %v3343 = vadd.f32 %v3341, %v3342
      %v3344 = vrot.slane %v3343, 2
      %v3345 = vadd.f32 %v3343, %v3344
      %v3346 = vrot.slane %v3345, 1
      %v3347 = vadd.f32 %v3345, %v3346
      %v3348 = vadd.f32 %v3323, %v3347
      %s3349 = scalar_lea.vmem %s208, 32
      %3350 = vst.msk [vmem:[%s3349] sm:$0xff] %vm3298, %v3274
      %3351 = vst.msk [vmem:[%s3349 + $0x8] sm:$0x3f] %vm3300, %v3275
      %v3352 = vsel %vm3298, %v3274, 0.0
      %v3353 = vsel %vm3300, %v3275, 0.0
      %v3354 = vadd.f32 %v3352, %v3353
      %v3355 = vrot.slane %v3354, 4
      %v3356 = vadd.f32 %v3354, %v3355
      %v3357 = vrot.slane %v3356, 2
      %v3358 = vadd.f32 %v3356, %v3357
      %v3359 = vrot.slane %v3358, 1
      %v3360 = vadd.f32 %v3358, %v3359
      %v3361 = vadd.f32 %v3336, %v3360
      %v3362 = vmul.f32 %v3274, %v3274
      %v3363 = vmul.f32 %v3275, %v3275
      %v3364 = vsel %vm3298, %v3362, 0.0
      %v3365 = vsel %vm3300, %v3363, 0.0
      %v3366 = vadd.f32 %v3364, %v3365
      %v3367 = vrot.slane %v3366, 4
      %v3368 = vadd.f32 %v3366, %v3367
      %v3369 = vrot.slane %v3368, 2
      %v3370 = vadd.f32 %v3368, %v3369
      %v3371 = vrot.slane %v3370, 1
      %v3372 = vadd.f32 %v3370, %v3371
      %v3373 = vadd.f32 %v3348, %v3372
      %s3374 = scalar_lea.vmem %s208, 48
      %3375 = vst.msk [vmem:[%s3374] sm:$0xff] %vm3298, %v3276
      %3376 = vst.msk [vmem:[%s3374 + $0x8] sm:$0x3f] %vm3300, %v3277
      %v3377 = vsel %vm3298, %v3276, 0.0
      %v3378 = vsel %vm3300, %v3277, 0.0
      %v3379 = vadd.f32 %v3377, %v3378
      %v3380 = vrot.slane %v3379, 4
      %v3381 = vadd.f32 %v3379, %v3380
      %v3382 = vrot.slane %v3381, 2
      %v3383 = vadd.f32 %v3381, %v3382
      %v3384 = vrot.slane %v3383, 1
      %v3385 = vadd.f32 %v3383, %v3384
      %v3386 = vadd.f32 %v3361, %v3385
      %v3387 = vmul.f32 %v3276, %v3276
      %v3388 = vmul.f32 %v3277, %v3277
      %v3389 = vsel %vm3298, %v3387, 0.0
      %v3390 = vsel %vm3300, %v3388, 0.0
      %v3391 = vadd.f32 %v3389, %v3390
      %v3392 = vrot.slane %v3391, 4
      %v3393 = vadd.f32 %v3391, %v3392
      %v3394 = vrot.slane %v3393, 2
      %v3395 = vadd.f32 %v3393, %v3394
      %v3396 = vrot.slane %v3395, 1
      %v3397 = vadd.f32 %v3395, %v3396
      %v3398 = vadd.f32 %v3373, %v3397
      %s3399 = scalar_lea.vmem %s208, 64
      %3400 = vst.msk [vmem:[%s3399] sm:$0xff] %vm3298, %v3278
      %3401 = vst.msk [vmem:[%s3399 + $0x8] sm:$0x3f] %vm3300, %v3279
      %v3402 = vsel %vm3298, %v3278, 0.0
      %v3403 = vsel %vm3300, %v3279, 0.0
      %v3404 = vadd.f32 %v3402, %v3403
      %v3405 = vrot.slane %v3404, 4
      %v3406 = vadd.f32 %v3404, %v3405
      %v3407 = vrot.slane %v3406, 2
      %v3408 = vadd.f32 %v3406, %v3407
      %v3409 = vrot.slane %v3408, 1
      %v3410 = vadd.f32 %v3408, %v3409
      %v3411 = vadd.f32 %v3386, %v3410
      %v3412 = vmul.f32 %v3278, %v3278
      %v3413 = vmul.f32 %v3279, %v3279
      %v3414 = vsel %vm3298, %v3412, 0.0
      %v3415 = vsel %vm3300, %v3413, 0.0
      %v3416 = vadd.f32 %v3414, %v3415
      %v3417 = vrot.slane %v3416, 4
      %v3418 = vadd.f32 %v3416, %v3417
      %v3419 = vrot.slane %v3418, 2
      %v3420 = vadd.f32 %v3418, %v3419
      %v3421 = vrot.slane %v3420, 1
      %v3422 = vadd.f32 %v3420, %v3421
      %v3423 = vadd.f32 %v3398, %v3422
      %s3424 = scalar_lea.vmem %s208, 80
      %3425 = vst.msk [vmem:[%s3424] sm:$0xff] %vm3298, %v3280
      %3426 = vst.msk [vmem:[%s3424 + $0x8] sm:$0x3f] %vm3300, %v3281
      %v3427 = vsel %vm3298, %v3280, 0.0
      %v3428 = vsel %vm3300, %v3281, 0.0
      %v3429 = vadd.f32 %v3427, %v3428
      %v3430 = vrot.slane %v3429, 4
      %v3431 = vadd.f32 %v3429, %v3430
      %v3432 = vrot.slane %v3431, 2
      %v3433 = vadd.f32 %v3431, %v3432
      %v3434 = vrot.slane %v3433, 1
      %v3435 = vadd.f32 %v3433, %v3434
      %v3436 = vadd.f32 %v3411, %v3435
      %v3437 = vmul.f32 %v3280, %v3280
      %v3438 = vmul.f32 %v3281, %v3281
      %v3439 = vsel %vm3298, %v3437, 0.0
      %v3440 = vsel %vm3300, %v3438, 0.0
      %v3441 = vadd.f32 %v3439, %v3440
      %v3442 = vrot.slane %v3441, 4
      %v3443 = vadd.f32 %v3441, %v3442
      %v3444 = vrot.slane %v3443, 2
      %v3445 = vadd.f32 %v3443, %v3444
      %v3446 = vrot.slane %v3445, 1
      %v3447 = vadd.f32 %v3445, %v3446
      %v3448 = vadd.f32 %v3423, %v3447
      %s3449 = scalar_lea.vmem %s208, 96
      %3450 = vst.msk [vmem:[%s3449] sm:$0xff] %vm3298, %v3282
      %3451 = vst.msk [vmem:[%s3449 + $0x8] sm:$0x3f] %vm3300, %v3283
      %v3452 = vsel %vm3298, %v3282, 0.0
      %v3453 = vsel %vm3300, %v3283, 0.0
      %v3454 = vadd.f32 %v3452, %v3453
      %v3455 = vrot.slane %v3454, 4
      %v3456 = vadd.f32 %v3454, %v3455
      %v3457 = vrot.slane %v3456, 2
      %v3458 = vadd.f32 %v3456, %v3457
      %v3459 = vrot.slane %v3458, 1
      %v3460 = vadd.f32 %v3458, %v3459
      %v3461 = vadd.f32 %v3436, %v3460
      %v3462 = vmul.f32 %v3282, %v3282
      %v3463 = vmul.f32 %v3283, %v3283
      %v3464 = vsel %vm3298, %v3462, 0.0
      %v3465 = vsel %vm3300, %v3463, 0.0
      %v3466 = vadd.f32 %v3464, %v3465
      %v3467 = vrot.slane %v3466, 4
      %v3468 = vadd.f32 %v3466, %v3467
      %v3469 = vrot.slane %v3468, 2
      %v3470 = vadd.f32 %v3468, %v3469
      %v3471 = vrot.slane %v3470, 1
      %v3472 = vadd.f32 %v3470, %v3471
      %v3473 = vadd.f32 %v3448, %v3472
      %s3474 = scalar_lea.vmem %s208, 112
      %3475 = vst.msk [vmem:[%s3474] sm:$0xff] %vm3298, %v3284
      %3476 = vst.msk [vmem:[%s3474 + $0x8] sm:$0x3f] %vm3300, %v3285
      %v3477 = vsel %vm3298, %v3284, 0.0
      %v3478 = vsel %vm3300, %v3285, 0.0
      %v3479 = vadd.f32 %v3477, %v3478
      %v3480 = vrot.slane %v3479, 4
      %v3481 = vadd.f32 %v3479, %v3480
      %v3482 = vrot.slane %v3481, 2
      %v3483 = vadd.f32 %v3481, %v3482
      %v3484 = vrot.slane %v3483, 1
      %v3485 = vadd.f32 %v3483, %v3484
      %v3486 = vadd.f32 %v3461, %v3485
      %v3487 = vmul.f32 %v3284, %v3284
      %v3488 = vmul.f32 %v3285, %v3285
      %v3489 = vsel %vm3298, %v3487, 0.0
      %v3490 = vsel %vm3300, %v3488, 0.0
      %v3491 = vadd.f32 %v3489, %v3490
      %v3492 = vrot.slane %v3491, 4
      %v3493 = vadd.f32 %v3491, %v3492
      %v3494 = vrot.slane %v3493, 2
      %v3495 = vadd.f32 %v3493, %v3494
      %v3496 = vrot.slane %v3495, 1
      %v3497 = vadd.f32 %v3495, %v3496
      %v3498 = vadd.f32 %v3473, %v3497
      %s3499 = scalar_lea.vmem %s208, 128
      %3500 = vst.msk [vmem:[%s3499] sm:$0xff] %vm3298, %v3286
      %3501 = vst.msk [vmem:[%s3499 + $0x8] sm:$0x3f] %vm3300, %v3287
      %v3502 = vsel %vm3298, %v3286, 0.0
      %v3503 = vsel %vm3300, %v3287, 0.0
      %v3504 = vadd.f32 %v3502, %v3503
      %v3505 = vrot.slane %v3504, 4
      %v3506 = vadd.f32 %v3504, %v3505
      %v3507 = vrot.slane %v3506, 2
      %v3508 = vadd.f32 %v3506, %v3507
      %v3509 = vrot.slane %v3508, 1
      %v3510 = vadd.f32 %v3508, %v3509
      %v3511 = vadd.f32 %v3486, %v3510
      %v3512 = vmul.f32 %v3286, %v3286
      %v3513 = vmul.f32 %v3287, %v3287
      %v3514 = vsel %vm3298, %v3512, 0.0
      %v3515 = vsel %vm3300, %v3513, 0.0
      %v3516 = vadd.f32 %v3514, %v3515
      %v3517 = vrot.slane %v3516, 4
      %v3518 = vadd.f32 %v3516, %v3517
      %v3519 = vrot.slane %v3518, 2
      %v3520 = vadd.f32 %v3518, %v3519
      %v3521 = vrot.slane %v3520, 1
      %v3522 = vadd.f32 %v3520, %v3521
      %v3523 = vadd.f32 %v3498, %v3522
      %s3524 = scalar_lea.vmem %s208, 144
      %3525 = vst.msk [vmem:[%s3524] sm:$0xff] %vm3298, %v3288
      %3526 = vst.msk [vmem:[%s3524 + $0x8] sm:$0x3f] %vm3300, %v3289
      %v3527 = vsel %vm3298, %v3288, 0.0
      %v3528 = vsel %vm3300, %v3289, 0.0
      %v3529 = vadd.f32 %v3527, %v3528
      %v3530 = vrot.slane %v3529, 4
      %v3531 = vadd.f32 %v3529, %v3530
      %v3532 = vrot.slane %v3531, 2
      %v3533 = vadd.f32 %v3531, %v3532
      %v3534 = vrot.slane %v3533, 1
      %v3535 = vadd.f32 %v3533, %v3534
      %v3536 = vadd.f32 %v3511, %v3535
      %v3537 = vmul.f32 %v3288, %v3288
      %v3538 = vmul.f32 %v3289, %v3289
      %v3539 = vsel %vm3298, %v3537, 0.0
      %v3540 = vsel %vm3300, %v3538, 0.0
      %v3541 = vadd.f32 %v3539, %v3540
      %v3542 = vrot.slane %v3541, 4
      %v3543 = vadd.f32 %v3541, %v3542
      %v3544 = vrot.slane %v3543, 2
      %v3545 = vadd.f32 %v3543, %v3544
      %v3546 = vrot.slane %v3545, 1
      %v3547 = vadd.f32 %v3545, %v3546
      %v3548 = vadd.f32 %v3523, %v3547
      %s3549 = scalar_lea.vmem %s208, 160
      %3550 = vst.msk [vmem:[%s3549] sm:$0xff] %vm3298, %v3290
      %3551 = vst.msk [vmem:[%s3549 + $0x8] sm:$0x3f] %vm3300, %v3291
      %v3552 = vsel %vm3298, %v3290, 0.0
      %v3553 = vsel %vm3300, %v3291, 0.0
      %v3554 = vadd.f32 %v3552, %v3553
      %v3555 = vrot.slane %v3554, 4
      %v3556 = vadd.f32 %v3554, %v3555
      %v3557 = vrot.slane %v3556, 2
      %v3558 = vadd.f32 %v3556, %v3557
      %v3559 = vrot.slane %v3558, 1
      %v3560 = vadd.f32 %v3558, %v3559
      %v3561 = vadd.f32 %v3536, %v3560
      %v3562 = vmul.f32 %v3290, %v3290
      %v3563 = vmul.f32 %v3291, %v3291
      %v3564 = vsel %vm3298, %v3562, 0.0
      %v3565 = vsel %vm3300, %v3563, 0.0
      %v3566 = vadd.f32 %v3564, %v3565
      %v3567 = vrot.slane %v3566, 4
      %v3568 = vadd.f32 %v3566, %v3567
      %v3569 = vrot.slane %v3568, 2
      %v3570 = vadd.f32 %v3568, %v3569
      %v3571 = vrot.slane %v3570, 1
      %v3572 = vadd.f32 %v3570, %v3571
      %v3573 = vadd.f32 %v3548, %v3572
      %s3574 = scalar_lea.vmem %s208, 176
      %3575 = vst.msk [vmem:[%s3574] sm:$0xff] %vm3298, %v3292
      %3576 = vst.msk [vmem:[%s3574 + $0x8] sm:$0x3f] %vm3300, %v3293
      %v3577 = vsel %vm3298, %v3292, 0.0
      %v3578 = vsel %vm3300, %v3293, 0.0
      %v3579 = vadd.f32 %v3577, %v3578
      %v3580 = vrot.slane %v3579, 4
      %v3581 = vadd.f32 %v3579, %v3580
      %v3582 = vrot.slane %v3581, 2
      %v3583 = vadd.f32 %v3581, %v3582
      %v3584 = vrot.slane %v3583, 1
      %v3585 = vadd.f32 %v3583, %v3584
      %v3586 = vadd.f32 %v3561, %v3585
      %v3587 = vmul.f32 %v3292, %v3292
      %v3588 = vmul.f32 %v3293, %v3293
      %v3589 = vsel %vm3298, %v3587, 0.0
      %v3590 = vsel %vm3300, %v3588, 0.0
      %v3591 = vadd.f32 %v3589, %v3590
      %v3592 = vrot.slane %v3591, 4
      %v3593 = vadd.f32 %v3591, %v3592
      %v3594 = vrot.slane %v3593, 2
      %v3595 = vadd.f32 %v3593, %v3594
      %v3596 = vrot.slane %v3595, 1
      %v3597 = vadd.f32 %v3595, %v3596
      %v3598 = vadd.f32 %v3573, %v3597
      %s3599 = scalar_lea.vmem %s208, 192
      %3600 = vst.msk [vmem:[%s3599] sm:$0xff] %vm3298, %v3294
      %3601 = vst.msk [vmem:[%s3599 + $0x8] sm:$0x3f] %vm3300, %v3295
      %v3602 = vsel %vm3298, %v3294, 0.0
      %v3603 = vsel %vm3300, %v3295, 0.0
      %v3604 = vadd.f32 %v3602, %v3603
      %v3605 = vrot.slane %v3604, 4
      %v3606 = vadd.f32 %v3604, %v3605
      %v3607 = vrot.slane %v3606, 2
      %v3608 = vadd.f32 %v3606, %v3607
      %v3609 = vrot.slane %v3608, 1
      %v3610 = vadd.f32 %v3608, %v3609
      %v3611 = vadd.f32 %v3586, %v3610
      %v3612 = vmul.f32 %v3294, %v3294
      %v3613 = vmul.f32 %v3295, %v3295
      %v3614 = vsel %vm3298, %v3612, 0.0
      %v3615 = vsel %vm3300, %v3613, 0.0
      %v3616 = vadd.f32 %v3614, %v3615
      %v3617 = vrot.slane %v3616, 4
      %v3618 = vadd.f32 %v3616, %v3617
      %v3619 = vrot.slane %v3618, 2
      %v3620 = vadd.f32 %v3618, %v3619
      %v3621 = vrot.slane %v3620, 1
      %v3622 = vadd.f32 %v3620, %v3621
      %v3623 = vadd.f32 %v3598, %v3622
      %s3624 = scalar_lea.vmem %s208, 208
      %3625 = vst.msk [vmem:[%s3624] sm:$0xff] %vm3298, %v3296
      %3626 = vst.msk [vmem:[%s3624 + $0x8] sm:$0x3f] %vm3300, %v3297
      %v3627 = vsel %vm3298, %v3296, 0.0
      %v3628 = vsel %vm3300, %v3297, 0.0
      %v3629 = vadd.f32 %v3627, %v3628
      %v3630 = vrot.slane %v3629, 4
      %v3631 = vadd.f32 %v3629, %v3630
      %v3632 = vrot.slane %v3631, 2
      %v3633 = vadd.f32 %v3631, %v3632
      %v3634 = vrot.slane %v3633, 1
      %v3635 = vadd.f32 %v3633, %v3634
      %v3636 = vadd.f32 %v3611, %v3635
      %v3637 = vmul.f32 %v3296, %v3296
      %v3638 = vmul.f32 %v3297, %v3297
      %v3639 = vsel %vm3298, %v3637, 0.0
      %v3640 = vsel %vm3300, %v3638, 0.0
      %v3641 = vadd.f32 %v3639, %v3640
      %v3642 = vrot.slane %v3641, 4
      %v3643 = vadd.f32 %v3641, %v3642
      %v3644 = vrot.slane %v3643, 2
      %v3645 = vadd.f32 %v3643, %v3644
      %v3646 = vrot.slane %v3645, 1
      %v3647 = vadd.f32 %v3645, %v3646
      %v3648 = vadd.f32 %v3623, %v3647
      %vm3649 = vcmask 57344
      %3650 = vst.msk [vmem:[%s211] sm:$0x1] %vm3649, %v3636
      %3651 = vst.msk [vmem:[%s214] sm:$0x1] %vm3649, %v3648
      %p3652 = scmp.lt.s32.totalorder %s16, 1
      %s3653 = scalar_select %p3652, %s16, 1
      %s3654 = smul.addr %s3653, 28
      %s3655 = smul.addr %s3654, 8
      %s3656 = scalar_lea.vmem %s2, %s3655
      %p3657 = scmp.lt.s32.totalorder %s16, 1
      %s3658 = scalar_select %p3657, %s16, 1
      %s3659 = scalar_lea.vmem %s3, %s3658
      %p3660 = scmp.lt.s32.totalorder %s16, 1
      %s3661 = scalar_select %p3660, %s16, 1
      %s3662 = scalar_lea.vmem %s4, %s3661
      // Predicated region
      $region29: #{block_forward.2} parent=27 // pred_check
        %p3663 = pneg %p81
      $region30: #{block_forward.2} parent=27 // pred_check_branch
        %3665 = sbr.rel (%p3663) target = $region32
      $region31: #{block_forward.2} parent=27 // pred_region
        _
      $region32: #{block_forward.2} parent=27 // pred_fallthru
        _
      // Predicated region
      $region33: #{block_forward.2} parent=27 // pred_check
        %p3666 = pneg %p107
      $region34: #{block_forward.2} parent=27 // pred_check_branch
        %3668 = sbr.rel (%p3666) target = $region36
      $region35: #{block_forward.2} parent=27 // pred_region
        _
      $region36: #{block_forward.2} parent=27 // pred_fallthru
        _
      // Predicated region
      $region37: #{block_forward.2} parent=27 // pred_check
        %p3669 = pneg %p133
      $region38: #{block_forward.2} parent=27 // pred_check_branch
        %3671 = sbr.rel (%p3669) target = $region40
      $region39: #{block_forward.2} parent=27 // pred_region
        _
      $region40: #{block_forward.2} parent=27 // pred_fallthru
        _
    $region28: #{block_forward.2} parent=5 // pred_fallthru
      _
    %p3672 = scmp.le.s32.totalorder 2, %s11
    // Predicated region
    $region41: #{block_forward.2} parent=5 // pred_check
      %p3673 = pneg %p3672
    $region42: #{block_forward.2} parent=5 // pred_check_branch
      %3675 = sbr.rel (%p3673) target = $region44
    $region43: #{block_forward.2} parent=5 // pred_region
      %s3676 = ssub.s32 %s11, 2
      // Predicated region
      $region45: #{block_forward.2} parent=43 // pred_check
        %p3677 = pneg %p87
      $region46: #{block_forward.2} parent=43 // pred_check_branch
        %3679 = sbr.rel (%p3677) target = $region48
      $region47: #{block_forward.2} parent=43 // pred_region
        %p3680 = scmp.lt.s32.totalorder %s17, 1
        %s3681 = scalar_select %p3680, %s17, 1
        %s3682 = smul.addr %s3681, 28
        %s3683 = smul.addr %s3682, 8
        %s3684 = scalar_lea.vmem %s2, %s3683
      $region48: #{block_forward.2} parent=43 // pred_fallthru
        _
      // Predicated region
      $region49: #{block_forward.2} parent=43 // pred_check
        %p3685 = pneg %p113
      $region50: #{block_forward.2} parent=43 // pred_check_branch
        %3687 = sbr.rel (%p3685) target = $region52
      $region51: #{block_forward.2} parent=43 // pred_region
        %p3688 = scmp.lt.s32.totalorder %s17, 1
        %s3689 = scalar_select %p3688, %s17, 1
        %s3690 = scalar_lea.vmem %s3, %s3689
      $region52: #{block_forward.2} parent=43 // pred_fallthru
        _
      // Predicated region
      $region53: #{block_forward.2} parent=43 // pred_check
        %p3691 = pneg %p139
      $region54: #{block_forward.2} parent=43 // pred_check_branch
        %3693 = sbr.rel (%p3691) target = $region56
      $region55: #{block_forward.2} parent=43 // pred_region
        %p3694 = scmp.lt.s32.totalorder %s17, 1
        %s3695 = scalar_select %p3694, %s17, 1
        %s3696 = scalar_lea.vmem %s4, %s3695
      $region56: #{block_forward.2} parent=43 // pred_fallthru
        _
    $region44: #{block_forward.2} parent=5 // pred_fallthru
      _
  $region6: #{block_forward.2} parent=0 // loop_footer
    %s15 = sadd.s32 1, %s11
  $region7: #{block_forward.2} parent=0 // loop_footer_branch
    %10 = sbr.rel target = $region3
  $region8: #{block_forward.2} parent=0 // loop_exit
    _

</llo_original>
